<compile_context>
chip_gen: v6e
topology: v6e:2x2x1
jax: 0.10.0
libtpu: 0.0.40
codegen_flags: <defaults>
</compile_context>

<pallas_src>
import functools

import jax
import jax.numpy as jnp
from jax.experimental import pallas as pl
from jax.experimental.pallas import tpu as pltpu


def _round_up(x, m):
    return ((x + m - 1) // m) * m


# ---------------------------------------------------------------------------
# Fused basic-block kernel
# ---------------------------------------------------------------------------
def _fused_block_kernel(*refs, stride, Ho, Wo, proj):
    """Whole StoBasicBlock forward for one image.

    refs = (phase_refs[stride*stride], w1_ref, w2_ref, sb_ref, [ws_ref],
            o_ref, stage_ref, acc1_ref, acc2_ref)

    phase_refs[p*s+q][0, i, j, :] == x_pad[p + s*i, q + s*j, :]   (bf16)
    w1_ref : (9, Cin_p, Cp)  bf16 raw conv1 weights
    w2_ref : (9, Cp,   Cp)   bf16 raw conv2 weights
    ws_ref : (Cin_p, Cp)     bf16 raw 1x1 projection weights (proj only)
    sb_ref : (8, Cp) f32 rows = [s1, b1, s2, b2, s_sc, b_sc, 0, 0]
    stage  : (Ho+2, Wo+2, Cp) f32 VMEM staging for relu(bn1(conv1(x)))
    acc1/acc2 : (Ho*Wo, Cp) f32 VMEM accumulators
    """
    s = stride
    nph = s * s
    ph_refs = refs[:nph]
    i = nph
    w1_ref = refs[i]; i += 1
    w2_ref = refs[i]; i += 1
    sb_ref = refs[i]; i += 1
    if proj:
        ws_ref = refs[i]; i += 1
    o_ref = refs[i]; i += 1
    stage = refs[i]; i += 1
    acc1 = refs[i]; i += 1
    acc2 = refs[i]

    Cin = w1_ref.shape[1]
    Cp = w2_ref.shape[2]
    M = Ho * Wo

    # Single bf16 -> f32 widening per phase (not per tap): all window slices
    # and reshapes below are on 32-bit data in the native (8,128) layout.
    ph = [ph_refs[p][0].astype(jnp.float32) for p in range(nph)]

    # ---- conv1 (3x3, stride s): 9 shifted MXU matmuls -> VMEM accumulator --
    first = True
    for kh in range(3):
        for kw in range(3):
            src = ph[(kh % s) * s + (kw % s)]
            oh, ow = kh // s, kw // s
            tap = src[oh:oh + Ho, ow:ow + Wo, :].reshape(M, Cin)
            contrib = jnp.dot(tap.astype(jnp.bfloat16), w1_ref[kh * 3 + kw],
                              preferred_element_type=jnp.float32)
            if first:
                acc1[...] = contrib
                first = False
            else:
                acc1[...] += contrib

    # bn1 (f32 per-channel scale/bias, NOT folded into bf16 weights) + relu.
    out1 = jnp.maximum(acc1[...] * sb_ref[0:1, :] + sb_ref[1:2, :], 0.0)

    # Stage into the spatially padded VMEM scratch.  Only the 1-pixel border
    # is zeroed (the interior is fully overwritten); done every step so it is
    # also correct when the batch grid axis is sharded across TensorCores.
    stage[0:1, :, :] = jnp.zeros((1, Wo + 2, Cp), jnp.float32)
    stage[Ho + 1:Ho + 2, :, :] = jnp.zeros((1, Wo + 2, Cp), jnp.float32)
    stage[:, 0:1, :] = jnp.zeros((Ho + 2, 1, Cp), jnp.float32)
    stage[:, Wo + 1:Wo + 2, :] = jnp.zeros((Ho + 2, 1, Cp), jnp.float32)
    stage[1:1 + Ho, 1:1 + Wo, :] = out1.reshape(Ho, Wo, Cp)

    # ---- conv2 (3x3, stride 1): 9 shifted MXU matmuls -> VMEM accumulator --
    first = True
    for kh in range(3):
        for kw in range(3):
            tap = stage[kh:kh + Ho, kw:kw + Wo, :].reshape(M, Cp)
            contrib = jnp.dot(tap.astype(jnp.bfloat16), w2_ref[kh * 3 + kw],
                              preferred_element_type=jnp.float32)
            if first:
                acc2[...] = contrib
                first = False
            else:
                acc2[...] += contrib

    # ---- shortcut (read from the phase slabs already in VMEM) --------------
    # x_pad[1 + s*i, 1 + s*j] == x[s*i, s*j]
    sp = (1 % s) * s + (1 % s)
    so = 1 // s
    xs_tap = ph[sp][so:so + Ho, so:so + Wo, :]          # (Ho, Wo, Cin) f32
    if proj:
        sc = jnp.dot(xs_tap.reshape(M, Cin).astype(jnp.bfloat16), ws_ref[...],
                     preferred_element_type=jnp.float32)
        short = sc * sb_ref[4:5, :] + sb_ref[5:6, :]    # bn of projection
    else:
        short = xs_tap.reshape(M, Cp)                    # identity

    # bn2 + residual add + relu.
    out2 = jnp.maximum(acc2[...] * sb_ref[2:3, :] + sb_ref[3:4, :] + short, 0.0)
    o_ref[0] = out2.reshape(Ho, Wo, Cp).astype(o_ref.dtype)


# ---------------------------------------------------------------------------
# Parameter preparation (raw bf16 weights; BN kept as f32 scale/bias)
# ---------------------------------------------------------------------------
def fold_bn(gamma, beta, running_mean, running_var, eps=1e-5):
    scale = gamma.astype(jnp.float32) / jnp.sqrt(running_var.astype(jnp.float32) + eps)
    bias = beta.astype(jnp.float32) - running_mean.astype(jnp.float32) * scale
    return scale, bias


def _pack_conv3x3(w_oihw, cin_p, cout_p):
    """(Cout,Cin,3,3) -> (9, cin_p, cout_p) bf16 (no BN folding)."""
    Cout, Cin, Kh, Kw = w_oihw.shape
    w = jnp.transpose(w_oihw.astype(jnp.float32), (2, 3, 1, 0)).reshape(Kh * Kw, Cin, Cout)
    w = jnp.pad(w, ((0, 0), (0, cin_p - Cin), (0, cout_p - Cout)))
    return w.astype(jnp.bfloat16)


def _pack_conv1x1(w_oihw, cin_p, cout_p):
    """(Cout,Cin,1,1) -> (cin_p, cout_p) bf16 (no BN folding)."""
    Cout, Cin, _, _ = w_oihw.shape
    w = w_oihw.astype(jnp.float32)[:, :, 0, 0].T
    w = jnp.pad(w, ((0, cin_p - Cin), (0, cout_p - Cout)))
    return w.astype(jnp.bfloat16)


def _pad_vec(v, cp):
    return jnp.pad(v.astype(jnp.float32), (0, cp - v.shape[0]))


# ---------------------------------------------------------------------------
# StoBasicBlock forward (NCHW in / NCHW out)
# ---------------------------------------------------------------------------
def sto_basic_block_forward(x_nchw, params, stride):
    x = jnp.transpose(x_nchw, (0, 2, 3, 1))              # NCHW -> NHWC
    N, H, W, Cin = x.shape
    planes = params["w1"].shape[0]
    proj = (stride != 1) or (Cin != planes)

    Ho = (H + 2 - 3) // stride + 1
    Wo = (W + 2 - 3) // stride + 1

    Cin_p = _round_up(Cin, 128)                           # lane-dense channels
    Cp = _round_up(planes, 128)
    if not proj:
        assert Cin_p == Cp

    # Activations in HBM are bf16: cast once, then channel pad, spatial pad
    # and polyphase split all happen on bf16 data in one XLA pass.
    xb = x.astype(jnp.bfloat16)
    xc = jnp.pad(xb, ((0, 0), (0, 0), (0, 0), (0, Cin_p - Cin)))
    xp = jnp.pad(xc, ((0, 0), (1, 1), (1, 1), (0, 0)))

    # Polyphase split by stride: phase(p,q)[:, i, j] == x_pad[:, p+s*i, q+s*j],
    # so every in-kernel window slice is a unit-stride static window.
    s = stride
    phases = [xp[:, p::s, q::s, :] for p in range(s) for q in range(s)]

    # BN parameters stay f32 (applied post-matmul inside the kernel).
    s1, b1 = fold_bn(*params["bn1"])
    s2, b2 = fold_bn(*params["bn2"])
    if proj:
        ss, bs = fold_bn(*params["bns"])
    else:
        ss = jnp.ones((planes,), jnp.float32)
        bs = jnp.zeros((planes,), jnp.float32)
    sb = jnp.stack([_pad_vec(s1, Cp), _pad_vec(b1, Cp),
                    _pad_vec(s2, Cp), _pad_vec(b2, Cp),
                    _pad_vec(ss, Cp), _pad_vec(bs, Cp),
                    jnp.zeros((Cp,), jnp.float32), jnp.zeros((Cp,), jnp.float32)])

    w1m = _pack_conv3x3(params["w1"], Cin_p, Cp)
    w2m = _pack_conv3x3(params["w2"], Cp, Cp)

    # Specs / args.  Weight / BN index_maps are grid-invariant, so Pallas does
    # not re-DMA them between consecutive grid steps.
    in_specs, args = [], []
    for ph in phases:
        in_specs.append(pl.BlockSpec((1,) + ph.shape[1:], lambda n: (n, 0, 0, 0)))
        args.append(ph)
    in_specs += [
        pl.BlockSpec((9, Cin_p, Cp), lambda n: (0, 0, 0)),
        pl.BlockSpec((9, Cp, Cp), lambda n: (0, 0, 0)),
        pl.BlockSpec((8, Cp), lambda n: (0, 0)),
    ]
    args += [w1m, w2m, sb]
    if proj:
        in_specs.append(pl.BlockSpec((Cin_p, Cp), lambda n: (0, 0)))
        args.append(_pack_conv1x1(params["ws"], Cin_p, Cp))

    kernel = functools.partial(_fused_block_kernel,
                               stride=stride, Ho=Ho, Wo=Wo, proj=proj)

    out = pl.pallas_call(
        kernel,
        out_shape=jax.ShapeDtypeStruct((N, Ho, Wo, Cp), jnp.float32),
        grid_spec=pltpu.PrefetchScalarGridSpec(
            num_scalar_prefetch=0,
            grid=(N,),
            in_specs=in_specs,
            out_specs=pl.BlockSpec((1, Ho, Wo, Cp), lambda n: (n, 0, 0, 0)),
            scratch_shapes=[
                pltpu.VMEM((Ho + 2, Wo + 2, Cp), jnp.float32),   # conv1 staging
                pltpu.VMEM((Ho * Wo, Cp), jnp.float32),          # conv1 acc
                pltpu.VMEM((Ho * Wo, Cp), jnp.float32),          # conv2 acc
            ]),
        compiler_params=pltpu.CompilerParams(
            dimension_semantics=("parallel",),
            vmem_limit_bytes=32 * 1024 * 1024),
    )(*args)

    out = out[:, :, :, :planes]                          # drop channel padding
    return jnp.transpose(out, (0, 3, 1, 2))              # NHWC -> NCHW


# ---------------------------------------------------------------------------
# Pure-JAX reference (for validation only)
# ---------------------------------------------------------------------------
def reference_block(x_nchw, params, stride):
    x = x_nchw.astype(jnp.float32)

    def conv(inp, w, st, pad):
        return jax.lax.conv_general_dilated(
            inp, w.astype(jnp.float32), (st, st), [(pad, pad), (pad, pad)],
            dimension_numbers=("NCHW", "OIHW", "NCHW"))

    def bn(inp, p):
        g, b, m, v = p
        sc = g / jnp.sqrt(v + 1e-5)
        return inp * sc[None, :, None, None] + (b - m * sc)[None, :, None, None]

    out = jax.nn.relu(bn(conv(x, params["w1"], stride, 1), params["bn1"]))
    out = bn(conv(out, params["w2"], 1, 1), params["bn2"])
    planes = params["w1"].shape[0]
    if stride != 1 or x.shape[1] != planes:
        short = bn(conv(x, params["ws"], stride, 0), params["bns"])
    else:
        short = x
    return jax.nn.relu(out + short)


# ---------------------------------------------------------------------------
# Params
# ---------------------------------------------------------------------------
def init_params(key, in_planes, planes):
    k1, k2, k3 = jax.random.split(key, 3)

    def kaiming(k, shape):
        fan_in = shape[1] * shape[2] * shape[3]
        std = (2.0 / fan_in) ** 0.5
        return std * jax.random.normal(k, shape, dtype=jnp.float32)

    def bn_params(c):
        # PyTorch BatchNorm2d defaults: gamma=1, beta=0, mean=0, var=1
        return (jnp.ones((c,), jnp.float32), jnp.zeros((c,), jnp.float32),
                jnp.zeros((c,), jnp.float32), jnp.ones((c,), jnp.float32))

    return {
        "w1": kaiming(k1, (planes, in_planes, 3, 3)),
        "w2": kaiming(k2, (planes, planes, 3, 3)),
        "ws": kaiming(k3, (planes, in_planes, 1, 1)),
        "bn1": bn_params(planes),
        "bn2": bn_params(planes),
        "bns": bn_params(planes),
    }


if __name__ == "__main__":
    key = jax.random.PRNGKey(0)
    kx1, kp1, kx2, kp2 = jax.random.split(key, 4)

    # 1) Projection-shortcut block (stride 2, channel change).
    in_planes, planes, stride = 4, 8, 2
    x = jax.random.normal(kx1, (2, in_planes, 16, 16), dtype=jnp.float32)
    params = init_params(kp1, in_planes, planes)
    out = jax.block_until_ready(sto_basic_block_forward(x, params, stride))
    ref = jax.block_until_ready(reference_block(x, params, stride))
    assert out.shape == (2, planes, 8, 8), out.shape
    assert bool(jnp.all(jnp.isfinite(out)))
    assert bool(jnp.all(out >= 0.0)), "ReLU output must be non-negative"
    err = float(jnp.max(jnp.abs(out - ref)))
    assert err < 0.25, f"projection block mismatch: max abs err {err}"

    # 2) Identity-shortcut block (stride 1, same channels).
    x2 = jax.random.normal(kx2, (2, 8, 16, 16), dtype=jnp.float32)
    params2 = init_params(kp2, 8, 8)
    out2 = jax.block_until_ready(sto_basic_block_forward(x2, params2, 1))
    ref2 = jax.block_until_ready(reference_block(x2, params2, 1))
    assert out2.shape == (2, 8, 16, 16), out2.shape
    assert bool(jnp.all(out2 >= 0.0))
    err2 = float(jnp.max(jnp.abs(out2 - ref2)))
    assert err2 < 0.25, f"identity block mismatch: max abs err {err2}"

    print("KERNEL_OK")
</pallas_src>

<mosaic_0001>
module attributes {stable_mosaic.version = 11 : i64} {
  func.func @_fused_block_kernel(%arg0: i32, %arg1: memref<1x9x9x128xbf16, #tpu.memory_space<vmem>>, %arg2: memref<1x9x9x128xbf16, #tpu.memory_space<vmem>>, %arg3: memref<1x9x9x128xbf16, #tpu.memory_space<vmem>>, %arg4: memref<1x9x9x128xbf16, #tpu.memory_space<vmem>>, %arg5: memref<9x128x128xbf16, #tpu.memory_space<vmem>>, %arg6: memref<9x128x128xbf16, #tpu.memory_space<vmem>>, %arg7: memref<8x128xf32, #tpu.memory_space<vmem>>, %arg8: memref<128x128xbf16, #tpu.memory_space<vmem>>, %arg9: memref<1x8x8x128xf32, #tpu.memory_space<vmem>>, %arg10: memref<10x10x128xf32, #tpu.memory_space<vmem>>, %arg11: memref<64x128xf32, #tpu.memory_space<vmem>>, %arg12: memref<64x128xf32, #tpu.memory_space<vmem>>) attributes {dimension_semantics = [#tpu.dimension_semantics<parallel>], iteration_bounds = array<i64: 2>, scalar_prefetch = 0 : i64, scratch_operands = 3 : i64, tpu.core_type = #tpu.core_type<tc>, window_params = [{transform_indices = @transform_0, window_bounds = array<i64: 1, 9, 9, 128>}, {transform_indices = @transform_1, window_bounds = array<i64: 1, 9, 9, 128>}, {transform_indices = @transform_2, window_bounds = array<i64: 1, 9, 9, 128>}, {transform_indices = @transform_3, window_bounds = array<i64: 1, 9, 9, 128>}, {pipeline_mode = #tpu.pipeline_mode<synchronous>, transform_indices = @transform_4, window_bounds = array<i64: 9, 128, 128>}, {pipeline_mode = #tpu.pipeline_mode<synchronous>, transform_indices = @transform_5, window_bounds = array<i64: 9, 128, 128>}, {pipeline_mode = #tpu.pipeline_mode<synchronous>, transform_indices = @transform_6, window_bounds = array<i64: 8, 128>}, {pipeline_mode = #tpu.pipeline_mode<synchronous>, transform_indices = @transform_7, window_bounds = array<i64: 128, 128>}, {transform_indices = @transform_8, window_bounds = array<i64: 1, 8, 8, 128>}]} {
    %c0 = arith.constant 0 : index
    %c0_0 = arith.constant 0 : index
    %c0_1 = arith.constant 0 : index
    %c0_2 = arith.constant 0 : index
    %0 = vector.load %arg1[%c0, %c0_0, %c0_1, %c0_2] : memref<1x9x9x128xbf16, #tpu.memory_space<vmem>>, vector<1x9x9x128xbf16>
    %1 = vector.shape_cast %0 : vector<1x9x9x128xbf16> to vector<9x9x128xbf16>
    %2 = arith.extf %1 : vector<9x9x128xbf16> to vector<9x9x128xf32>
    %c0_3 = arith.constant 0 : index
    %c0_4 = arith.constant 0 : index
    %c0_5 = arith.constant 0 : index
    %c0_6 = arith.constant 0 : index
    %3 = vector.load %arg2[%c0_3, %c0_4, %c0_5, %c0_6] : memref<1x9x9x128xbf16, #tpu.memory_space<vmem>>, vector<1x9x9x128xbf16>
    %4 = vector.shape_cast %3 : vector<1x9x9x128xbf16> to vector<9x9x128xbf16>
    %5 = arith.extf %4 : vector<9x9x128xbf16> to vector<9x9x128xf32>
    %c0_7 = arith.constant 0 : index
    %c0_8 = arith.constant 0 : index
    %c0_9 = arith.constant 0 : index
    %c0_10 = arith.constant 0 : index
    %6 = vector.load %arg3[%c0_7, %c0_8, %c0_9, %c0_10] : memref<1x9x9x128xbf16, #tpu.memory_space<vmem>>, vector<1x9x9x128xbf16>
    %7 = vector.shape_cast %6 : vector<1x9x9x128xbf16> to vector<9x9x128xbf16>
    %8 = arith.extf %7 : vector<9x9x128xbf16> to vector<9x9x128xf32>
    %c0_11 = arith.constant 0 : index
    %c0_12 = arith.constant 0 : index
    %c0_13 = arith.constant 0 : index
    %c0_14 = arith.constant 0 : index
    %9 = vector.load %arg4[%c0_11, %c0_12, %c0_13, %c0_14] : memref<1x9x9x128xbf16, #tpu.memory_space<vmem>>, vector<1x9x9x128xbf16>
    %10 = vector.shape_cast %9 : vector<1x9x9x128xbf16> to vector<9x9x128xbf16>
    %11 = arith.extf %10 : vector<9x9x128xbf16> to vector<9x9x128xf32>
    %12 = vector.extract_strided_slice %2 {offsets = [0, 0, 0], sizes = [8, 8, 128], strides = [1, 1, 1]} : vector<9x9x128xf32> to vector<8x8x128xf32>
    %13 = vector.shape_cast %12 : vector<8x8x128xf32> to vector<64x128xf32>
    %14 = arith.truncf %13 : vector<64x128xf32> to vector<64x128xbf16>
    %c0_15 = arith.constant 0 : index
    %c0_16 = arith.constant 0 : index
    %c0_17 = arith.constant 0 : index
    %15 = vector.load %arg5[%c0_15, %c0_16, %c0_17] : memref<9x128x128xbf16, #tpu.memory_space<vmem>>, vector<1x128x128xbf16>
    %16 = vector.shape_cast %15 : vector<1x128x128xbf16> to vector<128x128xbf16>
    %cst = arith.constant dense<0.000000e+00> : vector<64x128xf32>
    %17 = tpu.matmul %14, %16, %cst {dimension_numbers = #tpu.dot_dimension_numbers<[1], [0], [0], [1], [0, 0, 1, 1], [], []>} : vector<64x128xbf16>, vector<128x128xbf16>, vector<64x128xf32> -> vector<64x128xf32>
    %c0_18 = arith.constant 0 : index
    %c0_19 = arith.constant 0 : index
    %18 = vector.load %arg11[%c0_18, %c0_19] : memref<64x128xf32, #tpu.memory_space<vmem>>, vector<64x128xf32>
    tpu.vector_store %arg11[%c0_18, %c0_19], %17 {strides = array<i32>} : memref<64x128xf32, #tpu.memory_space<vmem>>, vector<64x128xf32>,
    %19 = vector.extract_strided_slice %5 {offsets = [0, 0, 0], sizes = [8, 8, 128], strides = [1, 1, 1]} : vector<9x9x128xf32> to vector<8x8x128xf32>
    %20 = vector.shape_cast %19 : vector<8x8x128xf32> to vector<64x128xf32>
    %21 = arith.truncf %20 : vector<64x128xf32> to vector<64x128xbf16>
    %c1 = arith.constant 1 : index
    %c0_20 = arith.constant 0 : index
    %c0_21 = arith.constant 0 : index
    %22 = vector.load %arg5[%c1, %c0_20, %c0_21] : memref<9x128x128xbf16, #tpu.memory_space<vmem>>, vector<1x128x128xbf16>
    %23 = vector.shape_cast %22 : vector<1x128x128xbf16> to vector<128x128xbf16>
    %cst_22 = arith.constant dense<0.000000e+00> : vector<64x128xf32>
    %24 = tpu.matmul %21, %23, %cst_22 {dimension_numbers = #tpu.dot_dimension_numbers<[1], [0], [0], [1], [0, 0, 1, 1], [], []>} : vector<64x128xbf16>, vector<128x128xbf16>, vector<64x128xf32> -> vector<64x128xf32>
    %c0_23 = arith.constant 0 : index
    %c0_24 = arith.constant 0 : index
    %25 = vector.load %arg11[%c0_23, %c0_24] : memref<64x128xf32, #tpu.memory_space<vmem>>, vector<64x128xf32>
    %26 = arith.addf %25, %24 : vector<64x128xf32>
    %c0_25 = arith.constant 0 : index
    %c0_26 = arith.constant 0 : index
    %27 = vector.load %arg11[%c0_25, %c0_26] : memref<64x128xf32, #tpu.memory_space<vmem>>, vector<64x128xf32>
    tpu.vector_store %arg11[%c0_25, %c0_26], %26 {strides = array<i32>} : memref<64x128xf32, #tpu.memory_space<vmem>>, vector<64x128xf32>,
    %28 = vector.extract_strided_slice %2 {offsets = [0, 1, 0], sizes = [8, 8, 128], strides = [1, 1, 1]} : vector<9x9x128xf32> to vector<8x8x128xf32>
    %29 = vector.shape_cast %28 : vector<8x8x128xf32> to vector<64x128xf32>
    %30 = arith.truncf %29 : vector<64x128xf32> to vector<64x128xbf16>
    %c2 = arith.constant 2 : index
    %c0_27 = arith.constant 0 : index
    %c0_28 = arith.constant 0 : index
    %31 = vector.load %arg5[%c2, %c0_27, %c0_28] : memref<9x128x128xbf16, #tpu.memory_space<vmem>>, vector<1x128x128xbf16>
    %32 = vector.shape_cast %31 : vector<1x128x128xbf16> to vector<128x128xbf16>
    %cst_29 = arith.constant dense<0.000000e+00> : vector<64x128xf32>
    %33 = tpu.matmul %30, %32, %cst_29 {dimension_numbers = #tpu.dot_dimension_numbers<[1], [0], [0], [1], [0, 0, 1, 1], [], []>} : vector<64x128xbf16>, vector<128x128xbf16>, vector<64x128xf32> -> vector<64x128xf32>
    %c0_30 = arith.constant 0 : index
    %c0_31 = arith.constant 0 : index
    %34 = vector.load %arg11[%c0_30, %c0_31] : memref<64x128xf32, #tpu.memory_space<vmem>>, vector<64x128xf32>
    %35 = arith.addf %34, %33 : vector<64x128xf32>
    %c0_32 = arith.constant 0 : index
    %c0_33 = arith.constant 0 : index
    %36 = vector.load %arg11[%c0_32, %c0_33] : memref<64x128xf32, #tpu.memory_space<vmem>>, vector<64x128xf32>
    tpu.vector_store %arg11[%c0_32, %c0_33], %35 {strides = array<i32>} : memref<64x128xf32, #tpu.memory_space<vmem>>, vector<64x128xf32>,
    %37 = vector.extract_strided_slice %8 {offsets = [0, 0, 0], sizes = [8, 8, 128], strides = [1, 1, 1]} : vector<9x9x128xf32> to vector<8x8x128xf32>
    %38 = vector.shape_cast %37 : vector<8x8x128xf32> to vector<64x128xf32>
    %39 = arith.truncf %38 : vector<64x128xf32> to vector<64x128xbf16>
    %c3 = arith.constant 3 : index
    %c0_34 = arith.constant 0 : index
    %c0_35 = arith.constant 0 : index
    %40 = vector.load %arg5[%c3, %c0_34, %c0_35] : memref<9x128x128xbf16, #tpu.memory_space<vmem>>, vector<1x128x128xbf16>
    %41 = vector.shape_cast %40 : vector<1x128x128xbf16> to vector<128x128xbf16>
    %cst_36 = arith.constant dense<0.000000e+00> : vector<64x128xf32>
    %42 = tpu.matmul %39, %41, %cst_36 {dimension_numbers = #tpu.dot_dimension_numbers<[1], [0], [0], [1], [0, 0, 1, 1], [], []>} : vector<64x128xbf16>, vector<128x128xbf16>, vector<64x128xf32> -> vector<64x128xf32>
    %c0_37 = arith.constant 0 : index
    %c0_38 = arith.constant 0 : index
    %43 = vector.load %arg11[%c0_37, %c0_38] : memref<64x128xf32, #tpu.memory_space<vmem>>, vector<64x128xf32>
    %44 = arith.addf %43, %42 : vector<64x128xf32>
    %c0_39 = arith.constant 0 : index
    %c0_40 = arith.constant 0 : index
    %45 = vector.load %arg11[%c0_39, %c0_40] : memref<64x128xf32, #tpu.memory_space<vmem>>, vector<64x128xf32>
    tpu.vector_store %arg11[%c0_39, %c0_40], %44 {strides = array<i32>} : memref<64x128xf32, #tpu.memory_space<vmem>>, vector<64x128xf32>,
    %46 = vector.extract_strided_slice %11 {offsets = [0, 0, 0], sizes = [8, 8, 128], strides = [1, 1, 1]} : vector<9x9x128xf32> to vector<8x8x128xf32>
    %47 = vector.shape_cast %46 : vector<8x8x128xf32> to vector<64x128xf32>
    %48 = arith.truncf %47 : vector<64x128xf32> to vector<64x128xbf16>
    %c4 = arith.constant 4 : index
    %c0_41 = arith.constant 0 : index
    %c0_42 = arith.constant 0 : index
    %49 = vector.load %arg5[%c4, %c0_41, %c0_42] : memref<9x128x128xbf16, #tpu.memory_space<vmem>>, vector<1x128x128xbf16>
    %50 = vector.shape_cast %49 : vector<1x128x128xbf16> to vector<128x128xbf16>
    %cst_43 = arith.constant dense<0.000000e+00> : vector<64x128xf32>
    %51 = tpu.matmul %48, %50, %cst_43 {dimension_numbers = #tpu.dot_dimension_numbers<[1], [0], [0], [1], [0, 0, 1, 1], [], []>} : vector<64x128xbf16>, vector<128x128xbf16>, vector<64x128xf32> -> vector<64x128xf32>
    %c0_44 = arith.constant 0 : index
    %c0_45 = arith.constant 0 : index
    %52 = vector.load %arg11[%c0_44, %c0_45] : memref<64x128xf32, #tpu.memory_space<vmem>>, vector<64x128xf32>
    %53 = arith.addf %52, %51 : vector<64x128xf32>
    %c0_46 = arith.constant 0 : index
    %c0_47 = arith.constant 0 : index
    %54 = vector.load %arg11[%c0_46, %c0_47] : memref<64x128xf32, #tpu.memory_space<vmem>>, vector<64x128xf32>
    tpu.vector_store %arg11[%c0_46, %c0_47], %53 {strides = array<i32>} : memref<64x128xf32, #tpu.memory_space<vmem>>, vector<64x128xf32>,
    %55 = vector.extract_strided_slice %8 {offsets = [0, 1, 0], sizes = [8, 8, 128], strides = [1, 1, 1]} : vector<9x9x128xf32> to vector<8x8x128xf32>
    %56 = vector.shape_cast %55 : vector<8x8x128xf32> to vector<64x128xf32>
    %57 = arith.truncf %56 : vector<64x128xf32> to vector<64x128xbf16>
    %c5 = arith.constant 5 : index
    %c0_48 = arith.constant 0 : index
    %c0_49 = arith.constant 0 : index
    %58 = vector.load %arg5[%c5, %c0_48, %c0_49] : memref<9x128x128xbf16, #tpu.memory_space<vmem>>, vector<1x128x128xbf16>
    %59 = vector.shape_cast %58 : vector<1x128x128xbf16> to vector<128x128xbf16>
    %cst_50 = arith.constant dense<0.000000e+00> : vector<64x128xf32>
    %60 = tpu.matmul %57, %59, %cst_50 {dimension_numbers = #tpu.dot_dimension_numbers<[1], [0], [0], [1], [0, 0, 1, 1], [], []>} : vector<64x128xbf16>, vector<128x128xbf16>, vector<64x128xf32> -> vector<64x128xf32>
    %c0_51 = arith.constant 0 : index
    %c0_52 = arith.constant 0 : index
    %61 = vector.load %arg11[%c0_51, %c0_52] : memref<64x128xf32, #tpu.memory_space<vmem>>, vector<64x128xf32>
    %62 = arith.addf %61, %60 : vector<64x128xf32>
    %c0_53 = arith.constant 0 : index
    %c0_54 = arith.constant 0 : index
    %63 = vector.load %arg11[%c0_53, %c0_54] : memref<64x128xf32, #tpu.memory_space<vmem>>, vector<64x128xf32>
    tpu.vector_store %arg11[%c0_53, %c0_54], %62 {strides = array<i32>} : memref<64x128xf32, #tpu.memory_space<vmem>>, vector<64x128xf32>,
    %64 = vector.extract_strided_slice %2 {offsets = [1, 0, 0], sizes = [8, 8, 128], strides = [1, 1, 1]} : vector<9x9x128xf32> to vector<8x8x128xf32>
    %65 = vector.shape_cast %64 : vector<8x8x128xf32> to vector<64x128xf32>
    %66 = arith.truncf %65 : vector<64x128xf32> to vector<64x128xbf16>
    %c6 = arith.constant 6 : index
    %c0_55 = arith.constant 0 : index
    %c0_56 = arith.constant 0 : index
    %67 = vector.load %arg5[%c6, %c0_55, %c0_56] : memref<9x128x128xbf16, #tpu.memory_space<vmem>>, vector<1x128x128xbf16>
    %68 = vector.shape_cast %67 : vector<1x128x128xbf16> to vector<128x128xbf16>
    %cst_57 = arith.constant dense<0.000000e+00> : vector<64x128xf32>
    %69 = tpu.matmul %66, %68, %cst_57 {dimension_numbers = #tpu.dot_dimension_numbers<[1], [0], [0], [1], [0, 0, 1, 1], [], []>} : vector<64x128xbf16>, vector<128x128xbf16>, vector<64x128xf32> -> vector<64x128xf32>
    %c0_58 = arith.constant 0 : index
    %c0_59 = arith.constant 0 : index
    %70 = vector.load %arg11[%c0_58, %c0_59] : memref<64x128xf32, #tpu.memory_space<vmem>>, vector<64x128xf32>
    %71 = arith.addf %70, %69 : vector<64x128xf32>
    %c0_60 = arith.constant 0 : index
    %c0_61 = arith.constant 0 : index
    %72 = vector.load %arg11[%c0_60, %c0_61] : memref<64x128xf32, #tpu.memory_space<vmem>>, vector<64x128xf32>
    tpu.vector_store %arg11[%c0_60, %c0_61], %71 {strides = array<i32>} : memref<64x128xf32, #tpu.memory_space<vmem>>, vector<64x128xf32>,
    %73 = vector.extract_strided_slice %5 {offsets = [1, 0, 0], sizes = [8, 8, 128], strides = [1, 1, 1]} : vector<9x9x128xf32> to vector<8x8x128xf32>
    %74 = vector.shape_cast %73 : vector<8x8x128xf32> to vector<64x128xf32>
    %75 = arith.truncf %74 : vector<64x128xf32> to vector<64x128xbf16>
    %c7 = arith.constant 7 : index
    %c0_62 = arith.constant 0 : index
    %c0_63 = arith.constant 0 : index
    %76 = vector.load %arg5[%c7, %c0_62, %c0_63] : memref<9x128x128xbf16, #tpu.memory_space<vmem>>, vector<1x128x128xbf16>
    %77 = vector.shape_cast %76 : vector<1x128x128xbf16> to vector<128x128xbf16>
    %cst_64 = arith.constant dense<0.000000e+00> : vector<64x128xf32>
    %78 = tpu.matmul %75, %77, %cst_64 {dimension_numbers = #tpu.dot_dimension_numbers<[1], [0], [0], [1], [0, 0, 1, 1], [], []>} : vector<64x128xbf16>, vector<128x128xbf16>, vector<64x128xf32> -> vector<64x128xf32>
    %c0_65 = arith.constant 0 : index
    %c0_66 = arith.constant 0 : index
    %79 = vector.load %arg11[%c0_65, %c0_66] : memref<64x128xf32, #tpu.memory_space<vmem>>, vector<64x128xf32>
    %80 = arith.addf %79, %78 : vector<64x128xf32>
    %c0_67 = arith.constant 0 : index
    %c0_68 = arith.constant 0 : index
    %81 = vector.load %arg11[%c0_67, %c0_68] : memref<64x128xf32, #tpu.memory_space<vmem>>, vector<64x128xf32>
    tpu.vector_store %arg11[%c0_67, %c0_68], %80 {strides = array<i32>} : memref<64x128xf32, #tpu.memory_space<vmem>>, vector<64x128xf32>,
    %82 = vector.extract_strided_slice %2 {offsets = [1, 1, 0], sizes = [8, 8, 128], strides = [1, 1, 1]} : vector<9x9x128xf32> to vector<8x8x128xf32>
    %83 = vector.shape_cast %82 : vector<8x8x128xf32> to vector<64x128xf32>
    %84 = arith.truncf %83 : vector<64x128xf32> to vector<64x128xbf16>
    %c8 = arith.constant 8 : index
    %c0_69 = arith.constant 0 : index
    %c0_70 = arith.constant 0 : index
    %85 = vector.load %arg5[%c8, %c0_69, %c0_70] : memref<9x128x128xbf16, #tpu.memory_space<vmem>>, vector<1x128x128xbf16>
    %86 = vector.shape_cast %85 : vector<1x128x128xbf16> to vector<128x128xbf16>
    %cst_71 = arith.constant dense<0.000000e+00> : vector<64x128xf32>
    %87 = tpu.matmul %84, %86, %cst_71 {dimension_numbers = #tpu.dot_dimension_numbers<[1], [0], [0], [1], [0, 0, 1, 1], [], []>} : vector<64x128xbf16>, vector<128x128xbf16>, vector<64x128xf32> -> vector<64x128xf32>
    %c0_72 = arith.constant 0 : index
    %c0_73 = arith.constant 0 : index
    %88 = vector.load %arg11[%c0_72, %c0_73] : memref<64x128xf32, #tpu.memory_space<vmem>>, vector<64x128xf32>
    %89 = arith.addf %88, %87 : vector<64x128xf32>
    %c0_74 = arith.constant 0 : index
    %c0_75 = arith.constant 0 : index
    %90 = vector.load %arg11[%c0_74, %c0_75] : memref<64x128xf32, #tpu.memory_space<vmem>>, vector<64x128xf32>
    tpu.vector_store %arg11[%c0_74, %c0_75], %89 {strides = array<i32>} : memref<64x128xf32, #tpu.memory_space<vmem>>, vector<64x128xf32>,
    %c0_76 = arith.constant 0 : index
    %c0_77 = arith.constant 0 : index
    %91 = vector.load %arg11[%c0_76, %c0_77] : memref<64x128xf32, #tpu.memory_space<vmem>>, vector<64x128xf32>
    %c0_78 = arith.constant 0 : index
    %c0_79 = arith.constant 0 : index
    %92 = vector.load %arg7[%c0_78, %c0_79] : memref<8x128xf32, #tpu.memory_space<vmem>>, vector<1x128xf32>
    %93 = vector.broadcast %92 : vector<1x128xf32> to vector<64x128xf32>
    %94 = arith.mulf %91, %93 : vector<64x128xf32>
    %c1_80 = arith.constant 1 : index
    %c0_81 = arith.constant 0 : index
    %95 = vector.load %arg7[%c1_80, %c0_81] : memref<8x128xf32, #tpu.memory_space<vmem>>, vector<1x128xf32>
    %96 = vector.broadcast %95 : vector<1x128xf32> to vector<64x128xf32>
    %97 = arith.addf %94, %96 : vector<64x128xf32>
    %cst_82 = arith.constant 0.000000e+00 : f32
    %98 = vector.broadcast %cst_82 : f32 to vector<64x128xf32>
    %99 = arith.maximumf %97, %98 : vector<64x128xf32>
    %cst_83 = arith.constant 0.000000e+00 : f32
    %100 = vector.broadcast %cst_83 : f32 to vector<1x10x128xf32>
    %c0_84 = arith.constant 0 : index
    %c0_85 = arith.constant 0 : index
    %c0_86 = arith.constant 0 : index
    %101 = vector.load %arg10[%c0_84, %c0_85, %c0_86] : memref<10x10x128xf32, #tpu.memory_space<vmem>>, vector<1x10x128xf32>
    tpu.vector_store %arg10[%c0_84, %c0_85, %c0_86], %100 {strides = array<i32>} : memref<10x10x128xf32, #tpu.memory_space<vmem>>, vector<1x10x128xf32>,
    %cst_87 = arith.constant 0.000000e+00 : f32
    %102 = vector.broadcast %cst_87 : f32 to vector<1x10x128xf32>
    %c9 = arith.constant 9 : index
    %c0_88 = arith.constant 0 : index
    %c0_89 = arith.constant 0 : index
    %103 = vector.load %arg10[%c9, %c0_88, %c0_89] : memref<10x10x128xf32, #tpu.memory_space<vmem>>, vector<1x10x128xf32>
    tpu.vector_store %arg10[%c9, %c0_88, %c0_89], %102 {strides = array<i32>} : memref<10x10x128xf32, #tpu.memory_space<vmem>>, vector<1x10x128xf32>,
    %cst_90 = arith.constant 0.000000e+00 : f32
    %104 = vector.broadcast %cst_90 : f32 to vector<10x1x128xf32>
    %c0_91 = arith.constant 0 : index
    %c0_92 = arith.constant 0 : index
    %c0_93 = arith.constant 0 : index
    %105 = vector.load %arg10[%c0_91, %c0_92, %c0_93] : memref<10x10x128xf32, #tpu.memory_space<vmem>>, vector<10x1x128xf32>
    tpu.vector_store %arg10[%c0_91, %c0_92, %c0_93], %104 {strides = array<i32>} : memref<10x10x128xf32, #tpu.memory_space<vmem>>, vector<10x1x128xf32>,
    %cst_94 = arith.constant 0.000000e+00 : f32
    %106 = vector.broadcast %cst_94 : f32 to vector<10x1x128xf32>
    %c0_95 = arith.constant 0 : index
    %c9_96 = arith.constant 9 : index
    %c0_97 = arith.constant 0 : index
    %107 = vector.load %arg10[%c0_95, %c9_96, %c0_97] : memref<10x10x128xf32, #tpu.memory_space<vmem>>, vector<10x1x128xf32>
    tpu.vector_store %arg10[%c0_95, %c9_96, %c0_97], %106 {strides = array<i32>} : memref<10x10x128xf32, #tpu.memory_space<vmem>>, vector<10x1x128xf32>,
    %108 = vector.shape_cast %99 : vector<64x128xf32> to vector<8x8x128xf32>
    %c1_98 = arith.constant 1 : index
    %c1_99 = arith.constant 1 : index
    %c0_100 = arith.constant 0 : index
    %109 = vector.load %arg10[%c1_98, %c1_99, %c0_100] : memref<10x10x128xf32, #tpu.memory_space<vmem>>, vector<8x8x128xf32>
    tpu.vector_store %arg10[%c1_98, %c1_99, %c0_100], %108 {strides = array<i32>} : memref<10x10x128xf32, #tpu.memory_space<vmem>>, vector<8x8x128xf32>,
    %c0_101 = arith.constant 0 : index
    %c0_102 = arith.constant 0 : index
    %c0_103 = arith.constant 0 : index
    %110 = vector.load %arg10[%c0_101, %c0_102, %c0_103] : memref<10x10x128xf32, #tpu.memory_space<vmem>>, vector<8x8x128xf32>
    %111 = vector.shape_cast %110 : vector<8x8x128xf32> to vector<64x128xf32>
    %112 = arith.truncf %111 : vector<64x128xf32> to vector<64x128xbf16>
    %c0_104 = arith.constant 0 : index
    %c0_105 = arith.constant 0 : index
    %c0_106 = arith.constant 0 : index
    %113 = vector.load %arg6[%c0_104, %c0_105, %c0_106] : memref<9x128x128xbf16, #tpu.memory_space<vmem>>, vector<1x128x128xbf16>
    %114 = vector.shape_cast %113 : vector<1x128x128xbf16> to vector<128x128xbf16>
    %cst_107 = arith.constant dense<0.000000e+00> : vector<64x128xf32>
    %115 = tpu.matmul %112, %114, %cst_107 {dimension_numbers = #tpu.dot_dimension_numbers<[1], [0], [0], [1], [0, 0, 1, 1], [], []>} : vector<64x128xbf16>, vector<128x128xbf16>, vector<64x128xf32> -> vector<64x128xf32>
    %c0_108 = arith.constant 0 : index
    %c0_109 = arith.constant 0 : index
    %116 = vector.load %arg12[%c0_108, %c0_109] : memref<64x128xf32, #tpu.memory_space<vmem>>, vector<64x128xf32>
    tpu.vector_store %arg12[%c0_108, %c0_109], %115 {strides = array<i32>} : memref<64x128xf32, #tpu.memory_space<vmem>>, vector<64x128xf32>,
    %c0_110 = arith.constant 0 : index
    %c1_111 = arith.constant 1 : index
    %c0_112 = arith.constant 0 : index
    %117 = vector.load %arg10[%c0_110, %c1_111, %c0_112] : memref<10x10x128xf32, #tpu.memory_space<vmem>>, vector<8x8x128xf32>
    %118 = vector.shape_cast %117 : vector<8x8x128xf32> to vector<64x128xf32>
    %119 = arith.truncf %118 : vector<64x128xf32> to vector<64x128xbf16>
    %c1_113 = arith.constant 1 : index
    %c0_114 = arith.constant 0 : index
    %c0_115 = arith.constant 0 : index
    %120 = vector.load %arg6[%c1_113, %c0_114, %c0_115] : memref<9x128x128xbf16, #tpu.memory_space<vmem>>, vector<1x128x128xbf16>
    %121 = vector.shape_cast %120 : vector<1x128x128xbf16> to vector<128x128xbf16>
    %cst_116 = arith.constant dense<0.000000e+00> : vector<64x128xf32>
    %122 = tpu.matmul %119, %121, %cst_116 {dimension_numbers = #tpu.dot_dimension_numbers<[1], [0], [0], [1], [0, 0, 1, 1], [], []>} : vector<64x128xbf16>, vector<128x128xbf16>, vector<64x128xf32> -> vector<64x128xf32>
    %c0_117 = arith.constant 0 : index
    %c0_118 = arith.constant 0 : index
    %123 = vector.load %arg12[%c0_117, %c0_118] : memref<64x128xf32, #tpu.memory_space<vmem>>, vector<64x128xf32>
    %124 = arith.addf %123, %122 : vector<64x128xf32>
    %c0_119 = arith.constant 0 : index
    %c0_120 = arith.constant 0 : index
    %125 = vector.load %arg12[%c0_119, %c0_120] : memref<64x128xf32, #tpu.memory_space<vmem>>, vector<64x128xf32>
    tpu.vector_store %arg12[%c0_119, %c0_120], %124 {strides = array<i32>} : memref<64x128xf32, #tpu.memory_space<vmem>>, vector<64x128xf32>,
    %c0_121 = arith.constant 0 : index
    %c2_122 = arith.constant 2 : index
    %c0_123 = arith.constant 0 : index
    %126 = vector.load %arg10[%c0_121, %c2_122, %c0_123] : memref<10x10x128xf32, #tpu.memory_space<vmem>>, vector<8x8x128xf32>
    %127 = vector.shape_cast %126 : vector<8x8x128xf32> to vector<64x128xf32>
    %128 = arith.truncf %127 : vector<64x128xf32> to vector<64x128xbf16>
    %c2_124 = arith.constant 2 : index
    %c0_125 = arith.constant 0 : index
    %c0_126 = arith.constant 0 : index
    %129 = vector.load %arg6[%c2_124, %c0_125, %c0_126] : memref<9x128x128xbf16, #tpu.memory_space<vmem>>, vector<1x128x128xbf16>
    %130 = vector.shape_cast %129 : vector<1x128x128xbf16> to vector<128x128xbf16>
    %cst_127 = arith.constant dense<0.000000e+00> : vector<64x128xf32>
    %131 = tpu.matmul %128, %130, %cst_127 {dimension_numbers = #tpu.dot_dimension_numbers<[1], [0], [0], [1], [0, 0, 1, 1], [], []>} : vector<64x128xbf16>, vector<128x128xbf16>, vector<64x128xf32> -> vector<64x128xf32>
    %c0_128 = arith.constant 0 : index
    %c0_129 = arith.constant 0 : index
    %132 = vector.load %arg12[%c0_128, %c0_129] : memref<64x128xf32, #tpu.memory_space<vmem>>, vector<64x128xf32>
    %133 = arith.addf %132, %131 : vector<64x128xf32>
    %c0_130 = arith.constant 0 : index
    %c0_131 = arith.constant 0 : index
    %134 = vector.load %arg12[%c0_130, %c0_131] : memref<64x128xf32, #tpu.memory_space<vmem>>, vector<64x128xf32>
    tpu.vector_store %arg12[%c0_130, %c0_131], %133 {strides = array<i32>} : memref<64x128xf32, #tpu.memory_space<vmem>>, vector<64x128xf32>,
    %c1_132 = arith.constant 1 : index
    %c0_133 = arith.constant 0 : index
    %c0_134 = arith.constant 0 : index
    %135 = vector.load %arg10[%c1_132, %c0_133, %c0_134] : memref<10x10x128xf32, #tpu.memory_space<vmem>>, vector<8x8x128xf32>
    %136 = vector.shape_cast %135 : vector<8x8x128xf32> to vector<64x128xf32>
    %137 = arith.truncf %136 : vector<64x128xf32> to vector<64x128xbf16>
    %c3_135 = arith.constant 3 : index
    %c0_136 = arith.constant 0 : index
    %c0_137 = arith.constant 0 : index
    %138 = vector.load %arg6[%c3_135, %c0_136, %c0_137] : memref<9x128x128xbf16, #tpu.memory_space<vmem>>, vector<1x128x128xbf16>
    %139 = vector.shape_cast %138 : vector<1x128x128xbf16> to vector<128x128xbf16>
    %cst_138 = arith.constant dense<0.000000e+00> : vector<64x128xf32>
    %140 = tpu.matmul %137, %139, %cst_138 {dimension_numbers = #tpu.dot_dimension_numbers<[1], [0], [0], [1], [0, 0, 1, 1], [], []>} : vector<64x128xbf16>, vector<128x128xbf16>, vector<64x128xf32> -> vector<64x128xf32>
    %c0_139 = arith.constant 0 : index
    %c0_140 = arith.constant 0 : index
    %141 = vector.load %arg12[%c0_139, %c0_140] : memref<64x128xf32, #tpu.memory_space<vmem>>, vector<64x128xf32>
    %142 = arith.addf %141, %140 : vector<64x128xf32>
    %c0_141 = arith.constant 0 : index
    %c0_142 = arith.constant 0 : index
    %143 = vector.load %arg12[%c0_141, %c0_142] : memref<64x128xf32, #tpu.memory_space<vmem>>, vector<64x128xf32>
    tpu.vector_store %arg12[%c0_141, %c0_142], %142 {strides = array<i32>} : memref<64x128xf32, #tpu.memory_space<vmem>>, vector<64x128xf32>,
    %c1_143 = arith.constant 1 : index
    %c1_144 = arith.constant 1 : index
    %c0_145 = arith.constant 0 : index
    %144 = vector.load %arg10[%c1_143, %c1_144, %c0_145] : memref<10x10x128xf32, #tpu.memory_space<vmem>>, vector<8x8x128xf32>
    %145 = vector.shape_cast %144 : vector<8x8x128xf32> to vector<64x128xf32>
    %146 = arith.truncf %145 : vector<64x128xf32> to vector<64x128xbf16>
    %c4_146 = arith.constant 4 : index
    %c0_147 = arith.constant 0 : index
    %c0_148 = arith.constant 0 : index
    %147 = vector.load %arg6[%c4_146, %c0_147, %c0_148] : memref<9x128x128xbf16, #tpu.memory_space<vmem>>, vector<1x128x128xbf16>
    %148 = vector.shape_cast %147 : vector<1x128x128xbf16> to vector<128x128xbf16>
    %cst_149 = arith.constant dense<0.000000e+00> : vector<64x128xf32>
    %149 = tpu.matmul %146, %148, %cst_149 {dimension_numbers = #tpu.dot_dimension_numbers<[1], [0], [0], [1], [0, 0, 1, 1], [], []>} : vector<64x128xbf16>, vector<128x128xbf16>, vector<64x128xf32> -> vector<64x128xf32>
    %c0_150 = arith.constant 0 : index
    %c0_151 = arith.constant 0 : index
    %150 = vector.load %arg12[%c0_150, %c0_151] : memref<64x128xf32, #tpu.memory_space<vmem>>, vector<64x128xf32>
    %151 = arith.addf %150, %149 : vector<64x128xf32>
    %c0_152 = arith.constant 0 : index
    %c0_153 = arith.constant 0 : index
    %152 = vector.load %arg12[%c0_152, %c0_153] : memref<64x128xf32, #tpu.memory_space<vmem>>, vector<64x128xf32>
    tpu.vector_store %arg12[%c0_152, %c0_153], %151 {strides = array<i32>} : memref<64x128xf32, #tpu.memory_space<vmem>>, vector<64x128xf32>,
    %c1_154 = arith.constant 1 : index
    %c2_155 = arith.constant 2 : index
    %c0_156 = arith.constant 0 : index
    %153 = vector.load %arg10[%c1_154, %c2_155, %c0_156] : memref<10x10x128xf32, #tpu.memory_space<vmem>>, vector<8x8x128xf32>
    %154 = vector.shape_cast %153 : vector<8x8x128xf32> to vector<64x128xf32>
    %155 = arith.truncf %154 : vector<64x128xf32> to vector<64x128xbf16>
    %c5_157 = arith.constant 5 : index
    %c0_158 = arith.constant 0 : index
    %c0_159 = arith.constant 0 : index
    %156 = vector.load %arg6[%c5_157, %c0_158, %c0_159] : memref<9x128x128xbf16, #tpu.memory_space<vmem>>, vector<1x128x128xbf16>
    %157 = vector.shape_cast %156 : vector<1x128x128xbf16> to vector<128x128xbf16>
    %cst_160 = arith.constant dense<0.000000e+00> : vector<64x128xf32>
    %158 = tpu.matmul %155, %157, %cst_160 {dimension_numbers = #tpu.dot_dimension_numbers<[1], [0], [0], [1], [0, 0, 1, 1], [], []>} : vector<64x128xbf16>, vector<128x128xbf16>, vector<64x128xf32> -> vector<64x128xf32>
    %c0_161 = arith.constant 0 : index
    %c0_162 = arith.constant 0 : index
    %159 = vector.load %arg12[%c0_161, %c0_162] : memref<64x128xf32, #tpu.memory_space<vmem>>, vector<64x128xf32>
    %160 = arith.addf %159, %158 : vector<64x128xf32>
    %c0_163 = arith.constant 0 : index
    %c0_164 = arith.constant 0 : index
    %161 = vector.load %arg12[%c0_163, %c0_164] : memref<64x128xf32, #tpu.memory_space<vmem>>, vector<64x128xf32>
    tpu.vector_store %arg12[%c0_163, %c0_164], %160 {strides = array<i32>} : memref<64x128xf32, #tpu.memory_space<vmem>>, vector<64x128xf32>,
    %c2_165 = arith.constant 2 : index
    %c0_166 = arith.constant 0 : index
    %c0_167 = arith.constant 0 : index
    %162 = vector.load %arg10[%c2_165, %c0_166, %c0_167] : memref<10x10x128xf32, #tpu.memory_space<vmem>>, vector<8x8x128xf32>
    %163 = vector.shape_cast %162 : vector<8x8x128xf32> to vector<64x128xf32>
    %164 = arith.truncf %163 : vector<64x128xf32> to vector<64x128xbf16>
    %c6_168 = arith.constant 6 : index
    %c0_169 = arith.constant 0 : index
    %c0_170 = arith.constant 0 : index
    %165 = vector.load %arg6[%c6_168, %c0_169, %c0_170] : memref<9x128x128xbf16, #tpu.memory_space<vmem>>, vector<1x128x128xbf16>
    %166 = vector.shape_cast %165 : vector<1x128x128xbf16> to vector<128x128xbf16>
    %cst_171 = arith.constant dense<0.000000e+00> : vector<64x128xf32>
    %167 = tpu.matmul %164, %166, %cst_171 {dimension_numbers = #tpu.dot_dimension_numbers<[1], [0], [0], [1], [0, 0, 1, 1], [], []>} : vector<64x128xbf16>, vector<128x128xbf16>, vector<64x128xf32> -> vector<64x128xf32>
    %c0_172 = arith.constant 0 : index
    %c0_173 = arith.constant 0 : index
    %168 = vector.load %arg12[%c0_172, %c0_173] : memref<64x128xf32, #tpu.memory_space<vmem>>, vector<64x128xf32>
    %169 = arith.addf %168, %167 : vector<64x128xf32>
    %c0_174 = arith.constant 0 : index
    %c0_175 = arith.constant 0 : index
    %170 = vector.load %arg12[%c0_174, %c0_175] : memref<64x128xf32, #tpu.memory_space<vmem>>, vector<64x128xf32>
    tpu.vector_store %arg12[%c0_174, %c0_175], %169 {strides = array<i32>} : memref<64x128xf32, #tpu.memory_space<vmem>>, vector<64x128xf32>,
    %c2_176 = arith.constant 2 : index
    %c1_177 = arith.constant 1 : index
    %c0_178 = arith.constant 0 : index
    %171 = vector.load %arg10[%c2_176, %c1_177, %c0_178] : memref<10x10x128xf32, #tpu.memory_space<vmem>>, vector<8x8x128xf32>
    %172 = vector.shape_cast %171 : vector<8x8x128xf32> to vector<64x128xf32>
    %173 = arith.truncf %172 : vector<64x128xf32> to vector<64x128xbf16>
    %c7_179 = arith.constant 7 : index
    %c0_180 = arith.constant 0 : index
    %c0_181 = arith.constant 0 : index
    %174 = vector.load %arg6[%c7_179, %c0_180, %c0_181] : memref<9x128x128xbf16, #tpu.memory_space<vmem>>, vector<1x128x128xbf16>
    %175 = vector.shape_cast %174 : vector<1x128x128xbf16> to vector<128x128xbf16>
    %cst_182 = arith.constant dense<0.000000e+00> : vector<64x128xf32>
    %176 = tpu.matmul %173, %175, %cst_182 {dimension_numbers = #tpu.dot_dimension_numbers<[1], [0], [0], [1], [0, 0, 1, 1], [], []>} : vector<64x128xbf16>, vector<128x128xbf16>, vector<64x128xf32> -> vector<64x128xf32>
    %c0_183 = arith.constant 0 : index
    %c0_184 = arith.constant 0 : index
    %177 = vector.load %arg12[%c0_183, %c0_184] : memref<64x128xf32, #tpu.memory_space<vmem>>, vector<64x128xf32>
    %178 = arith.addf %177, %176 : vector<64x128xf32>
    %c0_185 = arith.constant 0 : index
    %c0_186 = arith.constant 0 : index
    %179 = vector.load %arg12[%c0_185, %c0_186] : memref<64x128xf32, #tpu.memory_space<vmem>>, vector<64x128xf32>
    tpu.vector_store %arg12[%c0_185, %c0_186], %178 {strides = array<i32>} : memref<64x128xf32, #tpu.memory_space<vmem>>, vector<64x128xf32>,
    %c2_187 = arith.constant 2 : index
    %c2_188 = arith.constant 2 : index
    %c0_189 = arith.constant 0 : index
    %180 = vector.load %arg10[%c2_187, %c2_188, %c0_189] : memref<10x10x128xf32, #tpu.memory_space<vmem>>, vector<8x8x128xf32>
    %181 = vector.shape_cast %180 : vector<8x8x128xf32> to vector<64x128xf32>
    %182 = arith.truncf %181 : vector<64x128xf32> to vector<64x128xbf16>
    %c8_190 = arith.constant 8 : index
    %c0_191 = arith.constant 0 : index
    %c0_192 = arith.constant 0 : index
    %183 = vector.load %arg6[%c8_190, %c0_191, %c0_192] : memref<9x128x128xbf16, #tpu.memory_space<vmem>>, vector<1x128x128xbf16>
    %184 = vector.shape_cast %183 : vector<1x128x128xbf16> to vector<128x128xbf16>
    %cst_193 = arith.constant dense<0.000000e+00> : vector<64x128xf32>
    %185 = tpu.matmul %182, %184, %cst_193 {dimension_numbers = #tpu.dot_dimension_numbers<[1], [0], [0], [1], [0, 0, 1, 1], [], []>} : vector<64x128xbf16>, vector<128x128xbf16>, vector<64x128xf32> -> vector<64x128xf32>
    %c0_194 = arith.constant 0 : index
    %c0_195 = arith.constant 0 : index
    %186 = vector.load %arg12[%c0_194, %c0_195] : memref<64x128xf32, #tpu.memory_space<vmem>>, vector<64x128xf32>
    %187 = arith.addf %186, %185 : vector<64x128xf32>
    %c0_196 = arith.constant 0 : index
    %c0_197 = arith.constant 0 : index
    %188 = vector.load %arg12[%c0_196, %c0_197] : memref<64x128xf32, #tpu.memory_space<vmem>>, vector<64x128xf32>
    tpu.vector_store %arg12[%c0_196, %c0_197], %187 {strides = array<i32>} : memref<64x128xf32, #tpu.memory_space<vmem>>, vector<64x128xf32>,
    %189 = vector.extract_strided_slice %11 {offsets = [0, 0, 0], sizes = [8, 8, 128], strides = [1, 1, 1]} : vector<9x9x128xf32> to vector<8x8x128xf32>
    %190 = vector.shape_cast %189 : vector<8x8x128xf32> to vector<64x128xf32>
    %191 = arith.truncf %190 : vector<64x128xf32> to vector<64x128xbf16>
    %c0_198 = arith.constant 0 : index
    %c0_199 = arith.constant 0 : index
    %192 = vector.load %arg8[%c0_198, %c0_199] : memref<128x128xbf16, #tpu.memory_space<vmem>>, vector<128x128xbf16>
    %cst_200 = arith.constant dense<0.000000e+00> : vector<64x128xf32>
    %193 = tpu.matmul %191, %192, %cst_200 {dimension_numbers = #tpu.dot_dimension_numbers<[1], [0], [0], [1], [0, 0, 1, 1], [], []>} : vector<64x128xbf16>, vector<128x128xbf16>, vector<64x128xf32> -> vector<64x128xf32>
    %c4_201 = arith.constant 4 : index
    %c0_202 = arith.constant 0 : index
    %194 = vector.load %arg7[%c4_201, %c0_202] : memref<8x128xf32, #tpu.memory_space<vmem>>, vector<1x128xf32>
    %195 = vector.broadcast %194 : vector<1x128xf32> to vector<64x128xf32>
    %196 = arith.mulf %193, %195 : vector<64x128xf32>
    %c5_203 = arith.constant 5 : index
    %c0_204 = arith.constant 0 : index
    %197 = vector.load %arg7[%c5_203, %c0_204] : memref<8x128xf32, #tpu.memory_space<vmem>>, vector<1x128xf32>
    %198 = vector.broadcast %197 : vector<1x128xf32> to vector<64x128xf32>
    %199 = arith.addf %196, %198 : vector<64x128xf32>
    %c0_205 = arith.constant 0 : index
    %c0_206 = arith.constant 0 : index
    %200 = vector.load %arg12[%c0_205, %c0_206] : memref<64x128xf32, #tpu.memory_space<vmem>>, vector<64x128xf32>
    %c2_207 = arith.constant 2 : index
    %c0_208 = arith.constant 0 : index
    %201 = vector.load %arg7[%c2_207, %c0_208] : memref<8x128xf32, #tpu.memory_space<vmem>>, vector<1x128xf32>
    %202 = vector.broadcast %201 : vector<1x128xf32> to vector<64x128xf32>
    %203 = arith.mulf %200, %202 : vector<64x128xf32>
    %c3_209 = arith.constant 3 : index
    %c0_210 = arith.constant 0 : index
    %204 = vector.load %arg7[%c3_209, %c0_210] : memref<8x128xf32, #tpu.memory_space<vmem>>, vector<1x128xf32>
    %205 = vector.broadcast %204 : vector<1x128xf32> to vector<64x128xf32>
    %206 = arith.addf %203, %205 : vector<64x128xf32>
    %207 = arith.addf %206, %199 : vector<64x128xf32>
    %cst_211 = arith.constant 0.000000e+00 : f32
    %208 = vector.broadcast %cst_211 : f32 to vector<64x128xf32>
    %209 = arith.maximumf %207, %208 : vector<64x128xf32>
    %210 = vector.shape_cast %209 : vector<64x128xf32> to vector<8x8x128xf32>
    %c0_212 = arith.constant 0 : index
    %c0_213 = arith.constant 0 : index
    %c0_214 = arith.constant 0 : index
    %c0_215 = arith.constant 0 : index
    %211 = vector.load %arg9[%c0_212, %c0_213, %c0_214, %c0_215] : memref<1x8x8x128xf32, #tpu.memory_space<vmem>>, vector<1x8x8x128xf32>
    %212 = vector.shape_cast %211 : vector<1x8x8x128xf32> to vector<8x8x128xf32>
    %213 = vector.shape_cast %210 : vector<8x8x128xf32> to vector<1x8x8x128xf32>
    tpu.vector_store %arg9[%c0_212, %c0_213, %c0_214, %c0_215], %213 {strides = array<i32>} : memref<1x8x8x128xf32, #tpu.memory_space<vmem>>, vector<1x8x8x128xf32>,
    return
  }
  func.func @transform_0(%arg0: i32) -> (i32, i32, i32, i32) {
    %c0_i32 = arith.constant 0 : i32
    %c0_i32_0 = arith.constant 0 : i32
    %c0_i32_1 = arith.constant 0 : i32
    %c0_i32_2 = arith.constant 0 : i32
    return %arg0, %c0_i32, %c0_i32_0, %c0_i32_1 : i32, i32, i32, i32
  }
  func.func @transform_1(%arg0: i32) -> (i32, i32, i32, i32) {
    %c0_i32 = arith.constant 0 : i32
    %c0_i32_0 = arith.constant 0 : i32
    %c0_i32_1 = arith.constant 0 : i32
    %c0_i32_2 = arith.constant 0 : i32
    return %arg0, %c0_i32, %c0_i32_0, %c0_i32_1 : i32, i32, i32, i32
  }
  func.func @transform_2(%arg0: i32) -> (i32, i32, i32, i32) {
    %c0_i32 = arith.constant 0 : i32
    %c0_i32_0 = arith.constant 0 : i32
    %c0_i32_1 = arith.constant 0 : i32
    %c0_i32_2 = arith.constant 0 : i32
    return %arg0, %c0_i32, %c0_i32_0, %c0_i32_1 : i32, i32, i32, i32
  }
  func.func @transform_3(%arg0: i32) -> (i32, i32, i32, i32) {
    %c0_i32 = arith.constant 0 : i32
    %c0_i32_0 = arith.constant 0 : i32
    %c0_i32_1 = arith.constant 0 : i32
    %c0_i32_2 = arith.constant 0 : i32
    return %arg0, %c0_i32, %c0_i32_0, %c0_i32_1 : i32, i32, i32, i32
  }
  func.func @transform_4(%arg0: i32) -> (i32, i32, i32) {
    %c0_i32 = arith.constant 0 : i32
    %c0_i32_0 = arith.constant 0 : i32
    %c0_i32_1 = arith.constant 0 : i32
    %c0_i32_2 = arith.constant 0 : i32
    return %c0_i32, %c0_i32_0, %c0_i32_1 : i32, i32, i32
  }
  func.func @transform_5(%arg0: i32) -> (i32, i32, i32) {
    %c0_i32 = arith.constant 0 : i32
    %c0_i32_0 = arith.constant 0 : i32
    %c0_i32_1 = arith.constant 0 : i32
    %c0_i32_2 = arith.constant 0 : i32
    return %c0_i32, %c0_i32_0, %c0_i32_1 : i32, i32, i32
  }
  func.func @transform_6(%arg0: i32) -> (i32, i32) {
    %c0_i32 = arith.constant 0 : i32
    %c0_i32_0 = arith.constant 0 : i32
    %c0_i32_1 = arith.constant 0 : i32
    return %c0_i32, %c0_i32_0 : i32, i32
  }
  func.func @transform_7(%arg0: i32) -> (i32, i32) {
    %c0_i32 = arith.constant 0 : i32
    %c0_i32_0 = arith.constant 0 : i32
    %c0_i32_1 = arith.constant 0 : i32
    return %c0_i32, %c0_i32_0 : i32, i32
  }
  func.func @transform_8(%arg0: i32) -> (i32, i32, i32, i32) {
    %c0_i32 = arith.constant 0 : i32
    %c0_i32_0 = arith.constant 0 : i32
    %c0_i32_1 = arith.constant 0 : i32
    %c0_i32_2 = arith.constant 0 : i32
    return %arg0, %c0_i32, %c0_i32_0, %c0_i32_1 : i32, i32, i32, i32
  }
}

</mosaic_0001>

<llo_original>
// kernel: tpu_custom_call.1
$region0: #{tpu_custom_call.1}
  #allocation0 [shape = 'u32[]', space=smem, size = 0x4, offset = 0x4, fixed_abs, tag = 'smem constant byte address 0x4 - core index']
  #allocation1 [shape = 'u32[144,128]{1,0:T(1,128)}', space=vmem, size = 0x12000, scoped, tag = 'internal scratch']
  #allocation2 [shape = 'f32[10,10,128]{2,1,0:T(8,128)}', space=vmem, size = 0x14000, scoped, tag = 'scratch operand']
  #allocation3 [shape = 'f32[64,128]{1,0:T(8,128)}', space=vmem, size = 0x8000, scoped, tag = 'scratch operand']
  #allocation4 [shape = 'f32[64,128]{1,0:T(8,128)}', space=vmem, size = 0x8000, scoped, tag = 'scratch operand']
  %s0 = inlined_call_operand.vmem [shape: bf16[2,9,9,128], index: 0, kind: input, shape index: {}]
  %s1 = inlined_call_operand.vmem [shape: bf16[2,9,9,128], index: 1, kind: input, shape index: {}]
  %s2 = inlined_call_operand.vmem [shape: bf16[2,9,9,128], index: 2, kind: input, shape index: {}]
  %s3 = inlined_call_operand.vmem [shape: bf16[2,9,9,128], index: 3, kind: input, shape index: {}]
  %s4 = inlined_call_operand.vmem [shape: bf16[9,128,128], index: 4, kind: input, shape index: {}]
  %s5 = inlined_call_operand.hbm [shape: bf16[9,128,128], index: 5, kind: input, shape index: {}]
  %s6 = inlined_call_operand.vmem [shape: f32[8,128], index: 6, kind: input, shape index: {}]
  %s7 = inlined_call_operand.vmem [shape: bf16[128,128], index: 7, kind: input, shape index: {}]
  %s8 = inlined_call_operand.hbm [shape: f32[2,8,8,128], index: 8, kind: output, shape index: {}]
  %s9 = sld [smem:[#allocation0]]
  $region69: #{tpu_custom_call.1} parent=0
    _
  %s11 = ssub.s32 1, %s9
  %s12 = scalar_select 0, %s11, %s9
  $region1: #{tpu_custom_call.1} parent=0
    #allocation5 [shape = 'u8[294912]{0}', space=vmem, size = 0x48000, scoped, tag = 'input window, operand 5, single buffered']
    #allocation6 [shape = 's32[2]{0}', space=sflag, size = 0x8, scoped, tag = 'scoped memory for tpu_custom_call.1']
    #allocation7 [shape = 's32[2]{0}', space=sflag, size = 0x8, scoped, tag = 'scoped memory for tpu_custom_call.1']
    #allocation8 [shape = 'u8[65536]{0}', space=vmem, size = 0x10000, scoped, tag = 'output window, operand 0']
    %13 = vsyncpa [#allocation6], 0
    %14 = vsyncpa [#allocation7], 0
    %s15 = scalar_lea.sflag [#allocation7], 1
    %16 = vsyncpa %s15, 0
    loop: start=0, step=1, limit=4
    $region2: #{tpu_custom_call.1} parent=1 // loop_pre_header
      _
    $region3: #{tpu_custom_call.1} parent=1 // loop_header
      %s18 = sphi 0, %s22
      %p19 = scmp.ge.s32.totalorder %s18, 4
      %s28 = sphi 0, %s30
      %s31 = sphi 0, %s28
      %s32 = sphi 0, %s31
      %s48 = sphi 0, %s32
      %s54 = sphi 0, %s56
      %s57 = sphi 0, %s54
      %s58 = sphi 0, %s57
      %s74 = sphi 0, %s58
      %s80 = sphi 0, %s82
      %s83 = sphi 0, %s80
      %s84 = sphi 0, %s83
      %s100 = sphi 0, %s84
      %s106 = sphi 0, %s108
      %s109 = sphi 0, %s106
      %s110 = sphi 0, %s109
      %s126 = sphi 0, %s110
      %s130 = sphi 0, %s130
      %s132 = sphi 0, %s130
      %s133 = sphi 0, %s132
      %s147 = sphi 0, %s133
      %s151 = sphi 0, %s151
      %s153 = sphi 0, %s151
      %s154 = sphi 0, %s153
      %s168 = sphi 0, %s154
      %s172 = sphi 0, %s172
      %s174 = sphi 0, %s172
      %s175 = sphi 0, %s174
      %s189 = sphi 0, %s175
      %s193 = sphi 0, %s193
      %s195 = sphi 0, %s193
      %s196 = sphi 0, %s195
      %s210 = sphi 0, %s196
      %s216 = sphi 0, %s218
      %s219 = sphi 0, %s216
      %s220 = sphi 0, %s219
      %s236 = sphi 0, %s220
    $region4: #{tpu_custom_call.1} parent=1 // loop_header_branch
      %21 = sbr.rel (%p19) target = $region8
    $region5: #{tpu_custom_call.1} parent=1 // loop_body
      %s23 = ssub.s32 %s18, 1
      %s24 = ssub.s32 %s18, 2
      %s25 = sadd.s32 %s18, 1
      %s26 = ssub.s32 %s18, %s25
      %p27 = scmp.eq.s32.totalorder %s26, 0
      %s29 = sadd.s32 %s28, 1
      %s30 = scalar_select %p27, %s28, %s29
      %p33 = pneg %p27
      %p34 = scmp.eq.s32.totalorder %s18, 1
      %p35 = por %p33, %p34
      %p36 = scmp.ne.s32.totalorder %s28, %s31
      %p37 = scmp.eq.s32.totalorder %s18, 0
      %p38 = por %p36, %p37
      %p39 = scmp.ne.s32.totalorder %s28, %s31
      %p40 = scmp.eq.s32.totalorder %s23, 1
      %p41 = por %p39, %p40
      %p42 = scmp.ne.s32.totalorder %s31, %s32
      %p43 = scmp.eq.s32.totalorder %s23, 0
      %p44 = por %p42, %p43
      %p45 = scmp.ne.s32.totalorder %s31, %s32
      %p46 = scmp.eq.s32.totalorder %s24, 1
      %p47 = por %p45, %p46
      %p49 = scmp.ne.s32.totalorder %s32, %s48
      %p50 = scmp.eq.s32.totalorder %s24, 0
      %p51 = por %p49, %p50
      %s52 = ssub.s32 %s18, %s25
      %p53 = scmp.eq.s32.totalorder %s52, 0
      %s55 = sadd.s32 %s54, 1
      %s56 = scalar_select %p53, %s54, %s55
      %p59 = pneg %p53
      %p60 = scmp.eq.s32.totalorder %s18, 1
      %p61 = por %p59, %p60
      %p62 = scmp.ne.s32.totalorder %s54, %s57
      %p63 = scmp.eq.s32.totalorder %s18, 0
      %p64 = por %p62, %p63
      %p65 = scmp.ne.s32.totalorder %s54, %s57
      %p66 = scmp.eq.s32.totalorder %s23, 1
      %p67 = por %p65, %p66
      %p68 = scmp.ne.s32.totalorder %s57, %s58
      %p69 = scmp.eq.s32.totalorder %s23, 0
      %p70 = por %p68, %p69
      %p71 = scmp.ne.s32.totalorder %s57, %s58
      %p72 = scmp.eq.s32.totalorder %s24, 1
      %p73 = por %p71, %p72
      %p75 = scmp.ne.s32.totalorder %s58, %s74
      %p76 = scmp.eq.s32.totalorder %s24, 0
      %p77 = por %p75, %p76
      %s78 = ssub.s32 %s18, %s25
      %p79 = scmp.eq.s32.totalorder %s78, 0
      %s81 = sadd.s32 %s80, 1
      %s82 = scalar_select %p79, %s80, %s81
      %p85 = pneg %p79
      %p86 = scmp.eq.s32.totalorder %s18, 1
      %p87 = por %p85, %p86
      %p88 = scmp.ne.s32.totalorder %s80, %s83
      %p89 = scmp.eq.s32.totalorder %s18, 0
      %p90 = por %p88, %p89
      %p91 = scmp.ne.s32.totalorder %s80, %s83
      %p92 = scmp.eq.s32.totalorder %s23, 1
      %p93 = por %p91, %p92
      %p94 = scmp.ne.s32.totalorder %s83, %s84
      %p95 = scmp.eq.s32.totalorder %s23, 0
      %p96 = por %p94, %p95
      %p97 = scmp.ne.s32.totalorder %s83, %s84
      %p98 = scmp.eq.s32.totalorder %s24, 1
      %p99 = por %p97, %p98
      %p101 = scmp.ne.s32.totalorder %s84, %s100
      %p102 = scmp.eq.s32.totalorder %s24, 0
      %p103 = por %p101, %p102
      %s104 = ssub.s32 %s18, %s25
      %p105 = scmp.eq.s32.totalorder %s104, 0
      %s107 = sadd.s32 %s106, 1
      %s108 = scalar_select %p105, %s106, %s107
      %p111 = pneg %p105
      %p112 = scmp.eq.s32.totalorder %s18, 1
      %p113 = por %p111, %p112
      %p114 = scmp.ne.s32.totalorder %s106, %s109
      %p115 = scmp.eq.s32.totalorder %s18, 0
      %p116 = por %p114, %p115
      %p117 = scmp.ne.s32.totalorder %s106, %s109
      %p118 = scmp.eq.s32.totalorder %s23, 1
      %p119 = por %p117, %p118
      %p120 = scmp.ne.s32.totalorder %s109, %s110
      %p121 = scmp.eq.s32.totalorder %s23, 0
      %p122 = por %p120, %p121
      %p123 = scmp.ne.s32.totalorder %s109, %s110
      %p124 = scmp.eq.s32.totalorder %s24, 1
      %p125 = por %p123, %p124
      %p127 = scmp.ne.s32.totalorder %s110, %s126
      %p128 = scmp.eq.s32.totalorder %s24, 0
      %p129 = por %p127, %p128
      %s131 = sadd.s32 %s130, 1
      %p134 = scmp.eq.s32.totalorder %s18, 1
      %p135 = scmp.ne.s32.totalorder %s130, %s132
      %p136 = scmp.eq.s32.totalorder %s18, 0
      %p137 = por %p135, %p136
      %p138 = scmp.ne.s32.totalorder %s130, %s132
      %p139 = scmp.eq.s32.totalorder %s23, 1
      %p140 = por %p138, %p139
      %p141 = scmp.ne.s32.totalorder %s132, %s133
      %p142 = scmp.eq.s32.totalorder %s23, 0
      %p143 = por %p141, %p142
      %p144 = scmp.ne.s32.totalorder %s132, %s133
      %p145 = scmp.eq.s32.totalorder %s24, 1
      %p146 = por %p144, %p145
      %p148 = scmp.ne.s32.totalorder %s133, %s147
      %p149 = scmp.eq.s32.totalorder %s24, 0
      %p150 = por %p148, %p149
      %s152 = sadd.s32 %s151, 1
      %p155 = scmp.eq.s32.totalorder %s18, 1
      %p156 = scmp.ne.s32.totalorder %s151, %s153
      %p157 = scmp.eq.s32.totalorder %s18, 0
      %p158 = por %p156, %p157
      %p159 = scmp.ne.s32.totalorder %s151, %s153
      %p160 = scmp.eq.s32.totalorder %s23, 1
      %p161 = por %p159, %p160
      %p162 = scmp.ne.s32.totalorder %s153, %s154
      %p163 = scmp.eq.s32.totalorder %s23, 0
      %p164 = por %p162, %p163
      %p165 = scmp.ne.s32.totalorder %s153, %s154
      %p166 = scmp.eq.s32.totalorder %s24, 1
      %p167 = por %p165, %p166
      %p169 = scmp.ne.s32.totalorder %s154, %s168
      %p170 = scmp.eq.s32.totalorder %s24, 0
      %p171 = por %p169, %p170
      %s173 = sadd.s32 %s172, 1
      %p176 = scmp.eq.s32.totalorder %s18, 1
      %p177 = scmp.ne.s32.totalorder %s172, %s174
      %p178 = scmp.eq.s32.totalorder %s18, 0
      %p179 = por %p177, %p178
      %p180 = scmp.ne.s32.totalorder %s172, %s174
      %p181 = scmp.eq.s32.totalorder %s23, 1
      %p182 = por %p180, %p181
      %p183 = scmp.ne.s32.totalorder %s174, %s175
      %p184 = scmp.eq.s32.totalorder %s23, 0
      %p185 = por %p183, %p184
      %p186 = scmp.ne.s32.totalorder %s174, %s175
      %p187 = scmp.eq.s32.totalorder %s24, 1
      %p188 = por %p186, %p187
      %p190 = scmp.ne.s32.totalorder %s175, %s189
      %p191 = scmp.eq.s32.totalorder %s24, 0
      %p192 = por %p190, %p191
      %s194 = sadd.s32 %s193, 1
      %p197 = scmp.eq.s32.totalorder %s18, 1
      %p198 = scmp.ne.s32.totalorder %s193, %s195
      %p199 = scmp.eq.s32.totalorder %s18, 0
      %p200 = por %p198, %p199
      %p201 = scmp.ne.s32.totalorder %s193, %s195
      %p202 = scmp.eq.s32.totalorder %s23, 1
      %p203 = por %p201, %p202
      %p204 = scmp.ne.s32.totalorder %s195, %s196
      %p205 = scmp.eq.s32.totalorder %s23, 0
      %p206 = por %p204, %p205
      %p207 = scmp.ne.s32.totalorder %s195, %s196
      %p208 = scmp.eq.s32.totalorder %s24, 1
      %p209 = por %p207, %p208
      %p211 = scmp.ne.s32.totalorder %s196, %s210
      %p212 = scmp.eq.s32.totalorder %s24, 0
      %p213 = por %p211, %p212
      %s214 = ssub.s32 %s18, %s25
      %p215 = scmp.eq.s32.totalorder %s214, 0
      %s217 = sadd.s32 %s216, 1
      %s218 = scalar_select %p215, %s216, %s217
      %p221 = pneg %p215
      %p222 = scmp.eq.s32.totalorder %s18, 1
      %p223 = por %p221, %p222
      %p224 = scmp.ne.s32.totalorder %s216, %s219
      %p225 = scmp.eq.s32.totalorder %s18, 0
      %p226 = por %p224, %p225
      %p227 = scmp.ne.s32.totalorder %s216, %s219
      %p228 = scmp.eq.s32.totalorder %s23, 1
      %p229 = por %p227, %p228
      %p230 = scmp.ne.s32.totalorder %s219, %s220
      %p231 = scmp.eq.s32.totalorder %s23, 0
      %p232 = por %p230, %p231
      %p233 = scmp.ne.s32.totalorder %s219, %s220
      %p234 = scmp.eq.s32.totalorder %s24, 1
      %p235 = por %p233, %p234
      %p237 = scmp.ne.s32.totalorder %s220, %s236
      %p238 = scmp.eq.s32.totalorder %s24, 0
      %p239 = por %p237, %p238
      %p240 = scmp.le.s32.totalorder 1, %s18
      %p241 = scmp.lt.s32.totalorder %s18, 3
      %p242 = pnand %p240, %p241
      %p243 = pneg %p242
      // Predicated region
      $region9: #{tpu_custom_call.1} parent=5 // pred_check
        _
      $region10: #{tpu_custom_call.1} parent=5 // pred_check_branch
        %245 = sbr.rel (%p242) target = $region12
      $region11: #{tpu_custom_call.1} parent=5 // pred_region
        %s246 = ssub.s32 %s18, 1
        // Predicated region
        $region13: #{tpu_custom_call.1} parent=11 // pred_check
          %p247 = pneg %p143
        $region14: #{tpu_custom_call.1} parent=11 // pred_check_branch
          %249 = sbr.rel (%p247) target = $region16
        $region15: #{tpu_custom_call.1} parent=11 // pred_region
          _
        $region16: #{tpu_custom_call.1} parent=11 // pred_fallthru
          _
        // Predicated region
        $region17: #{tpu_custom_call.1} parent=11 // pred_check
          %p250 = pneg %p164
        $region18: #{tpu_custom_call.1} parent=11 // pred_check_branch
          %252 = sbr.rel (%p250) target = $region20
        $region19: #{tpu_custom_call.1} parent=11 // pred_region
          %s254 = ssub.s32 9216, 9216
          %255 = vsyncadd [#allocation6], %s254
          %s256 = sshll.u32 [#allocation5], 4
          %s257 = int_to_ptr.vmem [resolvable:$true] %s256
          %262 = dma.hbm_to_vmem [thread:$0]  %s5, 9216, %s257, [#allocation6], 64, 64, 4
        $region20: #{tpu_custom_call.1} parent=11 // pred_fallthru
          _
        // Predicated region
        $region21: #{tpu_custom_call.1} parent=11 // pred_check
          %p263 = pneg %p185
        $region22: #{tpu_custom_call.1} parent=11 // pred_check_branch
          %265 = sbr.rel (%p263) target = $region24
        $region23: #{tpu_custom_call.1} parent=11 // pred_region
          _
        $region24: #{tpu_custom_call.1} parent=11 // pred_fallthru
          _
        // Predicated region
        $region25: #{tpu_custom_call.1} parent=11 // pred_check
          %p266 = pneg %p206
        $region26: #{tpu_custom_call.1} parent=11 // pred_check_branch
          %268 = sbr.rel (%p266) target = $region28
        $region27: #{tpu_custom_call.1} parent=11 // pred_region
          _
        $region28: #{tpu_custom_call.1} parent=11 // pred_fallthru
          _
      $region12: #{tpu_custom_call.1} parent=5 // pred_fallthru
        _
      %p269 = scmp.lt.s32.totalorder %s18, 2
      // Predicated region
      $region29: #{tpu_custom_call.1} parent=5 // pred_check
        %p270 = pneg %p269
      $region30: #{tpu_custom_call.1} parent=5 // pred_check_branch
        %272 = sbr.rel (%p270) target = $region32
      $region31: #{tpu_custom_call.1} parent=5 // pred_region
        // Predicated region
        $region33: #{tpu_custom_call.1} parent=31 // pred_check
          %p273 = pneg %p38
        $region34: #{tpu_custom_call.1} parent=31 // pred_check_branch
          %275 = sbr.rel (%p273) target = $region36
        $region35: #{tpu_custom_call.1} parent=31 // pred_region
          %p276 = scmp.lt.s32.totalorder %s18, 1
          %s277 = scalar_select %p276, %s18, 1
          %s278 = smul.addr %s277, 18
          %s279 = smul.addr %s278, 4
          %s280 = scalar_lea.vmem %s0, %s279
        $region36: #{tpu_custom_call.1} parent=31 // pred_fallthru
          _
        // Predicated region
        $region37: #{tpu_custom_call.1} parent=31 // pred_check
          %p281 = pneg %p64
        $region38: #{tpu_custom_call.1} parent=31 // pred_check_branch
          %283 = sbr.rel (%p281) target = $region40
        $region39: #{tpu_custom_call.1} parent=31 // pred_region
          %p284 = scmp.lt.s32.totalorder %s18, 1
          %s285 = scalar_select %p284, %s18, 1
          %s286 = smul.addr %s285, 18
          %s287 = smul.addr %s286, 4
          %s288 = scalar_lea.vmem %s1, %s287
        $region40: #{tpu_custom_call.1} parent=31 // pred_fallthru
          _
        // Predicated region
        $region41: #{tpu_custom_call.1} parent=31 // pred_check
          %p289 = pneg %p90
        $region42: #{tpu_custom_call.1} parent=31 // pred_check_branch
          %291 = sbr.rel (%p289) target = $region44
        $region43: #{tpu_custom_call.1} parent=31 // pred_region
          %p292 = scmp.lt.s32.totalorder %s18, 1
          %s293 = scalar_select %p292, %s18, 1
          %s294 = smul.addr %s293, 18
          %s295 = smul.addr %s294, 4
          %s296 = scalar_lea.vmem %s2, %s295
        $region44: #{tpu_custom_call.1} parent=31 // pred_fallthru
          _
        // Predicated region
        $region45: #{tpu_custom_call.1} parent=31 // pred_check
          %p297 = pneg %p116
        $region46: #{tpu_custom_call.1} parent=31 // pred_check_branch
          %299 = sbr.rel (%p297) target = $region48
        $region47: #{tpu_custom_call.1} parent=31 // pred_region
          %p300 = scmp.lt.s32.totalorder %s18, 1
          %s301 = scalar_select %p300, %s18, 1
          %s302 = smul.addr %s301, 18
          %s303 = smul.addr %s302, 4
          %s304 = scalar_lea.vmem %s3, %s303
        $region48: #{tpu_custom_call.1} parent=31 // pred_fallthru
          _
      $region32: #{tpu_custom_call.1} parent=5 // pred_fallthru
        _
      %p305 = scmp.le.s32.totalorder 1, %s18
      %p306 = scmp.lt.s32.totalorder %s18, 3
      %p307 = pnand %p305, %p306
      %p308 = pneg %p307
      // Predicated region
      $region49: #{tpu_custom_call.1} parent=5 // pred_check
        _
      $region50: #{tpu_custom_call.1} parent=5 // pred_check_branch
        %310 = sbr.rel (%p307) target = $region52
      $region51: #{tpu_custom_call.1} parent=5 // pred_region
        %s311 = ssub.s32 %s18, 1
        // Predicated region
        $region53: #{tpu_custom_call.1} parent=51 // pred_check
          %p312 = pneg %p164
        $region54: #{tpu_custom_call.1} parent=51 // pred_check_branch
          %314 = sbr.rel (%p312) target = $region56
        $region55: #{tpu_custom_call.1} parent=51 // pred_region
          %315 = dma.done [#allocation6], 9216
        $region56: #{tpu_custom_call.1} parent=51 // pred_fallthru
          _
        %p316 = scmp.lt.s32.totalorder %s23, 1
        %s317 = scalar_select %p316, %s23, 1
        %s318 = smul.addr %s317, 18
        %s319 = smul.addr %s318, 4
        %s320 = scalar_lea.vmem %s0, %s319
        %p321 = pneg %p44
        %p322 = pneg %p41
        %p323 = scmp.lt.s32.totalorder %s23, 1
        %s324 = scalar_select %p323, %s23, 1
        %s325 = smul.addr %s324, 18
        %s326 = smul.addr %s325, 4
        %s327 = scalar_lea.vmem %s1, %s326
        %p328 = pneg %p70
        %p329 = pneg %p67
        %p330 = scmp.lt.s32.totalorder %s23, 1
        %s331 = scalar_select %p330, %s23, 1
        %s332 = smul.addr %s331, 18
        %s333 = smul.addr %s332, 4
        %s334 = scalar_lea.vmem %s2, %s333
        %p335 = pneg %p96
        %p336 = pneg %p93
        %p337 = scmp.lt.s32.totalorder %s23, 1
        %s338 = scalar_select %p337, %s23, 1
        %s339 = smul.addr %s338, 18
        %s340 = smul.addr %s339, 4
        %s341 = scalar_lea.vmem %s3, %s340
        %p342 = pneg %p122
        %p343 = pneg %p119
        %p344 = pneg %p143
        %p345 = pneg %p140
        %p346 = pneg %p164
        %p347 = pneg %p161
        %p348 = pneg %p185
        %p349 = pneg %p182
        %p350 = pneg %p206
        %p351 = pneg %p203
        %p352 = pneg %p232
        %p353 = pneg %p229
        %s354 = sand.u32 %s219, 1
        %s355 = scalar_lea.sflag [#allocation7], %s354
        %s356 = sand.u32 %s219, 1
        %s357 = smul.addr %s356, 64
        %s358 = scalar_lea.vmem [#allocation8], %s357
        %p359 = scmp.lt.s32.totalorder %s23, 1
        %s360 = scalar_select %p359, %s23, 1
        %s361 = smul.addr %s360, 18
        %s362 = smul.addr %s361, 4
        %s363 = scalar_lea.vmem %s0, %s362
        %p364 = scmp.lt.s32.totalorder %s23, 1
        %s365 = scalar_select %p364, %s23, 1
        %s366 = smul.addr %s365, 18
        %s367 = smul.addr %s366, 4
        %s368 = scalar_lea.vmem %s1, %s367
        %p369 = scmp.lt.s32.totalorder %s23, 1
        %s370 = scalar_select %p369, %s23, 1
        %s371 = smul.addr %s370, 18
        %s372 = smul.addr %s371, 4
        %s373 = scalar_lea.vmem %s2, %s372
        %p374 = scmp.lt.s32.totalorder %s23, 1
        %s375 = scalar_select %p374, %s23, 1
        %s376 = smul.addr %s375, 18
        %s377 = smul.addr %s376, 4
        %s378 = scalar_lea.vmem %s3, %s377
        %v380 = vld [vmem:[%s363] sm:$0xf]
        %v381 = vld [vmem:[%s363 + $0x4] sm:$0x1]
        %v382 = vld [vmem:[%s363 + $0x8] sm:$0xf]
        %v383 = vld [vmem:[%s363 + $0xc] sm:$0x1]
        %v384 = vld [vmem:[%s363 + $0x10] sm:$0xf]
        %v385 = vld [vmem:[%s363 + $0x14] sm:$0x1]
        %v386 = vld [vmem:[%s363 + $0x18] sm:$0xf]
        %v387 = vld [vmem:[%s363 + $0x1c] sm:$0x1]
        %v388 = vld [vmem:[%s363 + $0x20] sm:$0xf]
        %v389 = vld [vmem:[%s363 + $0x24] sm:$0x1]
        %v390 = vld [vmem:[%s363 + $0x28] sm:$0xf]
        %v391 = vld [vmem:[%s363 + $0x2c] sm:$0x1]
        %v392 = vld [vmem:[%s363 + $0x30] sm:$0xf]
        %v393 = vld [vmem:[%s363 + $0x34] sm:$0x1]
        %v394 = vld [vmem:[%s363 + $0x38] sm:$0xf]
        %v395 = vld [vmem:[%s363 + $0x3c] sm:$0x1]
        %v396 = vld [vmem:[%s363 + $0x40] sm:$0xf]
        %v397 = vld [vmem:[%s363 + $0x44] sm:$0x1]
        %v398 = vunpack.c.l.bf16 %v380
        %v399 = vunpack.c.l.bf16 %v381
        %v400 = vunpack.c.l.bf16 %v382
        %v401 = vunpack.c.l.bf16 %v383
        %v402 = vunpack.c.l.bf16 %v384
        %v403 = vunpack.c.l.bf16 %v385
        %v404 = vunpack.c.l.bf16 %v386
        %v405 = vunpack.c.l.bf16 %v387
        %v406 = vunpack.c.l.bf16 %v388
        %v407 = vunpack.c.l.bf16 %v389
        %v408 = vunpack.c.l.bf16 %v390
        %v409 = vunpack.c.l.bf16 %v391
        %v410 = vunpack.c.l.bf16 %v392
        %v411 = vunpack.c.l.bf16 %v393
        %v412 = vunpack.c.l.bf16 %v394
        %v413 = vunpack.c.l.bf16 %v395
        %v414 = vunpack.c.l.bf16 %v396
        %v415 = vunpack.c.l.bf16 %v397
        %v416 = vld [vmem:[%s368] sm:$0xf]
        %v417 = vld [vmem:[%s368 + $0x8] sm:$0xf]
        %v418 = vld [vmem:[%s368 + $0x10] sm:$0xf]
        %v419 = vld [vmem:[%s368 + $0x18] sm:$0xf]
        %v420 = vld [vmem:[%s368 + $0x20] sm:$0xf]
        %v421 = vld [vmem:[%s368 + $0x28] sm:$0xf]
        %v422 = vld [vmem:[%s368 + $0x30] sm:$0xf]
        %v423 = vld [vmem:[%s368 + $0x38] sm:$0xf]
        %v424 = vld [vmem:[%s368 + $0x40] sm:$0xf]
        %v425 = vunpack.c.l.bf16 %v416
        %v426 = vunpack.c.l.bf16 %v417
        %v427 = vunpack.c.l.bf16 %v418
        %v428 = vunpack.c.l.bf16 %v419
        %v429 = vunpack.c.l.bf16 %v420
        %v430 = vunpack.c.l.bf16 %v421
        %v431 = vunpack.c.l.bf16 %v422
        %v432 = vunpack.c.l.bf16 %v423
        %v433 = vunpack.c.l.bf16 %v424
        %v434 = vld [vmem:[%s373] sm:$0xf]
        %v435 = vld [vmem:[%s373 + $0x4] sm:$0x1]
        %v436 = vld [vmem:[%s373 + $0x8] sm:$0xf]
        %v437 = vld [vmem:[%s373 + $0xc] sm:$0x1]
        %v438 = vld [vmem:[%s373 + $0x10] sm:$0xf]
        %v439 = vld [vmem:[%s373 + $0x14] sm:$0x1]
        %v440 = vld [vmem:[%s373 + $0x18] sm:$0xf]
        %v441 = vld [vmem:[%s373 + $0x1c] sm:$0x1]
        %v442 = vld [vmem:[%s373 + $0x20] sm:$0xf]
        %v443 = vld [vmem:[%s373 + $0x24] sm:$0x1]
        %v444 = vld [vmem:[%s373 + $0x28] sm:$0xf]
        %v445 = vld [vmem:[%s373 + $0x2c] sm:$0x1]
        %v446 = vld [vmem:[%s373 + $0x30] sm:$0xf]
        %v447 = vld [vmem:[%s373 + $0x34] sm:$0x1]
        %v448 = vld [vmem:[%s373 + $0x38] sm:$0xf]
        %v449 = vld [vmem:[%s373 + $0x3c] sm:$0x1]
        %v450 = vunpack.c.l.bf16 %v434
        %v451 = vunpack.c.l.bf16 %v435
        %v452 = vunpack.c.l.bf16 %v436
        %v453 = vunpack.c.l.bf16 %v437
        %v454 = vunpack.c.l.bf16 %v438
        %v455 = vunpack.c.l.bf16 %v439
        %v456 = vunpack.c.l.bf16 %v440
        %v457 = vunpack.c.l.bf16 %v441
        %v458 = vunpack.c.l.bf16 %v442
        %v459 = vunpack.c.l.bf16 %v443
        %v460 = vunpack.c.l.bf16 %v444
        %v461 = vunpack.c.l.bf16 %v445
        %v462 = vunpack.c.l.bf16 %v446
        %v463 = vunpack.c.l.bf16 %v447
        %v464 = vunpack.c.l.bf16 %v448
        %v465 = vunpack.c.l.bf16 %v449
        %v466 = vld [vmem:[%s378] sm:$0xf]
        %v467 = vld [vmem:[%s378 + $0x8] sm:$0xf]
        %v468 = vld [vmem:[%s378 + $0x10] sm:$0xf]
        %v469 = vld [vmem:[%s378 + $0x18] sm:$0xf]
        %v470 = vld [vmem:[%s378 + $0x20] sm:$0xf]
        %v471 = vld [vmem:[%s378 + $0x28] sm:$0xf]
        %v472 = vld [vmem:[%s378 + $0x30] sm:$0xf]
        %v473 = vld [vmem:[%s378 + $0x38] sm:$0xf]
        %v474 = vunpack.c.l.bf16 %v466
        %v475 = vunpack.c.l.bf16 %v467
        %v476 = vunpack.c.l.bf16 %v468
        %v477 = vunpack.c.l.bf16 %v469
        %v478 = vunpack.c.l.bf16 %v470
        %v479 = vunpack.c.l.bf16 %v471
        %v480 = vunpack.c.l.bf16 %v472
        %v481 = vunpack.c.l.bf16 %v473
        %v482 = vpack.c.bf16 %v400, %v398
        %v483 = vpack.c.bf16 %v404, %v402
        %v484 = vpack.c.bf16 %v408, %v406
        %v485 = vpack.c.bf16 %v412, %v410
        %v486 = vld [vmem:[%s4] sm:$0xf]
        %v487 = vld [vmem:[%s4 + $0x4] sm:$0xf]
        %v488 = vld [vmem:[%s4 + $0x8] sm:$0xf]
        %v489 = vld [vmem:[%s4 + $0xc] sm:$0xf]
        %v490 = vld [vmem:[%s4 + $0x10] sm:$0xf]
        %v491 = vld [vmem:[%s4 + $0x14] sm:$0xf]
        %v492 = vld [vmem:[%s4 + $0x18] sm:$0xf]
        %v493 = vld [vmem:[%s4 + $0x1c] sm:$0xf]
        %v494 = vld [vmem:[%s4 + $0x20] sm:$0xf]
        %v495 = vld [vmem:[%s4 + $0x24] sm:$0xf]
        %v496 = vld [vmem:[%s4 + $0x28] sm:$0xf]
        %v497 = vld [vmem:[%s4 + $0x2c] sm:$0xf]
        %v498 = vld [vmem:[%s4 + $0x30] sm:$0xf]
        %v499 = vld [vmem:[%s4 + $0x34] sm:$0xf]
        %v500 = vld [vmem:[%s4 + $0x38] sm:$0xf]
        %v501 = vld [vmem:[%s4 + $0x3c] sm:$0xf]
        %v518 = vunpack.c.l.b16 %v486
        %v519 = vunpack.c.l.b16 %v487
        %v520 = vunpack.c.l.b16 %v488
        %v521 = vunpack.c.l.b16 %v489
        %v522 = vunpack.c.l.b16 %v490
        %v523 = vunpack.c.l.b16 %v491
        %v524 = vunpack.c.l.b16 %v492
        %v525 = vunpack.c.l.b16 %v493
        %v526 = vunpack.c.l.b16 %v494
        %v527 = vunpack.c.l.b16 %v495
        %v528 = vunpack.c.l.b16 %v496
        %v529 = vunpack.c.l.b16 %v497
        %v530 = vunpack.c.l.b16 %v498
        %v531 = vunpack.c.l.b16 %v499
        %v532 = vunpack.c.l.b16 %v500
        %v533 = vunpack.c.l.b16 %v501
        %v534 = vpack.c.b16 %v519, %v518
        %v535 = vpack.c.b16 %v521, %v520
        %v536 = vpack.c.b16 %v523, %v522
        %v537 = vpack.c.b16 %v525, %v524
        %v538 = vpack.c.b16 %v527, %v526
        %v539 = vpack.c.b16 %v529, %v528
        %v540 = vpack.c.b16 %v531, %v530
        %v541 = vpack.c.b16 %v533, %v532
        %550 = vmatprep.subr.bf16.mxu0 0
        %551 = vmatpush1.bf16.msra.mxu0 %v541
        %552 = vmatprep.subr.bf16.mxu0 0
        %553 = vmatpush1.bf16.msra.mxu0 %v540
        %554 = vmatprep.subr.bf16.mxu0 0
        %555 = vmatpush1.bf16.msra.mxu0 %v539
        %556 = vmatprep.subr.bf16.mxu0 0
        %557 = vmatpush1.bf16.msra.mxu0 %v538
        %558 = vmatprep.subr.bf16.mxu0 0
        %559 = vmatpush1.bf16.msra.mxu0 %v537
        %560 = vmatprep.subr.bf16.mxu0 0
        %561 = vmatpush1.bf16.msra.mxu0 %v536
        %562 = vmatprep.subr.bf16.mxu0 0
        %563 = vmatpush1.bf16.msra.mxu0 %v535
        %564 = vmatprep.subr.bf16.mxu0 0
        %565 = vmatpush1.bf16.msra.mxu0 %v534
        %566 = vmatprep.subr.bf16.mxu0 0
        %567 = vmatpush2.bf16.msra.mxu0 0
        %568 = vmatprep.subr.bf16.mxu0 0
        %569 = vmatpush2.bf16.msra.mxu0 0
        %570 = vmatprep.subr.bf16.mxu0 0
        %571 = vmatpush2.bf16.msra.mxu0 0
        %572 = vmatprep.subr.bf16.mxu0 0
        %573 = vmatpush2.bf16.msra.mxu0 0
        %574 = vmatprep.subr.bf16.mxu0 0
        %575 = vmatpush2.bf16.msra.mxu0 0
        %576 = vmatprep.subr.bf16.mxu0 0
        %577 = vmatpush2.bf16.msra.mxu0 0
        %578 = vmatprep.subr.bf16.mxu0 0
        %579 = vmatpush2.bf16.msra.mxu0 0
        %580 = vmatprep.subr.bf16.mxu0 0
        %581 = vmatpush2.bf16.msra.mxu0 0
        %582 = vmatprep.mubr.bf16.mxu0 0
        %583 = vmatmul.mubr.bf16.gmra.mxu0 %v482
        %v584 = vpop.f32.mrf.mxu0
        %v585 = vadd.f32 0.0, %v584
        %v586 = vpop.f32.mrf.mxu0
        %v587 = vpop.f32.mrf.mxu0
        %v588 = vadd.f32 0.0, %v587
        %v589 = vpop.f32.mrf.mxu0
        %590 = vmatprep.mubr.bf16.mxu0 0
        %591 = vmatmul.mubr.bf16.gmra.mxu0 %v483
        %v592 = vpop.f32.mrf.mxu0
        %v593 = vadd.f32 0.0, %v592
        %v594 = vpop.f32.mrf.mxu0
        %v595 = vpop.f32.mrf.mxu0
        %v596 = vadd.f32 0.0, %v595
        %v597 = vpop.f32.mrf.mxu0
        %598 = vmatprep.mubr.bf16.mxu0 0
        %599 = vmatmul.mubr.bf16.gmra.mxu0 %v484
        %v600 = vpop.f32.mrf.mxu0
        %v601 = vadd.f32 0.0, %v600
        %v602 = vpop.f32.mrf.mxu0
        %v603 = vpop.f32.mrf.mxu0
        %v604 = vadd.f32 0.0, %v603
        %v605 = vpop.f32.mrf.mxu0
        %606 = vmatprep.mubr.bf16.mxu0 0
        %607 = vmatmul.mubr.bf16.gmra.mxu0 %v485
        %v608 = vpop.f32.mrf.mxu0
        %v609 = vadd.f32 0.0, %v608
        %v610 = vpop.f32.mrf.mxu0
        %v611 = vpop.f32.mrf.mxu0
        %v612 = vadd.f32 0.0, %v611
        %v613 = vpop.f32.mrf.mxu0
        %614 = vdwg.mxu0
        %615 = vst [vmem:[#allocation3] sm:$0xff] %v585
        %616 = vst [vmem:[#allocation3 + $0x8] sm:$0xff] %v588
        %617 = vst [vmem:[#allocation3 + $0x10] sm:$0xff] %v593
        %618 = vst [vmem:[#allocation3 + $0x18] sm:$0xff] %v596
        %619 = vst [vmem:[#allocation3 + $0x20] sm:$0xff] %v601
        %620 = vst [vmem:[#allocation3 + $0x28] sm:$0xff] %v604
        %621 = vst [vmem:[#allocation3 + $0x30] sm:$0xff] %v609
        %622 = vst [vmem:[#allocation3 + $0x38] sm:$0xff] %v612
        %v623 = vpack.c.bf16 %v426, %v425
        %v624 = vpack.c.bf16 %v428, %v427
        %v625 = vpack.c.bf16 %v430, %v429
        %v626 = vpack.c.bf16 %v432, %v431
        %s627 = scalar_lea.vmem %s4, 64
        %v628 = vld [vmem:[%s627] sm:$0xf]
        %v629 = vld [vmem:[%s627 + $0x4] sm:$0xf]
        %v630 = vld [vmem:[%s627 + $0x8] sm:$0xf]
        %v631 = vld [vmem:[%s627 + $0xc] sm:$0xf]
        %v632 = vld [vmem:[%s627 + $0x10] sm:$0xf]
        %v633 = vld [vmem:[%s627 + $0x14] sm:$0xf]
        %v634 = vld [vmem:[%s627 + $0x18] sm:$0xf]
        %v635 = vld [vmem:[%s627 + $0x1c] sm:$0xf]
        %v636 = vld [vmem:[%s627 + $0x20] sm:$0xf]
        %v637 = vld [vmem:[%s627 + $0x24] sm:$0xf]
        %v638 = vld [vmem:[%s627 + $0x28] sm:$0xf]
        %v639 = vld [vmem:[%s627 + $0x2c] sm:$0xf]
        %v640 = vld [vmem:[%s627 + $0x30] sm:$0xf]
        %v641 = vld [vmem:[%s627 + $0x34] sm:$0xf]
        %v642 = vld [vmem:[%s627 + $0x38] sm:$0xf]
        %v643 = vld [vmem:[%s627 + $0x3c] sm:$0xf]
        %v660 = vunpack.c.l.b16 %v628
        %v661 = vunpack.c.l.b16 %v629
        %v662 = vunpack.c.l.b16 %v630
        %v663 = vunpack.c.l.b16 %v631
        %v664 = vunpack.c.l.b16 %v632
        %v665 = vunpack.c.l.b16 %v633
        %v666 = vunpack.c.l.b16 %v634
        %v667 = vunpack.c.l.b16 %v635
        %v668 = vunpack.c.l.b16 %v636
        %v669 = vunpack.c.l.b16 %v637
        %v670 = vunpack.c.l.b16 %v638
        %v671 = vunpack.c.l.b16 %v639
        %v672 = vunpack.c.l.b16 %v640
        %v673 = vunpack.c.l.b16 %v641
        %v674 = vunpack.c.l.b16 %v642
        %v675 = vunpack.c.l.b16 %v643
        %v676 = vpack.c.b16 %v661, %v660
        %v677 = vpack.c.b16 %v663, %v662
        %v678 = vpack.c.b16 %v665, %v664
        %v679 = vpack.c.b16 %v667, %v666
        %v680 = vpack.c.b16 %v669, %v668
        %v681 = vpack.c.b16 %v671, %v670
        %v682 = vpack.c.b16 %v673, %v672
        %v683 = vpack.c.b16 %v675, %v674
        %692 = vmatprep.subr.bf16.mxu0 0
        %693 = vmatpush1.bf16.msra.mxu0 %v683
        %694 = vmatprep.subr.bf16.mxu0 0
        %695 = vmatpush1.bf16.msra.mxu0 %v682
        %696 = vmatprep.subr.bf16.mxu0 0
        %697 = vmatpush1.bf16.msra.mxu0 %v681
        %698 = vmatprep.subr.bf16.mxu0 0
        %699 = vmatpush1.bf16.msra.mxu0 %v680
        %700 = vmatprep.subr.bf16.mxu0 0
        %701 = vmatpush1.bf16.msra.mxu0 %v679
        %702 = vmatprep.subr.bf16.mxu0 0
        %703 = vmatpush1.bf16.msra.mxu0 %v678
        %704 = vmatprep.subr.bf16.mxu0 0
        %705 = vmatpush1.bf16.msra.mxu0 %v677
        %706 = vmatprep.subr.bf16.mxu0 0
        %707 = vmatpush1.bf16.msra.mxu0 %v676
        %708 = vmatprep.subr.bf16.mxu0 0
        %709 = vmatpush2.bf16.msra.mxu0 0
        %710 = vmatprep.subr.bf16.mxu0 0
        %711 = vmatpush2.bf16.msra.mxu0 0
        %712 = vmatprep.subr.bf16.mxu0 0
        %713 = vmatpush2.bf16.msra.mxu0 0
        %714 = vmatprep.subr.bf16.mxu0 0
        %715 = vmatpush2.bf16.msra.mxu0 0
        %716 = vmatprep.subr.bf16.mxu0 0
        %717 = vmatpush2.bf16.msra.mxu0 0
        %718 = vmatprep.subr.bf16.mxu0 0
        %719 = vmatpush2.bf16.msra.mxu0 0
        %720 = vmatprep.subr.bf16.mxu0 0
        %721 = vmatpush2.bf16.msra.mxu0 0
        %722 = vmatprep.subr.bf16.mxu0 0
        %723 = vmatpush2.bf16.msra.mxu0 0
        %724 = vmatprep.mubr.bf16.mxu0 0
        %725 = vmatmul.mubr.bf16.gmra.mxu0 %v623
        %v726 = vpop.f32.mrf.mxu0
        %v727 = vadd.f32 0.0, %v726
        %v728 = vpop.f32.mrf.mxu0
        %v729 = vpop.f32.mrf.mxu0
        %v730 = vadd.f32 0.0, %v729
        %v731 = vpop.f32.mrf.mxu0
        %732 = vmatprep.mubr.bf16.mxu0 0
        %733 = vmatmul.mubr.bf16.gmra.mxu0 %v624
        %v734 = vpop.f32.mrf.mxu0
        %v735 = vadd.f32 0.0, %v734
        %v736 = vpop.f32.mrf.mxu0
        %v737 = vpop.f32.mrf.mxu0
        %v738 = vadd.f32 0.0, %v737
        %v739 = vpop.f32.mrf.mxu0
        %740 = vmatprep.mubr.bf16.mxu0 0
        %741 = vmatmul.mubr.bf16.gmra.mxu0 %v625
        %v742 = vpop.f32.mrf.mxu0
        %v743 = vadd.f32 0.0, %v742
        %v744 = vpop.f32.mrf.mxu0
        %v745 = vpop.f32.mrf.mxu0
        %v746 = vadd.f32 0.0, %v745
        %v747 = vpop.f32.mrf.mxu0
        %748 = vmatprep.mubr.bf16.mxu0 0
        %749 = vmatmul.mubr.bf16.gmra.mxu0 %v626
        %v750 = vpop.f32.mrf.mxu0
        %v751 = vadd.f32 0.0, %v750
        %v752 = vpop.f32.mrf.mxu0
        %v753 = vpop.f32.mrf.mxu0
        %v754 = vadd.f32 0.0, %v753
        %v755 = vpop.f32.mrf.mxu0
        %756 = vdwg.mxu0
        %v757 = vld [vmem:[#allocation3] sm:$0xff]
        %v758 = vld [vmem:[#allocation3 + $0x8] sm:$0xff]
        %v759 = vld [vmem:[#allocation3 + $0x10] sm:$0xff]
        %v760 = vld [vmem:[#allocation3 + $0x18] sm:$0xff]
        %v761 = vld [vmem:[#allocation3 + $0x20] sm:$0xff]
        %v762 = vld [vmem:[#allocation3 + $0x28] sm:$0xff]
        %v763 = vld [vmem:[#allocation3 + $0x30] sm:$0xff]
        %v764 = vld [vmem:[#allocation3 + $0x38] sm:$0xff]
        %v765 = vadd.f32 %v757, %v727
        %v766 = vadd.f32 %v758, %v730
        %v767 = vadd.f32 %v759, %v735
        %v768 = vadd.f32 %v760, %v738
        %v769 = vadd.f32 %v761, %v743
        %v770 = vadd.f32 %v762, %v746
        %v771 = vadd.f32 %v763, %v751
        %v772 = vadd.f32 %v764, %v754
        %773 = vst [vmem:[#allocation3] sm:$0xff] %v765
        %774 = vst [vmem:[#allocation3 + $0x8] sm:$0xff] %v766
        %775 = vst [vmem:[#allocation3 + $0x10] sm:$0xff] %v767
        %776 = vst [vmem:[#allocation3 + $0x18] sm:$0xff] %v768
        %777 = vst [vmem:[#allocation3 + $0x20] sm:$0xff] %v769
        %778 = vst [vmem:[#allocation3 + $0x28] sm:$0xff] %v770
        %779 = vst [vmem:[#allocation3 + $0x30] sm:$0xff] %v771
        %780 = vst [vmem:[#allocation3 + $0x38] sm:$0xff] %v772
        %vm797 = vcmask 1046528
        %v798 = vrot.slane %v398, 1
        %v799 = vrot.slane %v399, 1
        %v800 = vsel %vm797, %v798, %v799
        %v801 = vrot.slane %v400, 1
        %v802 = vrot.slane %v401, 1
        %v803 = vsel %vm797, %v801, %v802
        %v804 = vrot.slane %v402, 1
        %v805 = vrot.slane %v403, 1
        %v806 = vsel %vm797, %v804, %v805
        %v807 = vrot.slane %v404, 1
        %v808 = vrot.slane %v405, 1
        %v809 = vsel %vm797, %v807, %v808
        %v810 = vrot.slane %v406, 1
        %v811 = vrot.slane %v407, 1
        %v812 = vsel %vm797, %v810, %v811
        %v813 = vrot.slane %v408, 1
        %v814 = vrot.slane %v409, 1
        %v815 = vsel %vm797, %v813, %v814
        %v816 = vrot.slane %v410, 1
        %v817 = vrot.slane %v411, 1
        %v818 = vsel %vm797, %v816, %v817
        %v819 = vrot.slane %v412, 1
        %v820 = vrot.slane %v413, 1
        %v821 = vsel %vm797, %v819, %v820
        %v830 = vpack.c.bf16 %v803, %v800
        %v831 = vpack.c.bf16 %v809, %v806
        %v832 = vpack.c.bf16 %v815, %v812
        %v833 = vpack.c.bf16 %v821, %v818
        %s834 = scalar_lea.vmem %s4, 128
        %v835 = vld [vmem:[%s834] sm:$0xf]
        %v836 = vld [vmem:[%s834 + $0x4] sm:$0xf]
        %v837 = vld [vmem:[%s834 + $0x8] sm:$0xf]
        %v838 = vld [vmem:[%s834 + $0xc] sm:$0xf]
        %v839 = vld [vmem:[%s834 + $0x10] sm:$0xf]
        %v840 = vld [vmem:[%s834 + $0x14] sm:$0xf]
        %v841 = vld [vmem:[%s834 + $0x18] sm:$0xf]
        %v842 = vld [vmem:[%s834 + $0x1c] sm:$0xf]
        %v843 = vld [vmem:[%s834 + $0x20] sm:$0xf]
        %v844 = vld [vmem:[%s834 + $0x24] sm:$0xf]
        %v845 = vld [vmem:[%s834 + $0x28] sm:$0xf]
        %v846 = vld [vmem:[%s834 + $0x2c] sm:$0xf]
        %v847 = vld [vmem:[%s834 + $0x30] sm:$0xf]
        %v848 = vld [vmem:[%s834 + $0x34] sm:$0xf]
        %v849 = vld [vmem:[%s834 + $0x38] sm:$0xf]
        %v850 = vld [vmem:[%s834 + $0x3c] sm:$0xf]
        %v867 = vunpack.c.l.b16 %v835
        %v868 = vunpack.c.l.b16 %v836
        %v869 = vunpack.c.l.b16 %v837
        %v870 = vunpack.c.l.b16 %v838
        %v871 = vunpack.c.l.b16 %v839
        %v872 = vunpack.c.l.b16 %v840
        %v873 = vunpack.c.l.b16 %v841
        %v874 = vunpack.c.l.b16 %v842
        %v875 = vunpack.c.l.b16 %v843
        %v876 = vunpack.c.l.b16 %v844
        %v877 = vunpack.c.l.b16 %v845
        %v878 = vunpack.c.l.b16 %v846
        %v879 = vunpack.c.l.b16 %v847
        %v880 = vunpack.c.l.b16 %v848
        %v881 = vunpack.c.l.b16 %v849
        %v882 = vunpack.c.l.b16 %v850
        %v883 = vpack.c.b16 %v868, %v867
        %v884 = vpack.c.b16 %v870, %v869
        %v885 = vpack.c.b16 %v872, %v871
        %v886 = vpack.c.b16 %v874, %v873
        %v887 = vpack.c.b16 %v876, %v875
        %v888 = vpack.c.b16 %v878, %v877
        %v889 = vpack.c.b16 %v880, %v879
        %v890 = vpack.c.b16 %v882, %v881
        %899 = vmatprep.subr.bf16.mxu0 0
        %900 = vmatpush1.bf16.msra.mxu0 %v890
        %901 = vmatprep.subr.bf16.mxu0 0
        %902 = vmatpush1.bf16.msra.mxu0 %v889
        %903 = vmatprep.subr.bf16.mxu0 0
        %904 = vmatpush1.bf16.msra.mxu0 %v888
        %905 = vmatprep.subr.bf16.mxu0 0
        %906 = vmatpush1.bf16.msra.mxu0 %v887
        %907 = vmatprep.subr.bf16.mxu0 0
        %908 = vmatpush1.bf16.msra.mxu0 %v886
        %909 = vmatprep.subr.bf16.mxu0 0
        %910 = vmatpush1.bf16.msra.mxu0 %v885
        %911 = vmatprep.subr.bf16.mxu0 0
        %912 = vmatpush1.bf16.msra.mxu0 %v884
        %913 = vmatprep.subr.bf16.mxu0 0
        %914 = vmatpush1.bf16.msra.mxu0 %v883
        %915 = vmatprep.subr.bf16.mxu0 0
        %916 = vmatpush2.bf16.msra.mxu0 0
        %917 = vmatprep.subr.bf16.mxu0 0
        %918 = vmatpush2.bf16.msra.mxu0 0
        %919 = vmatprep.subr.bf16.mxu0 0
        %920 = vmatpush2.bf16.msra.mxu0 0
        %921 = vmatprep.subr.bf16.mxu0 0
        %922 = vmatpush2.bf16.msra.mxu0 0
        %923 = vmatprep.subr.bf16.mxu0 0
        %924 = vmatpush2.bf16.msra.mxu0 0
        %925 = vmatprep.subr.bf16.mxu0 0
        %926 = vmatpush2.bf16.msra.mxu0 0
        %927 = vmatprep.subr.bf16.mxu0 0
        %928 = vmatpush2.bf16.msra.mxu0 0
        %929 = vmatprep.subr.bf16.mxu0 0
        %930 = vmatpush2.bf16.msra.mxu0 0
        %931 = vmatprep.mubr.bf16.mxu0 0
        %932 = vmatmul.mubr.bf16.gmra.mxu0 %v830
        %v933 = vpop.f32.mrf.mxu0
        %v934 = vadd.f32 0.0, %v933
        %v935 = vpop.f32.mrf.mxu0
        %v936 = vpop.f32.mrf.mxu0
        %v937 = vadd.f32 0.0, %v936
        %v938 = vpop.f32.mrf.mxu0
        %939 = vmatprep.mubr.bf16.mxu0 0
        %940 = vmatmul.mubr.bf16.gmra.mxu0 %v831
        %v941 = vpop.f32.mrf.mxu0
        %v942 = vadd.f32 0.0, %v941
        %v943 = vpop.f32.mrf.mxu0
        %v944 = vpop.f32.mrf.mxu0
        %v945 = vadd.f32 0.0, %v944
        %v946 = vpop.f32.mrf.mxu0
        %947 = vmatprep.mubr.bf16.mxu0 0
        %948 = vmatmul.mubr.bf16.gmra.mxu0 %v832
        %v949 = vpop.f32.mrf.mxu0
        %v950 = vadd.f32 0.0, %v949
        %v951 = vpop.f32.mrf.mxu0
        %v952 = vpop.f32.mrf.mxu0
        %v953 = vadd.f32 0.0, %v952
        %v954 = vpop.f32.mrf.mxu0
        %955 = vmatprep.mubr.bf16.mxu0 0
        %956 = vmatmul.mubr.bf16.gmra.mxu0 %v833
        %v957 = vpop.f32.mrf.mxu0
        %v958 = vadd.f32 0.0, %v957
        %v959 = vpop.f32.mrf.mxu0
        %v960 = vpop.f32.mrf.mxu0
        %v961 = vadd.f32 0.0, %v960
        %v962 = vpop.f32.mrf.mxu0
        %963 = vdwg.mxu0
        %v964 = vld [vmem:[#allocation3] sm:$0xff]
        %v965 = vld [vmem:[#allocation3 + $0x8] sm:$0xff]
        %v966 = vld [vmem:[#allocation3 + $0x10] sm:$0xff]
        %v967 = vld [vmem:[#allocation3 + $0x18] sm:$0xff]
        %v968 = vld [vmem:[#allocation3 + $0x20] sm:$0xff]
        %v969 = vld [vmem:[#allocation3 + $0x28] sm:$0xff]
        %v970 = vld [vmem:[#allocation3 + $0x30] sm:$0xff]
        %v971 = vld [vmem:[#allocation3 + $0x38] sm:$0xff]
        %v972 = vadd.f32 %v964, %v934
        %v973 = vadd.f32 %v965, %v937
        %v974 = vadd.f32 %v966, %v942
        %v975 = vadd.f32 %v967, %v945
        %v976 = vadd.f32 %v968, %v950
        %v977 = vadd.f32 %v969, %v953
        %v978 = vadd.f32 %v970, %v958
        %v979 = vadd.f32 %v971, %v961
        %980 = vst [vmem:[#allocation3] sm:$0xff] %v972
        %981 = vst [vmem:[#allocation3 + $0x8] sm:$0xff] %v973
        %982 = vst [vmem:[#allocation3 + $0x10] sm:$0xff] %v974
        %983 = vst [vmem:[#allocation3 + $0x18] sm:$0xff] %v975
        %984 = vst [vmem:[#allocation3 + $0x20] sm:$0xff] %v976
        %985 = vst [vmem:[#allocation3 + $0x28] sm:$0xff] %v977
        %986 = vst [vmem:[#allocation3 + $0x30] sm:$0xff] %v978
        %987 = vst [vmem:[#allocation3 + $0x38] sm:$0xff] %v979
        %v988 = vpack.c.bf16 %v452, %v450
        %v989 = vpack.c.bf16 %v456, %v454
        %v990 = vpack.c.bf16 %v460, %v458
        %v991 = vpack.c.bf16 %v464, %v462
        %s992 = scalar_lea.vmem %s4, 192
        %v993 = vld [vmem:[%s992] sm:$0xf]
        %v994 = vld [vmem:[%s992 + $0x4] sm:$0xf]
        %v995 = vld [vmem:[%s992 + $0x8] sm:$0xf]
        %v996 = vld [vmem:[%s992 + $0xc] sm:$0xf]
        %v997 = vld [vmem:[%s992 + $0x10] sm:$0xf]
        %v998 = vld [vmem:[%s992 + $0x14] sm:$0xf]
        %v999 = vld [vmem:[%s992 + $0x18] sm:$0xf]
        %v1000 = vld [vmem:[%s992 + $0x1c] sm:$0xf]
        %v1001 = vld [vmem:[%s992 + $0x20] sm:$0xf]
        %v1002 = vld [vmem:[%s992 + $0x24] sm:$0xf]
        %v1003 = vld [vmem:[%s992 + $0x28] sm:$0xf]
        %v1004 = vld [vmem:[%s992 + $0x2c] sm:$0xf]
        %v1005 = vld [vmem:[%s992 + $0x30] sm:$0xf]
        %v1006 = vld [vmem:[%s992 + $0x34] sm:$0xf]
        %v1007 = vld [vmem:[%s992 + $0x38] sm:$0xf]
        %v1008 = vld [vmem:[%s992 + $0x3c] sm:$0xf]
        %v1025 = vunpack.c.l.b16 %v993
        %v1026 = vunpack.c.l.b16 %v994
        %v1027 = vunpack.c.l.b16 %v995
        %v1028 = vunpack.c.l.b16 %v996
        %v1029 = vunpack.c.l.b16 %v997
        %v1030 = vunpack.c.l.b16 %v998
        %v1031 = vunpack.c.l.b16 %v999
        %v1032 = vunpack.c.l.b16 %v1000
        %v1033 = vunpack.c.l.b16 %v1001
        %v1034 = vunpack.c.l.b16 %v1002
        %v1035 = vunpack.c.l.b16 %v1003
        %v1036 = vunpack.c.l.b16 %v1004
        %v1037 = vunpack.c.l.b16 %v1005
        %v1038 = vunpack.c.l.b16 %v1006
        %v1039 = vunpack.c.l.b16 %v1007
        %v1040 = vunpack.c.l.b16 %v1008
        %v1041 = vpack.c.b16 %v1026, %v1025
        %v1042 = vpack.c.b16 %v1028, %v1027
        %v1043 = vpack.c.b16 %v1030, %v1029
        %v1044 = vpack.c.b16 %v1032, %v1031
        %v1045 = vpack.c.b16 %v1034, %v1033
        %v1046 = vpack.c.b16 %v1036, %v1035
        %v1047 = vpack.c.b16 %v1038, %v1037
        %v1048 = vpack.c.b16 %v1040, %v1039
        %1057 = vmatprep.subr.bf16.mxu0 0
        %1058 = vmatpush1.bf16.msra.mxu0 %v1048
        %1059 = vmatprep.subr.bf16.mxu0 0
        %1060 = vmatpush1.bf16.msra.mxu0 %v1047
        %1061 = vmatprep.subr.bf16.mxu0 0
        %1062 = vmatpush1.bf16.msra.mxu0 %v1046
        %1063 = vmatprep.subr.bf16.mxu0 0
        %1064 = vmatpush1.bf16.msra.mxu0 %v1045
        %1065 = vmatprep.subr.bf16.mxu0 0
        %1066 = vmatpush1.bf16.msra.mxu0 %v1044
        %1067 = vmatprep.subr.bf16.mxu0 0
        %1068 = vmatpush1.bf16.msra.mxu0 %v1043
        %1069 = vmatprep.subr.bf16.mxu0 0
        %1070 = vmatpush1.bf16.msra.mxu0 %v1042
        %1071 = vmatprep.subr.bf16.mxu0 0
        %1072 = vmatpush1.bf16.msra.mxu0 %v1041
        %1073 = vmatprep.subr.bf16.mxu0 0
        %1074 = vmatpush2.bf16.msra.mxu0 0
        %1075 = vmatprep.subr.bf16.mxu0 0
        %1076 = vmatpush2.bf16.msra.mxu0 0
        %1077 = vmatprep.subr.bf16.mxu0 0
        %1078 = vmatpush2.bf16.msra.mxu0 0
        %1079 = vmatprep.subr.bf16.mxu0 0
        %1080 = vmatpush2.bf16.msra.mxu0 0
        %1081 = vmatprep.subr.bf16.mxu0 0
        %1082 = vmatpush2.bf16.msra.mxu0 0
        %1083 = vmatprep.subr.bf16.mxu0 0
        %1084 = vmatpush2.bf16.msra.mxu0 0
        %1085 = vmatprep.subr.bf16.mxu0 0
        %1086 = vmatpush2.bf16.msra.mxu0 0
        %1087 = vmatprep.subr.bf16.mxu0 0
        %1088 = vmatpush2.bf16.msra.mxu0 0
        %1089 = vmatprep.mubr.bf16.mxu0 0
        %1090 = vmatmul.mubr.bf16.gmra.mxu0 %v988
        %v1091 = vpop.f32.mrf.mxu0
        %v1092 = vadd.f32 0.0, %v1091
        %v1093 = vpop.f32.mrf.mxu0
        %v1094 = vpop.f32.mrf.mxu0
        %v1095 = vadd.f32 0.0, %v1094
        %v1096 = vpop.f32.mrf.mxu0
        %1097 = vmatprep.mubr.bf16.mxu0 0
        %1098 = vmatmul.mubr.bf16.gmra.mxu0 %v989
        %v1099 = vpop.f32.mrf.mxu0
        %v1100 = vadd.f32 0.0, %v1099
        %v1101 = vpop.f32.mrf.mxu0
        %v1102 = vpop.f32.mrf.mxu0
        %v1103 = vadd.f32 0.0, %v1102
        %v1104 = vpop.f32.mrf.mxu0
        %1105 = vmatprep.mubr.bf16.mxu0 0
        %1106 = vmatmul.mubr.bf16.gmra.mxu0 %v990
        %v1107 = vpop.f32.mrf.mxu0
        %v1108 = vadd.f32 0.0, %v1107
        %v1109 = vpop.f32.mrf.mxu0
        %v1110 = vpop.f32.mrf.mxu0
        %v1111 = vadd.f32 0.0, %v1110
        %v1112 = vpop.f32.mrf.mxu0
        %1113 = vmatprep.mubr.bf16.mxu0 0
        %1114 = vmatmul.mubr.bf16.gmra.mxu0 %v991
        %v1115 = vpop.f32.mrf.mxu0
        %v1116 = vadd.f32 0.0, %v1115
        %v1117 = vpop.f32.mrf.mxu0
        %v1118 = vpop.f32.mrf.mxu0
        %v1119 = vadd.f32 0.0, %v1118
        %v1120 = vpop.f32.mrf.mxu0
        %1121 = vdwg.mxu0
        %v1122 = vld [vmem:[#allocation3] sm:$0xff]
        %v1123 = vld [vmem:[#allocation3 + $0x8] sm:$0xff]
        %v1124 = vld [vmem:[#allocation3 + $0x10] sm:$0xff]
        %v1125 = vld [vmem:[#allocation3 + $0x18] sm:$0xff]
        %v1126 = vld [vmem:[#allocation3 + $0x20] sm:$0xff]
        %v1127 = vld [vmem:[#allocation3 + $0x28] sm:$0xff]
        %v1128 = vld [vmem:[#allocation3 + $0x30] sm:$0xff]
        %v1129 = vld [vmem:[#allocation3 + $0x38] sm:$0xff]
        %v1130 = vadd.f32 %v1122, %v1092
        %v1131 = vadd.f32 %v1123, %v1095
        %v1132 = vadd.f32 %v1124, %v1100
        %v1133 = vadd.f32 %v1125, %v1103
        %v1134 = vadd.f32 %v1126, %v1108
        %v1135 = vadd.f32 %v1127, %v1111
        %v1136 = vadd.f32 %v1128, %v1116
        %v1137 = vadd.f32 %v1129, %v1119
        %1138 = vst [vmem:[#allocation3] sm:$0xff] %v1130
        %1139 = vst [vmem:[#allocation3 + $0x8] sm:$0xff] %v1131
        %1140 = vst [vmem:[#allocation3 + $0x10] sm:$0xff] %v1132
        %1141 = vst [vmem:[#allocation3 + $0x18] sm:$0xff] %v1133
        %1142 = vst [vmem:[#allocation3 + $0x20] sm:$0xff] %v1134
        %1143 = vst [vmem:[#allocation3 + $0x28] sm:$0xff] %v1135
        %1144 = vst [vmem:[#allocation3 + $0x30] sm:$0xff] %v1136
        %1145 = vst [vmem:[#allocation3 + $0x38] sm:$0xff] %v1137
        %v1146 = vpack.c.bf16 %v475, %v474
        %v1147 = vpack.c.bf16 %v477, %v476
        %v1148 = vpack.c.bf16 %v479, %v478
        %v1149 = vpack.c.bf16 %v481, %v480
        %s1150 = scalar_lea.vmem %s4, 256
        %v1151 = vld [vmem:[%s1150] sm:$0xf]
        %v1152 = vld [vmem:[%s1150 + $0x4] sm:$0xf]
        %v1153 = vld [vmem:[%s1150 + $0x8] sm:$0xf]
        %v1154 = vld [vmem:[%s1150 + $0xc] sm:$0xf]
        %v1155 = vld [vmem:[%s1150 + $0x10] sm:$0xf]
        %v1156 = vld [vmem:[%s1150 + $0x14] sm:$0xf]
        %v1157 = vld [vmem:[%s1150 + $0x18] sm:$0xf]
        %v1158 = vld [vmem:[%s1150 + $0x1c] sm:$0xf]
        %v1159 = vld [vmem:[%s1150 + $0x20] sm:$0xf]
        %v1160 = vld [vmem:[%s1150 + $0x24] sm:$0xf]
        %v1161 = vld [vmem:[%s1150 + $0x28] sm:$0xf]
        %v1162 = vld [vmem:[%s1150 + $0x2c] sm:$0xf]
        %v1163 = vld [vmem:[%s1150 + $0x30] sm:$0xf]
        %v1164 = vld [vmem:[%s1150 + $0x34] sm:$0xf]
        %v1165 = vld [vmem:[%s1150 + $0x38] sm:$0xf]
        %v1166 = vld [vmem:[%s1150 + $0x3c] sm:$0xf]
        %v1183 = vunpack.c.l.b16 %v1151
        %v1184 = vunpack.c.l.b16 %v1152
        %v1185 = vunpack.c.l.b16 %v1153
        %v1186 = vunpack.c.l.b16 %v1154
        %v1187 = vunpack.c.l.b16 %v1155
        %v1188 = vunpack.c.l.b16 %v1156
        %v1189 = vunpack.c.l.b16 %v1157
        %v1190 = vunpack.c.l.b16 %v1158
        %v1191 = vunpack.c.l.b16 %v1159
        %v1192 = vunpack.c.l.b16 %v1160
        %v1193 = vunpack.c.l.b16 %v1161
        %v1194 = vunpack.c.l.b16 %v1162
        %v1195 = vunpack.c.l.b16 %v1163
        %v1196 = vunpack.c.l.b16 %v1164
        %v1197 = vunpack.c.l.b16 %v1165
        %v1198 = vunpack.c.l.b16 %v1166
        %v1199 = vpack.c.b16 %v1184, %v1183
        %v1200 = vpack.c.b16 %v1186, %v1185
        %v1201 = vpack.c.b16 %v1188, %v1187
        %v1202 = vpack.c.b16 %v1190, %v1189
        %v1203 = vpack.c.b16 %v1192, %v1191
        %v1204 = vpack.c.b16 %v1194, %v1193
        %v1205 = vpack.c.b16 %v1196, %v1195
        %v1206 = vpack.c.b16 %v1198, %v1197
        %1215 = vmatprep.subr.bf16.mxu0 0
        %1216 = vmatpush1.bf16.msra.mxu0 %v1206
        %1217 = vmatprep.subr.bf16.mxu0 0
        %1218 = vmatpush1.bf16.msra.mxu0 %v1205
        %1219 = vmatprep.subr.bf16.mxu0 0
        %1220 = vmatpush1.bf16.msra.mxu0 %v1204
        %1221 = vmatprep.subr.bf16.mxu0 0
        %1222 = vmatpush1.bf16.msra.mxu0 %v1203
        %1223 = vmatprep.subr.bf16.mxu0 0
        %1224 = vmatpush1.bf16.msra.mxu0 %v1202
        %1225 = vmatprep.subr.bf16.mxu0 0
        %1226 = vmatpush1.bf16.msra.mxu0 %v1201
        %1227 = vmatprep.subr.bf16.mxu0 0
        %1228 = vmatpush1.bf16.msra.mxu0 %v1200
        %1229 = vmatprep.subr.bf16.mxu0 0
        %1230 = vmatpush1.bf16.msra.mxu0 %v1199
        %1231 = vmatprep.subr.bf16.mxu0 0
        %1232 = vmatpush2.bf16.msra.mxu0 0
        %1233 = vmatprep.subr.bf16.mxu0 0
        %1234 = vmatpush2.bf16.msra.mxu0 0
        %1235 = vmatprep.subr.bf16.mxu0 0
        %1236 = vmatpush2.bf16.msra.mxu0 0
        %1237 = vmatprep.subr.bf16.mxu0 0
        %1238 = vmatpush2.bf16.msra.mxu0 0
        %1239 = vmatprep.subr.bf16.mxu0 0
        %1240 = vmatpush2.bf16.msra.mxu0 0
        %1241 = vmatprep.subr.bf16.mxu0 0
        %1242 = vmatpush2.bf16.msra.mxu0 0
        %1243 = vmatprep.subr.bf16.mxu0 0
        %1244 = vmatpush2.bf16.msra.mxu0 0
        %1245 = vmatprep.subr.bf16.mxu0 0
        %1246 = vmatpush2.bf16.msra.mxu0 0
        %1247 = vmatprep.mubr.bf16.mxu0 0
        %1248 = vmatmul.mubr.bf16.gmra.mxu0 %v1146
        %v1249 = vpop.f32.mrf.mxu0
        %v1250 = vadd.f32 0.0, %v1249
        %v1251 = vpop.f32.mrf.mxu0
        %v1252 = vpop.f32.mrf.mxu0
        %v1253 = vadd.f32 0.0, %v1252
        %v1254 = vpop.f32.mrf.mxu0
        %1255 = vmatprep.mubr.bf16.mxu0 0
        %1256 = vmatmul.mubr.bf16.gmra.mxu0 %v1147
        %v1257 = vpop.f32.mrf.mxu0
        %v1258 = vadd.f32 0.0, %v1257
        %v1259 = vpop.f32.mrf.mxu0
        %v1260 = vpop.f32.mrf.mxu0
        %v1261 = vadd.f32 0.0, %v1260
        %v1262 = vpop.f32.mrf.mxu0
        %1263 = vmatprep.mubr.bf16.mxu0 0
        %1264 = vmatmul.mubr.bf16.gmra.mxu0 %v1148
        %v1265 = vpop.f32.mrf.mxu0
        %v1266 = vadd.f32 0.0, %v1265
        %v1267 = vpop.f32.mrf.mxu0
        %v1268 = vpop.f32.mrf.mxu0
        %v1269 = vadd.f32 0.0, %v1268
        %v1270 = vpop.f32.mrf.mxu0
        %1271 = vmatprep.mubr.bf16.mxu0 0
        %1272 = vmatmul.mubr.bf16.gmra.mxu0 %v1149
        %v1273 = vpop.f32.mrf.mxu0
        %v1274 = vadd.f32 0.0, %v1273
        %v1275 = vpop.f32.mrf.mxu0
        %v1276 = vpop.f32.mrf.mxu0
        %v1277 = vadd.f32 0.0, %v1276
        %v1278 = vpop.f32.mrf.mxu0
        %1279 = vdwg.mxu0
        %v1280 = vld [vmem:[#allocation3] sm:$0xff]
        %v1281 = vld [vmem:[#allocation3 + $0x8] sm:$0xff]
        %v1282 = vld [vmem:[#allocation3 + $0x10] sm:$0xff]
        %v1283 = vld [vmem:[#allocation3 + $0x18] sm:$0xff]
        %v1284 = vld [vmem:[#allocation3 + $0x20] sm:$0xff]
        %v1285 = vld [vmem:[#allocation3 + $0x28] sm:$0xff]
        %v1286 = vld [vmem:[#allocation3 + $0x30] sm:$0xff]
        %v1287 = vld [vmem:[#allocation3 + $0x38] sm:$0xff]
        %v1288 = vadd.f32 %v1280, %v1250
        %v1289 = vadd.f32 %v1281, %v1253
        %v1290 = vadd.f32 %v1282, %v1258
        %v1291 = vadd.f32 %v1283, %v1261
        %v1292 = vadd.f32 %v1284, %v1266
        %v1293 = vadd.f32 %v1285, %v1269
        %v1294 = vadd.f32 %v1286, %v1274
        %v1295 = vadd.f32 %v1287, %v1277
        %1296 = vst [vmem:[#allocation3] sm:$0xff] %v1288
        %1297 = vst [vmem:[#allocation3 + $0x8] sm:$0xff] %v1289
        %1298 = vst [vmem:[#allocation3 + $0x10] sm:$0xff] %v1290
        %1299 = vst [vmem:[#allocation3 + $0x18] sm:$0xff] %v1291
        %1300 = vst [vmem:[#allocation3 + $0x20] sm:$0xff] %v1292
        %1301 = vst [vmem:[#allocation3 + $0x28] sm:$0xff] %v1293
        %1302 = vst [vmem:[#allocation3 + $0x30] sm:$0xff] %v1294
        %1303 = vst [vmem:[#allocation3 + $0x38] sm:$0xff] %v1295
        %v1320 = vrot.slane %v450, 1
        %v1321 = vrot.slane %v451, 1
        %v1322 = vsel %vm797, %v1320, %v1321
        %v1323 = vrot.slane %v452, 1
        %v1324 = vrot.slane %v453, 1
        %v1325 = vsel %vm797, %v1323, %v1324
        %v1326 = vrot.slane %v454, 1
        %v1327 = vrot.slane %v455, 1
        %v1328 = vsel %vm797, %v1326, %v1327
        %v1329 = vrot.slane %v456, 1
        %v1330 = vrot.slane %v457, 1
        %v1331 = vsel %vm797, %v1329, %v1330
        %v1332 = vrot.slane %v458, 1
        %v1333 = vrot.slane %v459, 1
        %v1334 = vsel %vm797, %v1332, %v1333
        %v1335 = vrot.slane %v460, 1
        %v1336 = vrot.slane %v461, 1
        %v1337 = vsel %vm797, %v1335, %v1336
        %v1338 = vrot.slane %v462, 1
        %v1339 = vrot.slane %v463, 1
        %v1340 = vsel %vm797, %v1338, %v1339
        %v1341 = vrot.slane %v464, 1
        %v1342 = vrot.slane %v465, 1
        %v1343 = vsel %vm797, %v1341, %v1342
        %v1352 = vpack.c.bf16 %v1325, %v1322
        %v1353 = vpack.c.bf16 %v1331, %v1328
        %v1354 = vpack.c.bf16 %v1337, %v1334
        %v1355 = vpack.c.bf16 %v1343, %v1340
        %s1356 = scalar_lea.vmem %s4, 320
        %v1357 = vld [vmem:[%s1356] sm:$0xf]
        %v1358 = vld [vmem:[%s1356 + $0x4] sm:$0xf]
        %v1359 = vld [vmem:[%s1356 + $0x8] sm:$0xf]
        %v1360 = vld [vmem:[%s1356 + $0xc] sm:$0xf]
        %v1361 = vld [vmem:[%s1356 + $0x10] sm:$0xf]
        %v1362 = vld [vmem:[%s1356 + $0x14] sm:$0xf]
        %v1363 = vld [vmem:[%s1356 + $0x18] sm:$0xf]
        %v1364 = vld [vmem:[%s1356 + $0x1c] sm:$0xf]
        %v1365 = vld [vmem:[%s1356 + $0x20] sm:$0xf]
        %v1366 = vld [vmem:[%s1356 + $0x24] sm:$0xf]
        %v1367 = vld [vmem:[%s1356 + $0x28] sm:$0xf]
        %v1368 = vld [vmem:[%s1356 + $0x2c] sm:$0xf]
        %v1369 = vld [vmem:[%s1356 + $0x30] sm:$0xf]
        %v1370 = vld [vmem:[%s1356 + $0x34] sm:$0xf]
        %v1371 = vld [vmem:[%s1356 + $0x38] sm:$0xf]
        %v1372 = vld [vmem:[%s1356 + $0x3c] sm:$0xf]
        %v1389 = vunpack.c.l.b16 %v1357
        %v1390 = vunpack.c.l.b16 %v1358
        %v1391 = vunpack.c.l.b16 %v1359
        %v1392 = vunpack.c.l.b16 %v1360
        %v1393 = vunpack.c.l.b16 %v1361
        %v1394 = vunpack.c.l.b16 %v1362
        %v1395 = vunpack.c.l.b16 %v1363
        %v1396 = vunpack.c.l.b16 %v1364
        %v1397 = vunpack.c.l.b16 %v1365
        %v1398 = vunpack.c.l.b16 %v1366
        %v1399 = vunpack.c.l.b16 %v1367
        %v1400 = vunpack.c.l.b16 %v1368
        %v1401 = vunpack.c.l.b16 %v1369
        %v1402 = vunpack.c.l.b16 %v1370
        %v1403 = vunpack.c.l.b16 %v1371
        %v1404 = vunpack.c.l.b16 %v1372
        %v1405 = vpack.c.b16 %v1390, %v1389
        %v1406 = vpack.c.b16 %v1392, %v1391
        %v1407 = vpack.c.b16 %v1394, %v1393
        %v1408 = vpack.c.b16 %v1396, %v1395
        %v1409 = vpack.c.b16 %v1398, %v1397
        %v1410 = vpack.c.b16 %v1400, %v1399
        %v1411 = vpack.c.b16 %v1402, %v1401
        %v1412 = vpack.c.b16 %v1404, %v1403
        %1421 = vmatprep.subr.bf16.mxu0 0
        %1422 = vmatpush1.bf16.msra.mxu0 %v1412
        %1423 = vmatprep.subr.bf16.mxu0 0
        %1424 = vmatpush1.bf16.msra.mxu0 %v1411
        %1425 = vmatprep.subr.bf16.mxu0 0
        %1426 = vmatpush1.bf16.msra.mxu0 %v1410
        %1427 = vmatprep.subr.bf16.mxu0 0
        %1428 = vmatpush1.bf16.msra.mxu0 %v1409
        %1429 = vmatprep.subr.bf16.mxu0 0
        %1430 = vmatpush1.bf16.msra.mxu0 %v1408
        %1431 = vmatprep.subr.bf16.mxu0 0
        %1432 = vmatpush1.bf16.msra.mxu0 %v1407
        %1433 = vmatprep.subr.bf16.mxu0 0
        %1434 = vmatpush1.bf16.msra.mxu0 %v1406
        %1435 = vmatprep.subr.bf16.mxu0 0
        %1436 = vmatpush1.bf16.msra.mxu0 %v1405
        %1437 = vmatprep.subr.bf16.mxu0 0
        %1438 = vmatpush2.bf16.msra.mxu0 0
        %1439 = vmatprep.subr.bf16.mxu0 0
        %1440 = vmatpush2.bf16.msra.mxu0 0
        %1441 = vmatprep.subr.bf16.mxu0 0
        %1442 = vmatpush2.bf16.msra.mxu0 0
        %1443 = vmatprep.subr.bf16.mxu0 0
        %1444 = vmatpush2.bf16.msra.mxu0 0
        %1445 = vmatprep.subr.bf16.mxu0 0
        %1446 = vmatpush2.bf16.msra.mxu0 0
        %1447 = vmatprep.subr.bf16.mxu0 0
        %1448 = vmatpush2.bf16.msra.mxu0 0
        %1449 = vmatprep.subr.bf16.mxu0 0
        %1450 = vmatpush2.bf16.msra.mxu0 0
        %1451 = vmatprep.subr.bf16.mxu0 0
        %1452 = vmatpush2.bf16.msra.mxu0 0
        %1453 = vmatprep.mubr.bf16.mxu0 0
        %1454 = vmatmul.mubr.bf16.gmra.mxu0 %v1352
        %v1455 = vpop.f32.mrf.mxu0
        %v1456 = vadd.f32 0.0, %v1455
        %v1457 = vpop.f32.mrf.mxu0
        %v1458 = vpop.f32.mrf.mxu0
        %v1459 = vadd.f32 0.0, %v1458
        %v1460 = vpop.f32.mrf.mxu0
        %1461 = vmatprep.mubr.bf16.mxu0 0
        %1462 = vmatmul.mubr.bf16.gmra.mxu0 %v1353
        %v1463 = vpop.f32.mrf.mxu0
        %v1464 = vadd.f32 0.0, %v1463
        %v1465 = vpop.f32.mrf.mxu0
        %v1466 = vpop.f32.mrf.mxu0
        %v1467 = vadd.f32 0.0, %v1466
        %v1468 = vpop.f32.mrf.mxu0
        %1469 = vmatprep.mubr.bf16.mxu0 0
        %1470 = vmatmul.mubr.bf16.gmra.mxu0 %v1354
        %v1471 = vpop.f32.mrf.mxu0
        %v1472 = vadd.f32 0.0, %v1471
        %v1473 = vpop.f32.mrf.mxu0
        %v1474 = vpop.f32.mrf.mxu0
        %v1475 = vadd.f32 0.0, %v1474
        %v1476 = vpop.f32.mrf.mxu0
        %1477 = vmatprep.mubr.bf16.mxu0 0
        %1478 = vmatmul.mubr.bf16.gmra.mxu0 %v1355
        %v1479 = vpop.f32.mrf.mxu0
        %v1480 = vadd.f32 0.0, %v1479
        %v1481 = vpop.f32.mrf.mxu0
        %v1482 = vpop.f32.mrf.mxu0
        %v1483 = vadd.f32 0.0, %v1482
        %v1484 = vpop.f32.mrf.mxu0
        %1485 = vdwg.mxu0
        %v1486 = vld [vmem:[#allocation3] sm:$0xff]
        %v1487 = vld [vmem:[#allocation3 + $0x8] sm:$0xff]
        %v1488 = vld [vmem:[#allocation3 + $0x10] sm:$0xff]
        %v1489 = vld [vmem:[#allocation3 + $0x18] sm:$0xff]
        %v1490 = vld [vmem:[#allocation3 + $0x20] sm:$0xff]
        %v1491 = vld [vmem:[#allocation3 + $0x28] sm:$0xff]
        %v1492 = vld [vmem:[#allocation3 + $0x30] sm:$0xff]
        %v1493 = vld [vmem:[#allocation3 + $0x38] sm:$0xff]
        %v1494 = vadd.f32 %v1486, %v1456
        %v1495 = vadd.f32 %v1487, %v1459
        %v1496 = vadd.f32 %v1488, %v1464
        %v1497 = vadd.f32 %v1489, %v1467
        %v1498 = vadd.f32 %v1490, %v1472
        %v1499 = vadd.f32 %v1491, %v1475
        %v1500 = vadd.f32 %v1492, %v1480
        %v1501 = vadd.f32 %v1493, %v1483
        %1502 = vst [vmem:[#allocation3] sm:$0xff] %v1494
        %1503 = vst [vmem:[#allocation3 + $0x8] sm:$0xff] %v1495
        %1504 = vst [vmem:[#allocation3 + $0x10] sm:$0xff] %v1496
        %1505 = vst [vmem:[#allocation3 + $0x18] sm:$0xff] %v1497
        %1506 = vst [vmem:[#allocation3 + $0x20] sm:$0xff] %v1498
        %1507 = vst [vmem:[#allocation3 + $0x28] sm:$0xff] %v1499
        %1508 = vst [vmem:[#allocation3 + $0x30] sm:$0xff] %v1500
        %1509 = vst [vmem:[#allocation3 + $0x38] sm:$0xff] %v1501
        %v1510 = vpack.c.bf16 %v402, %v400
        %v1511 = vpack.c.bf16 %v406, %v404
        %v1512 = vpack.c.bf16 %v410, %v408
        %v1513 = vpack.c.bf16 %v414, %v412
        %s1514 = scalar_lea.vmem %s4, 384
        %v1515 = vld [vmem:[%s1514] sm:$0xf]
        %v1516 = vld [vmem:[%s1514 + $0x4] sm:$0xf]
        %v1517 = vld [vmem:[%s1514 + $0x8] sm:$0xf]
        %v1518 = vld [vmem:[%s1514 + $0xc] sm:$0xf]
        %v1519 = vld [vmem:[%s1514 + $0x10] sm:$0xf]
        %v1520 = vld [vmem:[%s1514 + $0x14] sm:$0xf]
        %v1521 = vld [vmem:[%s1514 + $0x18] sm:$0xf]
        %v1522 = vld [vmem:[%s1514 + $0x1c] sm:$0xf]
        %v1523 = vld [vmem:[%s1514 + $0x20] sm:$0xf]
        %v1524 = vld [vmem:[%s1514 + $0x24] sm:$0xf]
        %v1525 = vld [vmem:[%s1514 + $0x28] sm:$0xf]
        %v1526 = vld [vmem:[%s1514 + $0x2c] sm:$0xf]
        %v1527 = vld [vmem:[%s1514 + $0x30] sm:$0xf]
        %v1528 = vld [vmem:[%s1514 + $0x34] sm:$0xf]
        %v1529 = vld [vmem:[%s1514 + $0x38] sm:$0xf]
        %v1530 = vld [vmem:[%s1514 + $0x3c] sm:$0xf]
        %v1547 = vunpack.c.l.b16 %v1515
        %v1548 = vunpack.c.l.b16 %v1516
        %v1549 = vunpack.c.l.b16 %v1517
        %v1550 = vunpack.c.l.b16 %v1518
        %v1551 = vunpack.c.l.b16 %v1519
        %v1552 = vunpack.c.l.b16 %v1520
        %v1553 = vunpack.c.l.b16 %v1521
        %v1554 = vunpack.c.l.b16 %v1522
        %v1555 = vunpack.c.l.b16 %v1523
        %v1556 = vunpack.c.l.b16 %v1524
        %v1557 = vunpack.c.l.b16 %v1525
        %v1558 = vunpack.c.l.b16 %v1526
        %v1559 = vunpack.c.l.b16 %v1527
        %v1560 = vunpack.c.l.b16 %v1528
        %v1561 = vunpack.c.l.b16 %v1529
        %v1562 = vunpack.c.l.b16 %v1530
        %v1563 = vpack.c.b16 %v1548, %v1547
        %v1564 = vpack.c.b16 %v1550, %v1549
        %v1565 = vpack.c.b16 %v1552, %v1551
        %v1566 = vpack.c.b16 %v1554, %v1553
        %v1567 = vpack.c.b16 %v1556, %v1555
        %v1568 = vpack.c.b16 %v1558, %v1557
        %v1569 = vpack.c.b16 %v1560, %v1559
        %v1570 = vpack.c.b16 %v1562, %v1561
        %1579 = vmatprep.subr.bf16.mxu0 0
        %1580 = vmatpush1.bf16.msra.mxu0 %v1570
        %1581 = vmatprep.subr.bf16.mxu0 0
        %1582 = vmatpush1.bf16.msra.mxu0 %v1569
        %1583 = vmatprep.subr.bf16.mxu0 0
        %1584 = vmatpush1.bf16.msra.mxu0 %v1568
        %1585 = vmatprep.subr.bf16.mxu0 0
        %1586 = vmatpush1.bf16.msra.mxu0 %v1567
        %1587 = vmatprep.subr.bf16.mxu0 0
        %1588 = vmatpush1.bf16.msra.mxu0 %v1566
        %1589 = vmatprep.subr.bf16.mxu0 0
        %1590 = vmatpush1.bf16.msra.mxu0 %v1565
        %1591 = vmatprep.subr.bf16.mxu0 0
        %1592 = vmatpush1.bf16.msra.mxu0 %v1564
        %1593 = vmatprep.subr.bf16.mxu0 0
        %1594 = vmatpush1.bf16.msra.mxu0 %v1563
        %1595 = vmatprep.subr.bf16.mxu0 0
        %1596 = vmatpush2.bf16.msra.mxu0 0
        %1597 = vmatprep.subr.bf16.mxu0 0
        %1598 = vmatpush2.bf16.msra.mxu0 0
        %1599 = vmatprep.subr.bf16.mxu0 0
        %1600 = vmatpush2.bf16.msra.mxu0 0
        %1601 = vmatprep.subr.bf16.mxu0 0
        %1602 = vmatpush2.bf16.msra.mxu0 0
        %1603 = vmatprep.subr.bf16.mxu0 0
        %1604 = vmatpush2.bf16.msra.mxu0 0
        %1605 = vmatprep.subr.bf16.mxu0 0
        %1606 = vmatpush2.bf16.msra.mxu0 0
        %1607 = vmatprep.subr.bf16.mxu0 0
        %1608 = vmatpush2.bf16.msra.mxu0 0
        %1609 = vmatprep.subr.bf16.mxu0 0
        %1610 = vmatpush2.bf16.msra.mxu0 0
        %1611 = vmatprep.mubr.bf16.mxu0 0
        %1612 = vmatmul.mubr.bf16.gmra.mxu0 %v1510
        %v1613 = vpop.f32.mrf.mxu0
        %v1614 = vadd.f32 0.0, %v1613
        %v1615 = vpop.f32.mrf.mxu0
        %v1616 = vpop.f32.mrf.mxu0
        %v1617 = vadd.f32 0.0, %v1616
        %v1618 = vpop.f32.mrf.mxu0
        %1619 = vmatprep.mubr.bf16.mxu0 0
        %1620 = vmatmul.mubr.bf16.gmra.mxu0 %v1511
        %v1621 = vpop.f32.mrf.mxu0
        %v1622 = vadd.f32 0.0, %v1621
        %v1623 = vpop.f32.mrf.mxu0
        %v1624 = vpop.f32.mrf.mxu0
        %v1625 = vadd.f32 0.0, %v1624
        %v1626 = vpop.f32.mrf.mxu0
        %1627 = vmatprep.mubr.bf16.mxu0 0
        %1628 = vmatmul.mubr.bf16.gmra.mxu0 %v1512
        %v1629 = vpop.f32.mrf.mxu0
        %v1630 = vadd.f32 0.0, %v1629
        %v1631 = vpop.f32.mrf.mxu0
        %v1632 = vpop.f32.mrf.mxu0
        %v1633 = vadd.f32 0.0, %v1632
        %v1634 = vpop.f32.mrf.mxu0
        %1635 = vmatprep.mubr.bf16.mxu0 0
        %1636 = vmatmul.mubr.bf16.gmra.mxu0 %v1513
        %v1637 = vpop.f32.mrf.mxu0
        %v1638 = vadd.f32 0.0, %v1637
        %v1639 = vpop.f32.mrf.mxu0
        %v1640 = vpop.f32.mrf.mxu0
        %v1641 = vadd.f32 0.0, %v1640
        %v1642 = vpop.f32.mrf.mxu0
        %1643 = vdwg.mxu0
        %v1644 = vld [vmem:[#allocation3] sm:$0xff]
        %v1645 = vld [vmem:[#allocation3 + $0x8] sm:$0xff]
        %v1646 = vld [vmem:[#allocation3 + $0x10] sm:$0xff]
        %v1647 = vld [vmem:[#allocation3 + $0x18] sm:$0xff]
        %v1648 = vld [vmem:[#allocation3 + $0x20] sm:$0xff]
        %v1649 = vld [vmem:[#allocation3 + $0x28] sm:$0xff]
        %v1650 = vld [vmem:[#allocation3 + $0x30] sm:$0xff]
        %v1651 = vld [vmem:[#allocation3 + $0x38] sm:$0xff]
        %v1652 = vadd.f32 %v1644, %v1614
        %v1653 = vadd.f32 %v1645, %v1617
        %v1654 = vadd.f32 %v1646, %v1622
        %v1655 = vadd.f32 %v1647, %v1625
        %v1656 = vadd.f32 %v1648, %v1630
        %v1657 = vadd.f32 %v1649, %v1633
        %v1658 = vadd.f32 %v1650, %v1638
        %v1659 = vadd.f32 %v1651, %v1641
        %1660 = vst [vmem:[#allocation3] sm:$0xff] %v1652
        %1661 = vst [vmem:[#allocation3 + $0x8] sm:$0xff] %v1653
        %1662 = vst [vmem:[#allocation3 + $0x10] sm:$0xff] %v1654
        %1663 = vst [vmem:[#allocation3 + $0x18] sm:$0xff] %v1655
        %1664 = vst [vmem:[#allocation3 + $0x20] sm:$0xff] %v1656
        %1665 = vst [vmem:[#allocation3 + $0x28] sm:$0xff] %v1657
        %1666 = vst [vmem:[#allocation3 + $0x30] sm:$0xff] %v1658
        %1667 = vst [vmem:[#allocation3 + $0x38] sm:$0xff] %v1659
        %v1668 = vpack.c.bf16 %v427, %v426
        %v1669 = vpack.c.bf16 %v429, %v428
        %v1670 = vpack.c.bf16 %v431, %v430
        %v1671 = vpack.c.bf16 %v433, %v432
        %s1672 = scalar_lea.vmem %s4, 448
        %v1673 = vld [vmem:[%s1672] sm:$0xf]
        %v1674 = vld [vmem:[%s1672 + $0x4] sm:$0xf]
        %v1675 = vld [vmem:[%s1672 + $0x8] sm:$0xf]
        %v1676 = vld [vmem:[%s1672 + $0xc] sm:$0xf]
        %v1677 = vld [vmem:[%s1672 + $0x10] sm:$0xf]
        %v1678 = vld [vmem:[%s1672 + $0x14] sm:$0xf]
        %v1679 = vld [vmem:[%s1672 + $0x18] sm:$0xf]
        %v1680 = vld [vmem:[%s1672 + $0x1c] sm:$0xf]
        %v1681 = vld [vmem:[%s1672 + $0x20] sm:$0xf]
        %v1682 = vld [vmem:[%s1672 + $0x24] sm:$0xf]
        %v1683 = vld [vmem:[%s1672 + $0x28] sm:$0xf]
        %v1684 = vld [vmem:[%s1672 + $0x2c] sm:$0xf]
        %v1685 = vld [vmem:[%s1672 + $0x30] sm:$0xf]
        %v1686 = vld [vmem:[%s1672 + $0x34] sm:$0xf]
        %v1687 = vld [vmem:[%s1672 + $0x38] sm:$0xf]
        %v1688 = vld [vmem:[%s1672 + $0x3c] sm:$0xf]
        %v1705 = vunpack.c.l.b16 %v1673
        %v1706 = vunpack.c.l.b16 %v1674
        %v1707 = vunpack.c.l.b16 %v1675
        %v1708 = vunpack.c.l.b16 %v1676
        %v1709 = vunpack.c.l.b16 %v1677
        %v1710 = vunpack.c.l.b16 %v1678
        %v1711 = vunpack.c.l.b16 %v1679
        %v1712 = vunpack.c.l.b16 %v1680
        %v1713 = vunpack.c.l.b16 %v1681
        %v1714 = vunpack.c.l.b16 %v1682
        %v1715 = vunpack.c.l.b16 %v1683
        %v1716 = vunpack.c.l.b16 %v1684
        %v1717 = vunpack.c.l.b16 %v1685
        %v1718 = vunpack.c.l.b16 %v1686
        %v1719 = vunpack.c.l.b16 %v1687
        %v1720 = vunpack.c.l.b16 %v1688
        %v1721 = vpack.c.b16 %v1706, %v1705
        %v1722 = vpack.c.b16 %v1708, %v1707
        %v1723 = vpack.c.b16 %v1710, %v1709
        %v1724 = vpack.c.b16 %v1712, %v1711
        %v1725 = vpack.c.b16 %v1714, %v1713
        %v1726 = vpack.c.b16 %v1716, %v1715
        %v1727 = vpack.c.b16 %v1718, %v1717
        %v1728 = vpack.c.b16 %v1720, %v1719
        %1737 = vmatprep.subr.bf16.mxu0 0
        %1738 = vmatpush1.bf16.msra.mxu0 %v1728
        %1739 = vmatprep.subr.bf16.mxu0 0
        %1740 = vmatpush1.bf16.msra.mxu0 %v1727
        %1741 = vmatprep.subr.bf16.mxu0 0
        %1742 = vmatpush1.bf16.msra.mxu0 %v1726
        %1743 = vmatprep.subr.bf16.mxu0 0
        %1744 = vmatpush1.bf16.msra.mxu0 %v1725
        %1745 = vmatprep.subr.bf16.mxu0 0
        %1746 = vmatpush1.bf16.msra.mxu0 %v1724
        %1747 = vmatprep.subr.bf16.mxu0 0
        %1748 = vmatpush1.bf16.msra.mxu0 %v1723
        %1749 = vmatprep.subr.bf16.mxu0 0
        %1750 = vmatpush1.bf16.msra.mxu0 %v1722
        %1751 = vmatprep.subr.bf16.mxu0 0
        %1752 = vmatpush1.bf16.msra.mxu0 %v1721
        %1753 = vmatprep.subr.bf16.mxu0 0
        %1754 = vmatpush2.bf16.msra.mxu0 0
        %1755 = vmatprep.subr.bf16.mxu0 0
        %1756 = vmatpush2.bf16.msra.mxu0 0
        %1757 = vmatprep.subr.bf16.mxu0 0
        %1758 = vmatpush2.bf16.msra.mxu0 0
        %1759 = vmatprep.subr.bf16.mxu0 0
        %1760 = vmatpush2.bf16.msra.mxu0 0
        %1761 = vmatprep.subr.bf16.mxu0 0
        %1762 = vmatpush2.bf16.msra.mxu0 0
        %1763 = vmatprep.subr.bf16.mxu0 0
        %1764 = vmatpush2.bf16.msra.mxu0 0
        %1765 = vmatprep.subr.bf16.mxu0 0
        %1766 = vmatpush2.bf16.msra.mxu0 0
        %1767 = vmatprep.subr.bf16.mxu0 0
        %1768 = vmatpush2.bf16.msra.mxu0 0
        %1769 = vmatprep.mubr.bf16.mxu0 0
        %1770 = vmatmul.mubr.bf16.gmra.mxu0 %v1668
        %v1771 = vpop.f32.mrf.mxu0
        %v1772 = vadd.f32 0.0, %v1771
        %v1773 = vpop.f32.mrf.mxu0
        %v1774 = vpop.f32.mrf.mxu0
        %v1775 = vadd.f32 0.0, %v1774
        %v1776 = vpop.f32.mrf.mxu0
        %1777 = vmatprep.mubr.bf16.mxu0 0
        %1778 = vmatmul.mubr.bf16.gmra.mxu0 %v1669
        %v1779 = vpop.f32.mrf.mxu0
        %v1780 = vadd.f32 0.0, %v1779
        %v1781 = vpop.f32.mrf.mxu0
        %v1782 = vpop.f32.mrf.mxu0
        %v1783 = vadd.f32 0.0, %v1782
        %v1784 = vpop.f32.mrf.mxu0
        %1785 = vmatprep.mubr.bf16.mxu0 0
        %1786 = vmatmul.mubr.bf16.gmra.mxu0 %v1670
        %v1787 = vpop.f32.mrf.mxu0
        %v1788 = vadd.f32 0.0, %v1787
        %v1789 = vpop.f32.mrf.mxu0
        %v1790 = vpop.f32.mrf.mxu0
        %v1791 = vadd.f32 0.0, %v1790
        %v1792 = vpop.f32.mrf.mxu0
        %1793 = vmatprep.mubr.bf16.mxu0 0
        %1794 = vmatmul.mubr.bf16.gmra.mxu0 %v1671
        %v1795 = vpop.f32.mrf.mxu0
        %v1796 = vadd.f32 0.0, %v1795
        %v1797 = vpop.f32.mrf.mxu0
        %v1798 = vpop.f32.mrf.mxu0
        %v1799 = vadd.f32 0.0, %v1798
        %v1800 = vpop.f32.mrf.mxu0
        %1801 = vdwg.mxu0
        %v1802 = vld [vmem:[#allocation3] sm:$0xff]
        %v1803 = vld [vmem:[#allocation3 + $0x8] sm:$0xff]
        %v1804 = vld [vmem:[#allocation3 + $0x10] sm:$0xff]
        %v1805 = vld [vmem:[#allocation3 + $0x18] sm:$0xff]
        %v1806 = vld [vmem:[#allocation3 + $0x20] sm:$0xff]
        %v1807 = vld [vmem:[#allocation3 + $0x28] sm:$0xff]
        %v1808 = vld [vmem:[#allocation3 + $0x30] sm:$0xff]
        %v1809 = vld [vmem:[#allocation3 + $0x38] sm:$0xff]
        %v1810 = vadd.f32 %v1802, %v1772
        %v1811 = vadd.f32 %v1803, %v1775
        %v1812 = vadd.f32 %v1804, %v1780
        %v1813 = vadd.f32 %v1805, %v1783
        %v1814 = vadd.f32 %v1806, %v1788
        %v1815 = vadd.f32 %v1807, %v1791
        %v1816 = vadd.f32 %v1808, %v1796
        %v1817 = vadd.f32 %v1809, %v1799
        %1818 = vst [vmem:[#allocation3] sm:$0xff] %v1810
        %1819 = vst [vmem:[#allocation3 + $0x8] sm:$0xff] %v1811
        %1820 = vst [vmem:[#allocation3 + $0x10] sm:$0xff] %v1812
        %1821 = vst [vmem:[#allocation3 + $0x18] sm:$0xff] %v1813
        %1822 = vst [vmem:[#allocation3 + $0x20] sm:$0xff] %v1814
        %1823 = vst [vmem:[#allocation3 + $0x28] sm:$0xff] %v1815
        %1824 = vst [vmem:[#allocation3 + $0x30] sm:$0xff] %v1816
        %1825 = vst [vmem:[#allocation3 + $0x38] sm:$0xff] %v1817
        %v1828 = vrot.slane %v414, 1
        %v1829 = vrot.slane %v415, 1
        %v1830 = vsel %vm797, %v1828, %v1829
        %v1832 = vpack.c.bf16 %v806, %v803
        %v1833 = vpack.c.bf16 %v812, %v809
        %v1834 = vpack.c.bf16 %v818, %v815
        %v1835 = vpack.c.bf16 %v1830, %v821
        %s1836 = scalar_lea.vmem %s4, 512
        %v1837 = vld [vmem:[%s1836] sm:$0xf]
        %v1838 = vld [vmem:[%s1836 + $0x4] sm:$0xf]
        %v1839 = vld [vmem:[%s1836 + $0x8] sm:$0xf]
        %v1840 = vld [vmem:[%s1836 + $0xc] sm:$0xf]
        %v1841 = vld [vmem:[%s1836 + $0x10] sm:$0xf]
        %v1842 = vld [vmem:[%s1836 + $0x14] sm:$0xf]
        %v1843 = vld [vmem:[%s1836 + $0x18] sm:$0xf]
        %v1844 = vld [vmem:[%s1836 + $0x1c] sm:$0xf]
        %v1845 = vld [vmem:[%s1836 + $0x20] sm:$0xf]
        %v1846 = vld [vmem:[%s1836 + $0x24] sm:$0xf]
        %v1847 = vld [vmem:[%s1836 + $0x28] sm:$0xf]
        %v1848 = vld [vmem:[%s1836 + $0x2c] sm:$0xf]
        %v1849 = vld [vmem:[%s1836 + $0x30] sm:$0xf]
        %v1850 = vld [vmem:[%s1836 + $0x34] sm:$0xf]
        %v1851 = vld [vmem:[%s1836 + $0x38] sm:$0xf]
        %v1852 = vld [vmem:[%s1836 + $0x3c] sm:$0xf]
        %v1869 = vunpack.c.l.b16 %v1837
        %v1870 = vunpack.c.l.b16 %v1838
        %v1871 = vunpack.c.l.b16 %v1839
        %v1872 = vunpack.c.l.b16 %v1840
        %v1873 = vunpack.c.l.b16 %v1841
        %v1874 = vunpack.c.l.b16 %v1842
        %v1875 = vunpack.c.l.b16 %v1843
        %v1876 = vunpack.c.l.b16 %v1844
        %v1877 = vunpack.c.l.b16 %v1845
        %v1878 = vunpack.c.l.b16 %v1846
        %v1879 = vunpack.c.l.b16 %v1847
        %v1880 = vunpack.c.l.b16 %v1848
        %v1881 = vunpack.c.l.b16 %v1849
        %v1882 = vunpack.c.l.b16 %v1850
        %v1883 = vunpack.c.l.b16 %v1851
        %v1884 = vunpack.c.l.b16 %v1852
        %v1885 = vpack.c.b16 %v1870, %v1869
        %v1886 = vpack.c.b16 %v1872, %v1871
        %v1887 = vpack.c.b16 %v1874, %v1873
        %v1888 = vpack.c.b16 %v1876, %v1875
        %v1889 = vpack.c.b16 %v1878, %v1877
        %v1890 = vpack.c.b16 %v1880, %v1879
        %v1891 = vpack.c.b16 %v1882, %v1881
        %v1892 = vpack.c.b16 %v1884, %v1883
        %1901 = vmatprep.subr.bf16.mxu0 0
        %1902 = vmatpush1.bf16.msra.mxu0 %v1892
        %1903 = vmatprep.subr.bf16.mxu0 0
        %1904 = vmatpush1.bf16.msra.mxu0 %v1891
        %1905 = vmatprep.subr.bf16.mxu0 0
        %1906 = vmatpush1.bf16.msra.mxu0 %v1890
        %1907 = vmatprep.subr.bf16.mxu0 0
        %1908 = vmatpush1.bf16.msra.mxu0 %v1889
        %1909 = vmatprep.subr.bf16.mxu0 0
        %1910 = vmatpush1.bf16.msra.mxu0 %v1888
        %1911 = vmatprep.subr.bf16.mxu0 0
        %1912 = vmatpush1.bf16.msra.mxu0 %v1887
        %1913 = vmatprep.subr.bf16.mxu0 0
        %1914 = vmatpush1.bf16.msra.mxu0 %v1886
        %1915 = vmatprep.subr.bf16.mxu0 0
        %1916 = vmatpush1.bf16.msra.mxu0 %v1885
        %1917 = vmatprep.subr.bf16.mxu0 0
        %1918 = vmatpush2.bf16.msra.mxu0 0
        %1919 = vmatprep.subr.bf16.mxu0 0
        %1920 = vmatpush2.bf16.msra.mxu0 0
        %1921 = vmatprep.subr.bf16.mxu0 0
        %1922 = vmatpush2.bf16.msra.mxu0 0
        %1923 = vmatprep.subr.bf16.mxu0 0
        %1924 = vmatpush2.bf16.msra.mxu0 0
        %1925 = vmatprep.subr.bf16.mxu0 0
        %1926 = vmatpush2.bf16.msra.mxu0 0
        %1927 = vmatprep.subr.bf16.mxu0 0
        %1928 = vmatpush2.bf16.msra.mxu0 0
        %1929 = vmatprep.subr.bf16.mxu0 0
        %1930 = vmatpush2.bf16.msra.mxu0 0
        %1931 = vmatprep.subr.bf16.mxu0 0
        %1932 = vmatpush2.bf16.msra.mxu0 0
        %1933 = vmatprep.mubr.bf16.mxu0 0
        %1934 = vmatmul.mubr.bf16.gmra.mxu0 %v1832
        %v1935 = vpop.f32.mrf.mxu0
        %v1936 = vadd.f32 0.0, %v1935
        %v1937 = vpop.f32.mrf.mxu0
        %v1938 = vpop.f32.mrf.mxu0
        %v1939 = vadd.f32 0.0, %v1938
        %v1940 = vpop.f32.mrf.mxu0
        %1941 = vmatprep.mubr.bf16.mxu0 0
        %1942 = vmatmul.mubr.bf16.gmra.mxu0 %v1833
        %v1943 = vpop.f32.mrf.mxu0
        %v1944 = vadd.f32 0.0, %v1943
        %v1945 = vpop.f32.mrf.mxu0
        %v1946 = vpop.f32.mrf.mxu0
        %v1947 = vadd.f32 0.0, %v1946
        %v1948 = vpop.f32.mrf.mxu0
        %1949 = vmatprep.mubr.bf16.mxu0 0
        %1950 = vmatmul.mubr.bf16.gmra.mxu0 %v1834
        %v1951 = vpop.f32.mrf.mxu0
        %v1952 = vadd.f32 0.0, %v1951
        %v1953 = vpop.f32.mrf.mxu0
        %v1954 = vpop.f32.mrf.mxu0
        %v1955 = vadd.f32 0.0, %v1954
        %v1956 = vpop.f32.mrf.mxu0
        %1957 = vmatprep.mubr.bf16.mxu0 0
        %1958 = vmatmul.mubr.bf16.gmra.mxu0 %v1835
        %v1959 = vpop.f32.mrf.mxu0
        %v1960 = vadd.f32 0.0, %v1959
        %v1961 = vpop.f32.mrf.mxu0
        %v1962 = vpop.f32.mrf.mxu0
        %v1963 = vadd.f32 0.0, %v1962
        %v1964 = vpop.f32.mrf.mxu0
        %1965 = vdwg.mxu0
        %v1966 = vld [vmem:[#allocation3] sm:$0xff]
        %v1967 = vld [vmem:[#allocation3 + $0x8] sm:$0xff]
        %v1968 = vld [vmem:[#allocation3 + $0x10] sm:$0xff]
        %v1969 = vld [vmem:[#allocation3 + $0x18] sm:$0xff]
        %v1970 = vld [vmem:[#allocation3 + $0x20] sm:$0xff]
        %v1971 = vld [vmem:[#allocation3 + $0x28] sm:$0xff]
        %v1972 = vld [vmem:[#allocation3 + $0x30] sm:$0xff]
        %v1973 = vld [vmem:[#allocation3 + $0x38] sm:$0xff]
        %v1974 = vadd.f32 %v1966, %v1936
        %v1975 = vadd.f32 %v1967, %v1939
        %v1976 = vadd.f32 %v1968, %v1944
        %v1977 = vadd.f32 %v1969, %v1947
        %v1978 = vadd.f32 %v1970, %v1952
        %v1979 = vadd.f32 %v1971, %v1955
        %v1980 = vadd.f32 %v1972, %v1960
        %v1981 = vadd.f32 %v1973, %v1963
        %1982 = vst [vmem:[#allocation3] sm:$0xff] %v1974
        %1983 = vst [vmem:[#allocation3 + $0x8] sm:$0xff] %v1975
        %1984 = vst [vmem:[#allocation3 + $0x10] sm:$0xff] %v1976
        %1985 = vst [vmem:[#allocation3 + $0x18] sm:$0xff] %v1977
        %1986 = vst [vmem:[#allocation3 + $0x20] sm:$0xff] %v1978
        %1987 = vst [vmem:[#allocation3 + $0x28] sm:$0xff] %v1979
        %1988 = vst [vmem:[#allocation3 + $0x30] sm:$0xff] %v1980
        %1989 = vst [vmem:[#allocation3 + $0x38] sm:$0xff] %v1981
        %v1990 = vld [vmem:[#allocation3] sm:$0xff]
        %v1991 = vld [vmem:[#allocation3 + $0x8] sm:$0xff]
        %v1992 = vld [vmem:[#allocation3 + $0x10] sm:$0xff]
        %v1993 = vld [vmem:[#allocation3 + $0x18] sm:$0xff]
        %v1994 = vld [vmem:[#allocation3 + $0x20] sm:$0xff]
        %v1995 = vld [vmem:[#allocation3 + $0x28] sm:$0xff]
        %v1996 = vld [vmem:[#allocation3 + $0x30] sm:$0xff]
        %v1997 = vld [vmem:[#allocation3 + $0x38] sm:$0xff]
        %v1998 = vld [vmem:[%s6] sm:$0x1]
        %v1999 = vlaneseq
        %v2000 = vshrl.u32 %v1999, 7
        %v2001 = vsub.s32 0, %v2000
        %v2002 = vrot.slane %v1998, %v2001
        %v2003 = vmul.f32 %v1990, %v2002
        %v2004 = vmul.f32 %v1991, %v2002
        %v2005 = vmul.f32 %v1992, %v2002
        %v2006 = vmul.f32 %v1993, %v2002
        %v2007 = vmul.f32 %v1994, %v2002
        %v2008 = vmul.f32 %v1995, %v2002
        %v2009 = vmul.f32 %v1996, %v2002
        %v2010 = vmul.f32 %v1997, %v2002
        %v2011 = vld [vmem:[%s6 + $0x1] sm:$0x1]
        %v2012 = vlaneseq
        %v2013 = vshrl.u32 %v2012, 7
        %v2014 = vsub.s32 0, %v2013
        %v2015 = vrot.slane %v2011, %v2014
        %v2016 = vadd.f32 %v2003, %v2015
        %v2017 = vadd.f32 %v2004, %v2015
        %v2018 = vadd.f32 %v2005, %v2015
        %v2019 = vadd.f32 %v2006, %v2015
        %v2020 = vadd.f32 %v2007, %v2015
        %v2021 = vadd.f32 %v2008, %v2015
        %v2022 = vadd.f32 %v2009, %v2015
        %v2023 = vadd.f32 %v2010, %v2015
        %v2024 = vmax.f32 %v2016, 0.0
        %v2025 = vmax.f32 %v2017, 0.0
        %v2026 = vmax.f32 %v2018, 0.0
        %v2027 = vmax.f32 %v2019, 0.0
        %v2028 = vmax.f32 %v2020, 0.0
        %v2029 = vmax.f32 %v2021, 0.0
        %v2030 = vmax.f32 %v2022, 0.0
        %v2031 = vmax.f32 %v2023, 0.0
        %2032 = vst [vmem:[#allocation2] sm:$0xff] 0.0
        %2033 = vst [vmem:[#allocation2 + $0x8] sm:$0x3] 0.0
        %s2034 = scalar_lea.vmem [#allocation2], 144
        %2035 = vst [vmem:[%s2034] sm:$0xff] 0.0
        %2036 = vst [vmem:[%s2034 + $0x8] sm:$0x3] 0.0
        %2037 = vst [vmem:[#allocation2] sm:$0x1] 0.0
        %2038 = vst [vmem:[#allocation2 + $0x10] sm:$0x1] 0.0
        %2039 = vst [vmem:[#allocation2 + $0x20] sm:$0x1] 0.0
        %2040 = vst [vmem:[#allocation2 + $0x30] sm:$0x1] 0.0
        %2041 = vst [vmem:[#allocation2 + $0x40] sm:$0x1] 0.0
        %2042 = vst [vmem:[#allocation2 + $0x50] sm:$0x1] 0.0
        %2043 = vst [vmem:[#allocation2 + $0x60] sm:$0x1] 0.0
        %2044 = vst [vmem:[#allocation2 + $0x70] sm:$0x1] 0.0
        %2045 = vst [vmem:[#allocation2 + $0x80] sm:$0x1] 0.0
        %2046 = vst [vmem:[#allocation2 + $0x90] sm:$0x1] 0.0
        %2047 = vst [vmem:[#allocation2 + $0x9] sm:$0x1] 0.0
        %2048 = vst [vmem:[#allocation2 + $0x19] sm:$0x1] 0.0
        %2049 = vst [vmem:[#allocation2 + $0x29] sm:$0x1] 0.0
        %2050 = vst [vmem:[#allocation2 + $0x39] sm:$0x1] 0.0
        %2051 = vst [vmem:[#allocation2 + $0x49] sm:$0x1] 0.0
        %2052 = vst [vmem:[#allocation2 + $0x59] sm:$0x1] 0.0
        %2053 = vst [vmem:[#allocation2 + $0x69] sm:$0x1] 0.0
        %2054 = vst [vmem:[#allocation2 + $0x79] sm:$0x1] 0.0
        %2055 = vst [vmem:[#allocation2 + $0x89] sm:$0x1] 0.0
        %2056 = vst [vmem:[#allocation2 + $0x99] sm:$0x1] 0.0
        %s2057 = scalar_lea.vmem [#allocation2], 16
        %2058 = vst [vmem:[%s2057 + $0x1] sm:$0xff] %v2024
        %2059 = vst [vmem:[%s2057 + $0x11] sm:$0xff] %v2025
        %2060 = vst [vmem:[%s2057 + $0x21] sm:$0xff] %v2026
        %2061 = vst [vmem:[%s2057 + $0x31] sm:$0xff] %v2027
        %2062 = vst [vmem:[%s2057 + $0x41] sm:$0xff] %v2028
        %2063 = vst [vmem:[%s2057 + $0x51] sm:$0xff] %v2029
        %2064 = vst [vmem:[%s2057 + $0x61] sm:$0xff] %v2030
        %2065 = vst [vmem:[%s2057 + $0x71] sm:$0xff] %v2031
        %v2066 = vld [vmem:[#allocation2] sm:$0xff]
        %v2067 = vld [vmem:[#allocation2 + $0x10] sm:$0xff]
        %v2068 = vld [vmem:[#allocation2 + $0x20] sm:$0xff]
        %v2069 = vld [vmem:[#allocation2 + $0x30] sm:$0xff]
        %v2070 = vld [vmem:[#allocation2 + $0x40] sm:$0xff]
        %v2071 = vld [vmem:[#allocation2 + $0x50] sm:$0xff]
        %v2072 = vld [vmem:[#allocation2 + $0x60] sm:$0xff]
        %v2073 = vld [vmem:[#allocation2 + $0x70] sm:$0xff]
        %v2074 = vpack.c.bf16 %v2067, %v2066
        %v2075 = vpack.c.bf16 %v2069, %v2068
        %v2076 = vpack.c.bf16 %v2071, %v2070
        %v2077 = vpack.c.bf16 %v2073, %v2072
        %v2078 = vld [vmem:[#allocation5] sm:$0xf]
        %v2079 = vld [vmem:[#allocation5 + $0x4] sm:$0xf]
        %v2080 = vld [vmem:[#allocation5 + $0x8] sm:$0xf]
        %v2081 = vld [vmem:[#allocation5 + $0xc] sm:$0xf]
        %v2082 = vld [vmem:[#allocation5 + $0x10] sm:$0xf]
        %v2083 = vld [vmem:[#allocation5 + $0x14] sm:$0xf]
        %v2084 = vld [vmem:[#allocation5 + $0x18] sm:$0xf]
        %v2085 = vld [vmem:[#allocation5 + $0x1c] sm:$0xf]
        %v2086 = vld [vmem:[#allocation5 + $0x20] sm:$0xf]
        %v2087 = vld [vmem:[#allocation5 + $0x24] sm:$0xf]
        %v2088 = vld [vmem:[#allocation5 + $0x28] sm:$0xf]
        %v2089 = vld [vmem:[#allocation5 + $0x2c] sm:$0xf]
        %v2090 = vld [vmem:[#allocation5 + $0x30] sm:$0xf]
        %v2091 = vld [vmem:[#allocation5 + $0x34] sm:$0xf]
        %v2092 = vld [vmem:[#allocation5 + $0x38] sm:$0xf]
        %v2093 = vld [vmem:[#allocation5 + $0x3c] sm:$0xf]
        %v2110 = vunpack.c.l.b16 %v2078
        %v2111 = vunpack.c.l.b16 %v2079
        %v2112 = vunpack.c.l.b16 %v2080
        %v2113 = vunpack.c.l.b16 %v2081
        %v2114 = vunpack.c.l.b16 %v2082
        %v2115 = vunpack.c.l.b16 %v2083
        %v2116 = vunpack.c.l.b16 %v2084
        %v2117 = vunpack.c.l.b16 %v2085
        %v2118 = vunpack.c.l.b16 %v2086
        %v2119 = vunpack.c.l.b16 %v2087
        %v2120 = vunpack.c.l.b16 %v2088
        %v2121 = vunpack.c.l.b16 %v2089
        %v2122 = vunpack.c.l.b16 %v2090
        %v2123 = vunpack.c.l.b16 %v2091
        %v2124 = vunpack.c.l.b16 %v2092
        %v2125 = vunpack.c.l.b16 %v2093
        %v2126 = vpack.c.b16 %v2111, %v2110
        %v2127 = vpack.c.b16 %v2113, %v2112
        %v2128 = vpack.c.b16 %v2115, %v2114
        %v2129 = vpack.c.b16 %v2117, %v2116
        %v2130 = vpack.c.b16 %v2119, %v2118
        %v2131 = vpack.c.b16 %v2121, %v2120
        %v2132 = vpack.c.b16 %v2123, %v2122
        %v2133 = vpack.c.b16 %v2125, %v2124
        %2142 = vmatprep.subr.bf16.mxu0 0
        %2143 = vmatpush1.bf16.msra.mxu0 %v2133
        %2144 = vmatprep.subr.bf16.mxu0 0
        %2145 = vmatpush1.bf16.msra.mxu0 %v2132
        %2146 = vmatprep.subr.bf16.mxu0 0
        %2147 = vmatpush1.bf16.msra.mxu0 %v2131
        %2148 = vmatprep.subr.bf16.mxu0 0
        %2149 = vmatpush1.bf16.msra.mxu0 %v2130
        %2150 = vmatprep.subr.bf16.mxu0 0
        %2151 = vmatpush1.bf16.msra.mxu0 %v2129
        %2152 = vmatprep.subr.bf16.mxu0 0
        %2153 = vmatpush1.bf16.msra.mxu0 %v2128
        %2154 = vmatprep.subr.bf16.mxu0 0
        %2155 = vmatpush1.bf16.msra.mxu0 %v2127
        %2156 = vmatprep.subr.bf16.mxu0 0
        %2157 = vmatpush1.bf16.msra.mxu0 %v2126
        %2158 = vmatprep.subr.bf16.mxu0 0
        %2159 = vmatpush2.bf16.msra.mxu0 0
        %2160 = vmatprep.subr.bf16.mxu0 0
        %2161 = vmatpush2.bf16.msra.mxu0 0
        %2162 = vmatprep.subr.bf16.mxu0 0
        %2163 = vmatpush2.bf16.msra.mxu0 0
        %2164 = vmatprep.subr.bf16.mxu0 0
        %2165 = vmatpush2.bf16.msra.mxu0 0
        %2166 = vmatprep.subr.bf16.mxu0 0
        %2167 = vmatpush2.bf16.msra.mxu0 0
        %2168 = vmatprep.subr.bf16.mxu0 0
        %2169 = vmatpush2.bf16.msra.mxu0 0
        %2170 = vmatprep.subr.bf16.mxu0 0
        %2171 = vmatpush2.bf16.msra.mxu0 0
        %2172 = vmatprep.subr.bf16.mxu0 0
        %2173 = vmatpush2.bf16.msra.mxu0 0
        %2174 = vmatprep.mubr.bf16.mxu0 0
        %2175 = vmatmul.mubr.bf16.gmra.mxu0 %v2074
        %v2176 = vpop.f32.mrf.mxu0
        %v2177 = vadd.f32 0.0, %v2176
        %v2178 = vpop.f32.mrf.mxu0
        %v2179 = vpop.f32.mrf.mxu0
        %v2180 = vadd.f32 0.0, %v2179
        %v2181 = vpop.f32.mrf.mxu0
        %2182 = vmatprep.mubr.bf16.mxu0 0
        %2183 = vmatmul.mubr.bf16.gmra.mxu0 %v2075
        %v2184 = vpop.f32.mrf.mxu0
        %v2185 = vadd.f32 0.0, %v2184
        %v2186 = vpop.f32.mrf.mxu0
        %v2187 = vpop.f32.mrf.mxu0
        %v2188 = vadd.f32 0.0, %v2187
        %v2189 = vpop.f32.mrf.mxu0
        %2190 = vmatprep.mubr.bf16.mxu0 0
        %2191 = vmatmul.mubr.bf16.gmra.mxu0 %v2076
        %v2192 = vpop.f32.mrf.mxu0
        %v2193 = vadd.f32 0.0, %v2192
        %v2194 = vpop.f32.mrf.mxu0
        %v2195 = vpop.f32.mrf.mxu0
        %v2196 = vadd.f32 0.0, %v2195
        %v2197 = vpop.f32.mrf.mxu0
        %2198 = vmatprep.mubr.bf16.mxu0 0
        %2199 = vmatmul.mubr.bf16.gmra.mxu0 %v2077
        %v2200 = vpop.f32.mrf.mxu0
        %v2201 = vadd.f32 0.0, %v2200
        %v2202 = vpop.f32.mrf.mxu0
        %v2203 = vpop.f32.mrf.mxu0
        %v2204 = vadd.f32 0.0, %v2203
        %v2205 = vpop.f32.mrf.mxu0
        %2206 = vdwg.mxu0
        %2207 = vst [vmem:[#allocation4] sm:$0xff] %v2177
        %2208 = vst [vmem:[#allocation4 + $0x8] sm:$0xff] %v2180
        %2209 = vst [vmem:[#allocation4 + $0x10] sm:$0xff] %v2185
        %2210 = vst [vmem:[#allocation4 + $0x18] sm:$0xff] %v2188
        %2211 = vst [vmem:[#allocation4 + $0x20] sm:$0xff] %v2193
        %2212 = vst [vmem:[#allocation4 + $0x28] sm:$0xff] %v2196
        %2213 = vst [vmem:[#allocation4 + $0x30] sm:$0xff] %v2201
        %2214 = vst [vmem:[#allocation4 + $0x38] sm:$0xff] %v2204
        %v2215 = vld [vmem:[#allocation2 + $0x1] sm:$0xff]
        %v2216 = vld [vmem:[#allocation2 + $0x11] sm:$0xff]
        %v2217 = vld [vmem:[#allocation2 + $0x21] sm:$0xff]
        %v2218 = vld [vmem:[#allocation2 + $0x31] sm:$0xff]
        %v2219 = vld [vmem:[#allocation2 + $0x41] sm:$0xff]
        %v2220 = vld [vmem:[#allocation2 + $0x51] sm:$0xff]
        %v2221 = vld [vmem:[#allocation2 + $0x61] sm:$0xff]
        %v2222 = vld [vmem:[#allocation2 + $0x71] sm:$0xff]
        %v2223 = vpack.c.bf16 %v2216, %v2215
        %v2224 = vpack.c.bf16 %v2218, %v2217
        %v2225 = vpack.c.bf16 %v2220, %v2219
        %v2226 = vpack.c.bf16 %v2222, %v2221
        %s2227 = scalar_lea.vmem [#allocation5], 64
        %v2228 = vld [vmem:[%s2227] sm:$0xf]
        %v2229 = vld [vmem:[%s2227 + $0x4] sm:$0xf]
        %v2230 = vld [vmem:[%s2227 + $0x8] sm:$0xf]
        %v2231 = vld [vmem:[%s2227 + $0xc] sm:$0xf]
        %v2232 = vld [vmem:[%s2227 + $0x10] sm:$0xf]
        %v2233 = vld [vmem:[%s2227 + $0x14] sm:$0xf]
        %v2234 = vld [vmem:[%s2227 + $0x18] sm:$0xf]
        %v2235 = vld [vmem:[%s2227 + $0x1c] sm:$0xf]
        %v2236 = vld [vmem:[%s2227 + $0x20] sm:$0xf]
        %v2237 = vld [vmem:[%s2227 + $0x24] sm:$0xf]
        %v2238 = vld [vmem:[%s2227 + $0x28] sm:$0xf]
        %v2239 = vld [vmem:[%s2227 + $0x2c] sm:$0xf]
        %v2240 = vld [vmem:[%s2227 + $0x30] sm:$0xf]
        %v2241 = vld [vmem:[%s2227 + $0x34] sm:$0xf]
        %v2242 = vld [vmem:[%s2227 + $0x38] sm:$0xf]
        %v2243 = vld [vmem:[%s2227 + $0x3c] sm:$0xf]
        %v2260 = vunpack.c.l.b16 %v2228
        %v2261 = vunpack.c.l.b16 %v2229
        %v2262 = vunpack.c.l.b16 %v2230
        %v2263 = vunpack.c.l.b16 %v2231
        %v2264 = vunpack.c.l.b16 %v2232
        %v2265 = vunpack.c.l.b16 %v2233
        %v2266 = vunpack.c.l.b16 %v2234
        %v2267 = vunpack.c.l.b16 %v2235
        %v2268 = vunpack.c.l.b16 %v2236
        %v2269 = vunpack.c.l.b16 %v2237
        %v2270 = vunpack.c.l.b16 %v2238
        %v2271 = vunpack.c.l.b16 %v2239
        %v2272 = vunpack.c.l.b16 %v2240
        %v2273 = vunpack.c.l.b16 %v2241
        %v2274 = vunpack.c.l.b16 %v2242
        %v2275 = vunpack.c.l.b16 %v2243
        %v2276 = vpack.c.b16 %v2261, %v2260
        %v2277 = vpack.c.b16 %v2263, %v2262
        %v2278 = vpack.c.b16 %v2265, %v2264
        %v2279 = vpack.c.b16 %v2267, %v2266
        %v2280 = vpack.c.b16 %v2269, %v2268
        %v2281 = vpack.c.b16 %v2271, %v2270
        %v2282 = vpack.c.b16 %v2273, %v2272
        %v2283 = vpack.c.b16 %v2275, %v2274
        %2292 = vmatprep.subr.bf16.mxu0 0
        %2293 = vmatpush1.bf16.msra.mxu0 %v2283
        %2294 = vmatprep.subr.bf16.mxu0 0
        %2295 = vmatpush1.bf16.msra.mxu0 %v2282
        %2296 = vmatprep.subr.bf16.mxu0 0
        %2297 = vmatpush1.bf16.msra.mxu0 %v2281
        %2298 = vmatprep.subr.bf16.mxu0 0
        %2299 = vmatpush1.bf16.msra.mxu0 %v2280
        %2300 = vmatprep.subr.bf16.mxu0 0
        %2301 = vmatpush1.bf16.msra.mxu0 %v2279
        %2302 = vmatprep.subr.bf16.mxu0 0
        %2303 = vmatpush1.bf16.msra.mxu0 %v2278
        %2304 = vmatprep.subr.bf16.mxu0 0
        %2305 = vmatpush1.bf16.msra.mxu0 %v2277
        %2306 = vmatprep.subr.bf16.mxu0 0
        %2307 = vmatpush1.bf16.msra.mxu0 %v2276
        %2308 = vmatprep.subr.bf16.mxu0 0
        %2309 = vmatpush2.bf16.msra.mxu0 0
        %2310 = vmatprep.subr.bf16.mxu0 0
        %2311 = vmatpush2.bf16.msra.mxu0 0
        %2312 = vmatprep.subr.bf16.mxu0 0
        %2313 = vmatpush2.bf16.msra.mxu0 0
        %2314 = vmatprep.subr.bf16.mxu0 0
        %2315 = vmatpush2.bf16.msra.mxu0 0
        %2316 = vmatprep.subr.bf16.mxu0 0
        %2317 = vmatpush2.bf16.msra.mxu0 0
        %2318 = vmatprep.subr.bf16.mxu0 0
        %2319 = vmatpush2.bf16.msra.mxu0 0
        %2320 = vmatprep.subr.bf16.mxu0 0
        %2321 = vmatpush2.bf16.msra.mxu0 0
        %2322 = vmatprep.subr.bf16.mxu0 0
        %2323 = vmatpush2.bf16.msra.mxu0 0
        %2324 = vmatprep.mubr.bf16.mxu0 0
        %2325 = vmatmul.mubr.bf16.gmra.mxu0 %v2223
        %v2326 = vpop.f32.mrf.mxu0
        %v2327 = vadd.f32 0.0, %v2326
        %v2328 = vpop.f32.mrf.mxu0
        %v2329 = vpop.f32.mrf.mxu0
        %v2330 = vadd.f32 0.0, %v2329
        %v2331 = vpop.f32.mrf.mxu0
        %2332 = vmatprep.mubr.bf16.mxu0 0
        %2333 = vmatmul.mubr.bf16.gmra.mxu0 %v2224
        %v2334 = vpop.f32.mrf.mxu0
        %v2335 = vadd.f32 0.0, %v2334
        %v2336 = vpop.f32.mrf.mxu0
        %v2337 = vpop.f32.mrf.mxu0
        %v2338 = vadd.f32 0.0, %v2337
        %v2339 = vpop.f32.mrf.mxu0
        %2340 = vmatprep.mubr.bf16.mxu0 0
        %2341 = vmatmul.mubr.bf16.gmra.mxu0 %v2225
        %v2342 = vpop.f32.mrf.mxu0
        %v2343 = vadd.f32 0.0, %v2342
        %v2344 = vpop.f32.mrf.mxu0
        %v2345 = vpop.f32.mrf.mxu0
        %v2346 = vadd.f32 0.0, %v2345
        %v2347 = vpop.f32.mrf.mxu0
        %2348 = vmatprep.mubr.bf16.mxu0 0
        %2349 = vmatmul.mubr.bf16.gmra.mxu0 %v2226
        %v2350 = vpop.f32.mrf.mxu0
        %v2351 = vadd.f32 0.0, %v2350
        %v2352 = vpop.f32.mrf.mxu0
        %v2353 = vpop.f32.mrf.mxu0
        %v2354 = vadd.f32 0.0, %v2353
        %v2355 = vpop.f32.mrf.mxu0
        %2356 = vdwg.mxu0
        %v2357 = vld [vmem:[#allocation4] sm:$0xff]
        %v2358 = vld [vmem:[#allocation4 + $0x8] sm:$0xff]
        %v2359 = vld [vmem:[#allocation4 + $0x10] sm:$0xff]
        %v2360 = vld [vmem:[#allocation4 + $0x18] sm:$0xff]
        %v2361 = vld [vmem:[#allocation4 + $0x20] sm:$0xff]
        %v2362 = vld [vmem:[#allocation4 + $0x28] sm:$0xff]
        %v2363 = vld [vmem:[#allocation4 + $0x30] sm:$0xff]
        %v2364 = vld [vmem:[#allocation4 + $0x38] sm:$0xff]
        %v2365 = vadd.f32 %v2357, %v2327
        %v2366 = vadd.f32 %v2358, %v2330
        %v2367 = vadd.f32 %v2359, %v2335
        %v2368 = vadd.f32 %v2360, %v2338
        %v2369 = vadd.f32 %v2361, %v2343
        %v2370 = vadd.f32 %v2362, %v2346
        %v2371 = vadd.f32 %v2363, %v2351
        %v2372 = vadd.f32 %v2364, %v2354
        %2373 = vst [vmem:[#allocation4] sm:$0xff] %v2365
        %2374 = vst [vmem:[#allocation4 + $0x8] sm:$0xff] %v2366
        %2375 = vst [vmem:[#allocation4 + $0x10] sm:$0xff] %v2367
        %2376 = vst [vmem:[#allocation4 + $0x18] sm:$0xff] %v2368
        %2377 = vst [vmem:[#allocation4 + $0x20] sm:$0xff] %v2369
        %2378 = vst [vmem:[#allocation4 + $0x28] sm:$0xff] %v2370
        %2379 = vst [vmem:[#allocation4 + $0x30] sm:$0xff] %v2371
        %2380 = vst [vmem:[#allocation4 + $0x38] sm:$0xff] %v2372
        %v2381 = vld [vmem:[#allocation2 + $0x2] sm:$0xff]
        %v2382 = vld [vmem:[#allocation2 + $0x12] sm:$0xff]
        %v2383 = vld [vmem:[#allocation2 + $0x22] sm:$0xff]
        %v2384 = vld [vmem:[#allocation2 + $0x32] sm:$0xff]
        %v2385 = vld [vmem:[#allocation2 + $0x42] sm:$0xff]
        %v2386 = vld [vmem:[#allocation2 + $0x52] sm:$0xff]
        %v2387 = vld [vmem:[#allocation2 + $0x62] sm:$0xff]
        %v2388 = vld [vmem:[#allocation2 + $0x72] sm:$0xff]
        %v2389 = vpack.c.bf16 %v2382, %v2381
        %v2390 = vpack.c.bf16 %v2384, %v2383
        %v2391 = vpack.c.bf16 %v2386, %v2385
        %v2392 = vpack.c.bf16 %v2388, %v2387
        %s2393 = scalar_lea.vmem [#allocation5], 128
        %v2394 = vld [vmem:[%s2393] sm:$0xf]
        %v2395 = vld [vmem:[%s2393 + $0x4] sm:$0xf]
        %v2396 = vld [vmem:[%s2393 + $0x8] sm:$0xf]
        %v2397 = vld [vmem:[%s2393 + $0xc] sm:$0xf]
        %v2398 = vld [vmem:[%s2393 + $0x10] sm:$0xf]
        %v2399 = vld [vmem:[%s2393 + $0x14] sm:$0xf]
        %v2400 = vld [vmem:[%s2393 + $0x18] sm:$0xf]
        %v2401 = vld [vmem:[%s2393 + $0x1c] sm:$0xf]
        %v2402 = vld [vmem:[%s2393 + $0x20] sm:$0xf]
        %v2403 = vld [vmem:[%s2393 + $0x24] sm:$0xf]
        %v2404 = vld [vmem:[%s2393 + $0x28] sm:$0xf]
        %v2405 = vld [vmem:[%s2393 + $0x2c] sm:$0xf]
        %v2406 = vld [vmem:[%s2393 + $0x30] sm:$0xf]
        %v2407 = vld [vmem:[%s2393 + $0x34] sm:$0xf]
        %v2408 = vld [vmem:[%s2393 + $0x38] sm:$0xf]
        %v2409 = vld [vmem:[%s2393 + $0x3c] sm:$0xf]
        %v2426 = vunpack.c.l.b16 %v2394
        %v2427 = vunpack.c.l.b16 %v2395
        %v2428 = vunpack.c.l.b16 %v2396
        %v2429 = vunpack.c.l.b16 %v2397
        %v2430 = vunpack.c.l.b16 %v2398
        %v2431 = vunpack.c.l.b16 %v2399
        %v2432 = vunpack.c.l.b16 %v2400
        %v2433 = vunpack.c.l.b16 %v2401
        %v2434 = vunpack.c.l.b16 %v2402
        %v2435 = vunpack.c.l.b16 %v2403
        %v2436 = vunpack.c.l.b16 %v2404
        %v2437 = vunpack.c.l.b16 %v2405
        %v2438 = vunpack.c.l.b16 %v2406
        %v2439 = vunpack.c.l.b16 %v2407
        %v2440 = vunpack.c.l.b16 %v2408
        %v2441 = vunpack.c.l.b16 %v2409
        %v2442 = vpack.c.b16 %v2427, %v2426
        %v2443 = vpack.c.b16 %v2429, %v2428
        %v2444 = vpack.c.b16 %v2431, %v2430
        %v2445 = vpack.c.b16 %v2433, %v2432
        %v2446 = vpack.c.b16 %v2435, %v2434
        %v2447 = vpack.c.b16 %v2437, %v2436
        %v2448 = vpack.c.b16 %v2439, %v2438
        %v2449 = vpack.c.b16 %v2441, %v2440
        %2458 = vmatprep.subr.bf16.mxu0 0
        %2459 = vmatpush1.bf16.msra.mxu0 %v2449
        %2460 = vmatprep.subr.bf16.mxu0 0
        %2461 = vmatpush1.bf16.msra.mxu0 %v2448
        %2462 = vmatprep.subr.bf16.mxu0 0
        %2463 = vmatpush1.bf16.msra.mxu0 %v2447
        %2464 = vmatprep.subr.bf16.mxu0 0
        %2465 = vmatpush1.bf16.msra.mxu0 %v2446
        %2466 = vmatprep.subr.bf16.mxu0 0
        %2467 = vmatpush1.bf16.msra.mxu0 %v2445
        %2468 = vmatprep.subr.bf16.mxu0 0
        %2469 = vmatpush1.bf16.msra.mxu0 %v2444
        %2470 = vmatprep.subr.bf16.mxu0 0
        %2471 = vmatpush1.bf16.msra.mxu0 %v2443
        %2472 = vmatprep.subr.bf16.mxu0 0
        %2473 = vmatpush1.bf16.msra.mxu0 %v2442
        %2474 = vmatprep.subr.bf16.mxu0 0
        %2475 = vmatpush2.bf16.msra.mxu0 0
        %2476 = vmatprep.subr.bf16.mxu0 0
        %2477 = vmatpush2.bf16.msra.mxu0 0
        %2478 = vmatprep.subr.bf16.mxu0 0
        %2479 = vmatpush2.bf16.msra.mxu0 0
        %2480 = vmatprep.subr.bf16.mxu0 0
        %2481 = vmatpush2.bf16.msra.mxu0 0
        %2482 = vmatprep.subr.bf16.mxu0 0
        %2483 = vmatpush2.bf16.msra.mxu0 0
        %2484 = vmatprep.subr.bf16.mxu0 0
        %2485 = vmatpush2.bf16.msra.mxu0 0
        %2486 = vmatprep.subr.bf16.mxu0 0
        %2487 = vmatpush2.bf16.msra.mxu0 0
        %2488 = vmatprep.subr.bf16.mxu0 0
        %2489 = vmatpush2.bf16.msra.mxu0 0
        %2490 = vmatprep.mubr.bf16.mxu0 0
        %2491 = vmatmul.mubr.bf16.gmra.mxu0 %v2389
        %v2492 = vpop.f32.mrf.mxu0
        %v2493 = vadd.f32 0.0, %v2492
        %v2494 = vpop.f32.mrf.mxu0
        %v2495 = vpop.f32.mrf.mxu0
        %v2496 = vadd.f32 0.0, %v2495
        %v2497 = vpop.f32.mrf.mxu0
        %2498 = vmatprep.mubr.bf16.mxu0 0
        %2499 = vmatmul.mubr.bf16.gmra.mxu0 %v2390
        %v2500 = vpop.f32.mrf.mxu0
        %v2501 = vadd.f32 0.0, %v2500
        %v2502 = vpop.f32.mrf.mxu0
        %v2503 = vpop.f32.mrf.mxu0
        %v2504 = vadd.f32 0.0, %v2503
        %v2505 = vpop.f32.mrf.mxu0
        %2506 = vmatprep.mubr.bf16.mxu0 0
        %2507 = vmatmul.mubr.bf16.gmra.mxu0 %v2391
        %v2508 = vpop.f32.mrf.mxu0
        %v2509 = vadd.f32 0.0, %v2508
        %v2510 = vpop.f32.mrf.mxu0
        %v2511 = vpop.f32.mrf.mxu0
        %v2512 = vadd.f32 0.0, %v2511
        %v2513 = vpop.f32.mrf.mxu0
        %2514 = vmatprep.mubr.bf16.mxu0 0
        %2515 = vmatmul.mubr.bf16.gmra.mxu0 %v2392
        %v2516 = vpop.f32.mrf.mxu0
        %v2517 = vadd.f32 0.0, %v2516
        %v2518 = vpop.f32.mrf.mxu0
        %v2519 = vpop.f32.mrf.mxu0
        %v2520 = vadd.f32 0.0, %v2519
        %v2521 = vpop.f32.mrf.mxu0
        %2522 = vdwg.mxu0
        %v2523 = vld [vmem:[#allocation4] sm:$0xff]
        %v2524 = vld [vmem:[#allocation4 + $0x8] sm:$0xff]
        %v2525 = vld [vmem:[#allocation4 + $0x10] sm:$0xff]
        %v2526 = vld [vmem:[#allocation4 + $0x18] sm:$0xff]
        %v2527 = vld [vmem:[#allocation4 + $0x20] sm:$0xff]
        %v2528 = vld [vmem:[#allocation4 + $0x28] sm:$0xff]
        %v2529 = vld [vmem:[#allocation4 + $0x30] sm:$0xff]
        %v2530 = vld [vmem:[#allocation4 + $0x38] sm:$0xff]
        %v2531 = vadd.f32 %v2523, %v2493
        %v2532 = vadd.f32 %v2524, %v2496
        %v2533 = vadd.f32 %v2525, %v2501
        %v2534 = vadd.f32 %v2526, %v2504
        %v2535 = vadd.f32 %v2527, %v2509
        %v2536 = vadd.f32 %v2528, %v2512
        %v2537 = vadd.f32 %v2529, %v2517
        %v2538 = vadd.f32 %v2530, %v2520
        %2539 = vst [vmem:[#allocation4] sm:$0xff] %v2531
        %2540 = vst [vmem:[#allocation4 + $0x8] sm:$0xff] %v2532
        %2541 = vst [vmem:[#allocation4 + $0x10] sm:$0xff] %v2533
        %2542 = vst [vmem:[#allocation4 + $0x18] sm:$0xff] %v2534
        %2543 = vst [vmem:[#allocation4 + $0x20] sm:$0xff] %v2535
        %2544 = vst [vmem:[#allocation4 + $0x28] sm:$0xff] %v2536
        %2545 = vst [vmem:[#allocation4 + $0x30] sm:$0xff] %v2537
        %2546 = vst [vmem:[#allocation4 + $0x38] sm:$0xff] %v2538
        %v2547 = vld [vmem:[%s2057] sm:$0xff]
        %v2548 = vld [vmem:[%s2057 + $0x10] sm:$0xff]
        %v2549 = vld [vmem:[%s2057 + $0x20] sm:$0xff]
        %v2550 = vld [vmem:[%s2057 + $0x30] sm:$0xff]
        %v2551 = vld [vmem:[%s2057 + $0x40] sm:$0xff]
        %v2552 = vld [vmem:[%s2057 + $0x50] sm:$0xff]
        %v2553 = vld [vmem:[%s2057 + $0x60] sm:$0xff]
        %v2554 = vld [vmem:[%s2057 + $0x70] sm:$0xff]
        %v2555 = vpack.c.bf16 %v2548, %v2547
        %v2556 = vpack.c.bf16 %v2550, %v2549
        %v2557 = vpack.c.bf16 %v2552, %v2551
        %v2558 = vpack.c.bf16 %v2554, %v2553
        %s2559 = scalar_lea.vmem [#allocation5], 192
        %v2560 = vld [vmem:[%s2559] sm:$0xf]
        %v2561 = vld [vmem:[%s2559 + $0x4] sm:$0xf]
        %v2562 = vld [vmem:[%s2559 + $0x8] sm:$0xf]
        %v2563 = vld [vmem:[%s2559 + $0xc] sm:$0xf]
        %v2564 = vld [vmem:[%s2559 + $0x10] sm:$0xf]
        %v2565 = vld [vmem:[%s2559 + $0x14] sm:$0xf]
        %v2566 = vld [vmem:[%s2559 + $0x18] sm:$0xf]
        %v2567 = vld [vmem:[%s2559 + $0x1c] sm:$0xf]
        %v2568 = vld [vmem:[%s2559 + $0x20] sm:$0xf]
        %v2569 = vld [vmem:[%s2559 + $0x24] sm:$0xf]
        %v2570 = vld [vmem:[%s2559 + $0x28] sm:$0xf]
        %v2571 = vld [vmem:[%s2559 + $0x2c] sm:$0xf]
        %v2572 = vld [vmem:[%s2559 + $0x30] sm:$0xf]
        %v2573 = vld [vmem:[%s2559 + $0x34] sm:$0xf]
        %v2574 = vld [vmem:[%s2559 + $0x38] sm:$0xf]
        %v2575 = vld [vmem:[%s2559 + $0x3c] sm:$0xf]
        %v2592 = vunpack.c.l.b16 %v2560
        %v2593 = vunpack.c.l.b16 %v2561
        %v2594 = vunpack.c.l.b16 %v2562
        %v2595 = vunpack.c.l.b16 %v2563
        %v2596 = vunpack.c.l.b16 %v2564
        %v2597 = vunpack.c.l.b16 %v2565
        %v2598 = vunpack.c.l.b16 %v2566
        %v2599 = vunpack.c.l.b16 %v2567
        %v2600 = vunpack.c.l.b16 %v2568
        %v2601 = vunpack.c.l.b16 %v2569
        %v2602 = vunpack.c.l.b16 %v2570
        %v2603 = vunpack.c.l.b16 %v2571
        %v2604 = vunpack.c.l.b16 %v2572
        %v2605 = vunpack.c.l.b16 %v2573
        %v2606 = vunpack.c.l.b16 %v2574
        %v2607 = vunpack.c.l.b16 %v2575
        %v2608 = vpack.c.b16 %v2593, %v2592
        %v2609 = vpack.c.b16 %v2595, %v2594
        %v2610 = vpack.c.b16 %v2597, %v2596
        %v2611 = vpack.c.b16 %v2599, %v2598
        %v2612 = vpack.c.b16 %v2601, %v2600
        %v2613 = vpack.c.b16 %v2603, %v2602
        %v2614 = vpack.c.b16 %v2605, %v2604
        %v2615 = vpack.c.b16 %v2607, %v2606
        %2624 = vmatprep.subr.bf16.mxu0 0
        %2625 = vmatpush1.bf16.msra.mxu0 %v2615
        %2626 = vmatprep.subr.bf16.mxu0 0
        %2627 = vmatpush1.bf16.msra.mxu0 %v2614
        %2628 = vmatprep.subr.bf16.mxu0 0
        %2629 = vmatpush1.bf16.msra.mxu0 %v2613
        %2630 = vmatprep.subr.bf16.mxu0 0
        %2631 = vmatpush1.bf16.msra.mxu0 %v2612
        %2632 = vmatprep.subr.bf16.mxu0 0
        %2633 = vmatpush1.bf16.msra.mxu0 %v2611
        %2634 = vmatprep.subr.bf16.mxu0 0
        %2635 = vmatpush1.bf16.msra.mxu0 %v2610
        %2636 = vmatprep.subr.bf16.mxu0 0
        %2637 = vmatpush1.bf16.msra.mxu0 %v2609
        %2638 = vmatprep.subr.bf16.mxu0 0
        %2639 = vmatpush1.bf16.msra.mxu0 %v2608
        %2640 = vmatprep.subr.bf16.mxu0 0
        %2641 = vmatpush2.bf16.msra.mxu0 0
        %2642 = vmatprep.subr.bf16.mxu0 0
        %2643 = vmatpush2.bf16.msra.mxu0 0
        %2644 = vmatprep.subr.bf16.mxu0 0
        %2645 = vmatpush2.bf16.msra.mxu0 0
        %2646 = vmatprep.subr.bf16.mxu0 0
        %2647 = vmatpush2.bf16.msra.mxu0 0
        %2648 = vmatprep.subr.bf16.mxu0 0
        %2649 = vmatpush2.bf16.msra.mxu0 0
        %2650 = vmatprep.subr.bf16.mxu0 0
        %2651 = vmatpush2.bf16.msra.mxu0 0
        %2652 = vmatprep.subr.bf16.mxu0 0
        %2653 = vmatpush2.bf16.msra.mxu0 0
        %2654 = vmatprep.subr.bf16.mxu0 0
        %2655 = vmatpush2.bf16.msra.mxu0 0
        %2656 = vmatprep.mubr.bf16.mxu0 0
        %2657 = vmatmul.mubr.bf16.gmra.mxu0 %v2555
        %v2658 = vpop.f32.mrf.mxu0
        %v2659 = vadd.f32 0.0, %v2658
        %v2660 = vpop.f32.mrf.mxu0
        %v2661 = vpop.f32.mrf.mxu0
        %v2662 = vadd.f32 0.0, %v2661
        %v2663 = vpop.f32.mrf.mxu0
        %2664 = vmatprep.mubr.bf16.mxu0 0
        %2665 = vmatmul.mubr.bf16.gmra.mxu0 %v2556
        %v2666 = vpop.f32.mrf.mxu0
        %v2667 = vadd.f32 0.0, %v2666
        %v2668 = vpop.f32.mrf.mxu0
        %v2669 = vpop.f32.mrf.mxu0
        %v2670 = vadd.f32 0.0, %v2669
        %v2671 = vpop.f32.mrf.mxu0
        %2672 = vmatprep.mubr.bf16.mxu0 0
        %2673 = vmatmul.mubr.bf16.gmra.mxu0 %v2557
        %v2674 = vpop.f32.mrf.mxu0
        %v2675 = vadd.f32 0.0, %v2674
        %v2676 = vpop.f32.mrf.mxu0
        %v2677 = vpop.f32.mrf.mxu0
        %v2678 = vadd.f32 0.0, %v2677
        %v2679 = vpop.f32.mrf.mxu0
        %2680 = vmatprep.mubr.bf16.mxu0 0
        %2681 = vmatmul.mubr.bf16.gmra.mxu0 %v2558
        %v2682 = vpop.f32.mrf.mxu0
        %v2683 = vadd.f32 0.0, %v2682
        %v2684 = vpop.f32.mrf.mxu0
        %v2685 = vpop.f32.mrf.mxu0
        %v2686 = vadd.f32 0.0, %v2685
        %v2687 = vpop.f32.mrf.mxu0
        %2688 = vdwg.mxu0
        %v2689 = vld [vmem:[#allocation4] sm:$0xff]
        %v2690 = vld [vmem:[#allocation4 + $0x8] sm:$0xff]
        %v2691 = vld [vmem:[#allocation4 + $0x10] sm:$0xff]
        %v2692 = vld [vmem:[#allocation4 + $0x18] sm:$0xff]
        %v2693 = vld [vmem:[#allocation4 + $0x20] sm:$0xff]
        %v2694 = vld [vmem:[#allocation4 + $0x28] sm:$0xff]
        %v2695 = vld [vmem:[#allocation4 + $0x30] sm:$0xff]
        %v2696 = vld [vmem:[#allocation4 + $0x38] sm:$0xff]
        %v2697 = vadd.f32 %v2689, %v2659
        %v2698 = vadd.f32 %v2690, %v2662
        %v2699 = vadd.f32 %v2691, %v2667
        %v2700 = vadd.f32 %v2692, %v2670
        %v2701 = vadd.f32 %v2693, %v2675
        %v2702 = vadd.f32 %v2694, %v2678
        %v2703 = vadd.f32 %v2695, %v2683
        %v2704 = vadd.f32 %v2696, %v2686
        %2705 = vst [vmem:[#allocation4] sm:$0xff] %v2697
        %2706 = vst [vmem:[#allocation4 + $0x8] sm:$0xff] %v2698
        %2707 = vst [vmem:[#allocation4 + $0x10] sm:$0xff] %v2699
        %2708 = vst [vmem:[#allocation4 + $0x18] sm:$0xff] %v2700
        %2709 = vst [vmem:[#allocation4 + $0x20] sm:$0xff] %v2701
        %2710 = vst [vmem:[#allocation4 + $0x28] sm:$0xff] %v2702
        %2711 = vst [vmem:[#allocation4 + $0x30] sm:$0xff] %v2703
        %2712 = vst [vmem:[#allocation4 + $0x38] sm:$0xff] %v2704
        %v2713 = vld [vmem:[%s2057 + $0x1] sm:$0xff]
        %v2714 = vld [vmem:[%s2057 + $0x11] sm:$0xff]
        %v2715 = vld [vmem:[%s2057 + $0x21] sm:$0xff]
        %v2716 = vld [vmem:[%s2057 + $0x31] sm:$0xff]
        %v2717 = vld [vmem:[%s2057 + $0x41] sm:$0xff]
        %v2718 = vld [vmem:[%s2057 + $0x51] sm:$0xff]
        %v2719 = vld [vmem:[%s2057 + $0x61] sm:$0xff]
        %v2720 = vld [vmem:[%s2057 + $0x71] sm:$0xff]
        %v2721 = vpack.c.bf16 %v2714, %v2713
        %v2722 = vpack.c.bf16 %v2716, %v2715
        %v2723 = vpack.c.bf16 %v2718, %v2717
        %v2724 = vpack.c.bf16 %v2720, %v2719
        %s2725 = scalar_lea.vmem [#allocation5], 256
        %v2726 = vld [vmem:[%s2725] sm:$0xf]
        %v2727 = vld [vmem:[%s2725 + $0x4] sm:$0xf]
        %v2728 = vld [vmem:[%s2725 + $0x8] sm:$0xf]
        %v2729 = vld [vmem:[%s2725 + $0xc] sm:$0xf]
        %v2730 = vld [vmem:[%s2725 + $0x10] sm:$0xf]
        %v2731 = vld [vmem:[%s2725 + $0x14] sm:$0xf]
        %v2732 = vld [vmem:[%s2725 + $0x18] sm:$0xf]
        %v2733 = vld [vmem:[%s2725 + $0x1c] sm:$0xf]
        %v2734 = vld [vmem:[%s2725 + $0x20] sm:$0xf]
        %v2735 = vld [vmem:[%s2725 + $0x24] sm:$0xf]
        %v2736 = vld [vmem:[%s2725 + $0x28] sm:$0xf]
        %v2737 = vld [vmem:[%s2725 + $0x2c] sm:$0xf]
        %v2738 = vld [vmem:[%s2725 + $0x30] sm:$0xf]
        %v2739 = vld [vmem:[%s2725 + $0x34] sm:$0xf]
        %v2740 = vld [vmem:[%s2725 + $0x38] sm:$0xf]
        %v2741 = vld [vmem:[%s2725 + $0x3c] sm:$0xf]
        %v2758 = vunpack.c.l.b16 %v2726
        %v2759 = vunpack.c.l.b16 %v2727
        %v2760 = vunpack.c.l.b16 %v2728
        %v2761 = vunpack.c.l.b16 %v2729
        %v2762 = vunpack.c.l.b16 %v2730
        %v2763 = vunpack.c.l.b16 %v2731
        %v2764 = vunpack.c.l.b16 %v2732
        %v2765 = vunpack.c.l.b16 %v2733
        %v2766 = vunpack.c.l.b16 %v2734
        %v2767 = vunpack.c.l.b16 %v2735
        %v2768 = vunpack.c.l.b16 %v2736
        %v2769 = vunpack.c.l.b16 %v2737
        %v2770 = vunpack.c.l.b16 %v2738
        %v2771 = vunpack.c.l.b16 %v2739
        %v2772 = vunpack.c.l.b16 %v2740
        %v2773 = vunpack.c.l.b16 %v2741
        %v2774 = vpack.c.b16 %v2759, %v2758
        %v2775 = vpack.c.b16 %v2761, %v2760
        %v2776 = vpack.c.b16 %v2763, %v2762
        %v2777 = vpack.c.b16 %v2765, %v2764
        %v2778 = vpack.c.b16 %v2767, %v2766
        %v2779 = vpack.c.b16 %v2769, %v2768
        %v2780 = vpack.c.b16 %v2771, %v2770
        %v2781 = vpack.c.b16 %v2773, %v2772
        %2790 = vmatprep.subr.bf16.mxu0 0
        %2791 = vmatpush1.bf16.msra.mxu0 %v2781
        %2792 = vmatprep.subr.bf16.mxu0 0
        %2793 = vmatpush1.bf16.msra.mxu0 %v2780
        %2794 = vmatprep.subr.bf16.mxu0 0
        %2795 = vmatpush1.bf16.msra.mxu0 %v2779
        %2796 = vmatprep.subr.bf16.mxu0 0
        %2797 = vmatpush1.bf16.msra.mxu0 %v2778
        %2798 = vmatprep.subr.bf16.mxu0 0
        %2799 = vmatpush1.bf16.msra.mxu0 %v2777
        %2800 = vmatprep.subr.bf16.mxu0 0
        %2801 = vmatpush1.bf16.msra.mxu0 %v2776
        %2802 = vmatprep.subr.bf16.mxu0 0
        %2803 = vmatpush1.bf16.msra.mxu0 %v2775
        %2804 = vmatprep.subr.bf16.mxu0 0
        %2805 = vmatpush1.bf16.msra.mxu0 %v2774
        %2806 = vmatprep.subr.bf16.mxu0 0
        %2807 = vmatpush2.bf16.msra.mxu0 0
        %2808 = vmatprep.subr.bf16.mxu0 0
        %2809 = vmatpush2.bf16.msra.mxu0 0
        %2810 = vmatprep.subr.bf16.mxu0 0
        %2811 = vmatpush2.bf16.msra.mxu0 0
        %2812 = vmatprep.subr.bf16.mxu0 0
        %2813 = vmatpush2.bf16.msra.mxu0 0
        %2814 = vmatprep.subr.bf16.mxu0 0
        %2815 = vmatpush2.bf16.msra.mxu0 0
        %2816 = vmatprep.subr.bf16.mxu0 0
        %2817 = vmatpush2.bf16.msra.mxu0 0
        %2818 = vmatprep.subr.bf16.mxu0 0
        %2819 = vmatpush2.bf16.msra.mxu0 0
        %2820 = vmatprep.subr.bf16.mxu0 0
        %2821 = vmatpush2.bf16.msra.mxu0 0
        %2822 = vmatprep.mubr.bf16.mxu0 0
        %2823 = vmatmul.mubr.bf16.gmra.mxu0 %v2721
        %v2824 = vpop.f32.mrf.mxu0
        %v2825 = vadd.f32 0.0, %v2824
        %v2826 = vpop.f32.mrf.mxu0
        %v2827 = vpop.f32.mrf.mxu0
        %v2828 = vadd.f32 0.0, %v2827
        %v2829 = vpop.f32.mrf.mxu0
        %2830 = vmatprep.mubr.bf16.mxu0 0
        %2831 = vmatmul.mubr.bf16.gmra.mxu0 %v2722
        %v2832 = vpop.f32.mrf.mxu0
        %v2833 = vadd.f32 0.0, %v2832
        %v2834 = vpop.f32.mrf.mxu0
        %v2835 = vpop.f32.mrf.mxu0
        %v2836 = vadd.f32 0.0, %v2835
        %v2837 = vpop.f32.mrf.mxu0
        %2838 = vmatprep.mubr.bf16.mxu0 0
        %2839 = vmatmul.mubr.bf16.gmra.mxu0 %v2723
        %v2840 = vpop.f32.mrf.mxu0
        %v2841 = vadd.f32 0.0, %v2840
        %v2842 = vpop.f32.mrf.mxu0
        %v2843 = vpop.f32.mrf.mxu0
        %v2844 = vadd.f32 0.0, %v2843
        %v2845 = vpop.f32.mrf.mxu0
        %2846 = vmatprep.mubr.bf16.mxu0 0
        %2847 = vmatmul.mubr.bf16.gmra.mxu0 %v2724
        %v2848 = vpop.f32.mrf.mxu0
        %v2849 = vadd.f32 0.0, %v2848
        %v2850 = vpop.f32.mrf.mxu0
        %v2851 = vpop.f32.mrf.mxu0
        %v2852 = vadd.f32 0.0, %v2851
        %v2853 = vpop.f32.mrf.mxu0
        %2854 = vdwg.mxu0
        %v2855 = vld [vmem:[#allocation4] sm:$0xff]
        %v2856 = vld [vmem:[#allocation4 + $0x8] sm:$0xff]
        %v2857 = vld [vmem:[#allocation4 + $0x10] sm:$0xff]
        %v2858 = vld [vmem:[#allocation4 + $0x18] sm:$0xff]
        %v2859 = vld [vmem:[#allocation4 + $0x20] sm:$0xff]
        %v2860 = vld [vmem:[#allocation4 + $0x28] sm:$0xff]
        %v2861 = vld [vmem:[#allocation4 + $0x30] sm:$0xff]
        %v2862 = vld [vmem:[#allocation4 + $0x38] sm:$0xff]
        %v2863 = vadd.f32 %v2855, %v2825
        %v2864 = vadd.f32 %v2856, %v2828
        %v2865 = vadd.f32 %v2857, %v2833
        %v2866 = vadd.f32 %v2858, %v2836
        %v2867 = vadd.f32 %v2859, %v2841
        %v2868 = vadd.f32 %v2860, %v2844
        %v2869 = vadd.f32 %v2861, %v2849
        %v2870 = vadd.f32 %v2862, %v2852
        %2871 = vst [vmem:[#allocation4] sm:$0xff] %v2863
        %2872 = vst [vmem:[#allocation4 + $0x8] sm:$0xff] %v2864
        %2873 = vst [vmem:[#allocation4 + $0x10] sm:$0xff] %v2865
        %2874 = vst [vmem:[#allocation4 + $0x18] sm:$0xff] %v2866
        %2875 = vst [vmem:[#allocation4 + $0x20] sm:$0xff] %v2867
        %2876 = vst [vmem:[#allocation4 + $0x28] sm:$0xff] %v2868
        %2877 = vst [vmem:[#allocation4 + $0x30] sm:$0xff] %v2869
        %2878 = vst [vmem:[#allocation4 + $0x38] sm:$0xff] %v2870
        %v2879 = vld [vmem:[%s2057 + $0x2] sm:$0xff]
        %v2880 = vld [vmem:[%s2057 + $0x12] sm:$0xff]
        %v2881 = vld [vmem:[%s2057 + $0x22] sm:$0xff]
        %v2882 = vld [vmem:[%s2057 + $0x32] sm:$0xff]
        %v2883 = vld [vmem:[%s2057 + $0x42] sm:$0xff]
        %v2884 = vld [vmem:[%s2057 + $0x52] sm:$0xff]
        %v2885 = vld [vmem:[%s2057 + $0x62] sm:$0xff]
        %v2886 = vld [vmem:[%s2057 + $0x72] sm:$0xff]
        %v2887 = vpack.c.bf16 %v2880, %v2879
        %v2888 = vpack.c.bf16 %v2882, %v2881
        %v2889 = vpack.c.bf16 %v2884, %v2883
        %v2890 = vpack.c.bf16 %v2886, %v2885
        %s2891 = scalar_lea.vmem [#allocation5], 320
        %v2892 = vld [vmem:[%s2891] sm:$0xf]
        %v2893 = vld [vmem:[%s2891 + $0x4] sm:$0xf]
        %v2894 = vld [vmem:[%s2891 + $0x8] sm:$0xf]
        %v2895 = vld [vmem:[%s2891 + $0xc] sm:$0xf]
        %v2896 = vld [vmem:[%s2891 + $0x10] sm:$0xf]
        %v2897 = vld [vmem:[%s2891 + $0x14] sm:$0xf]
        %v2898 = vld [vmem:[%s2891 + $0x18] sm:$0xf]
        %v2899 = vld [vmem:[%s2891 + $0x1c] sm:$0xf]
        %v2900 = vld [vmem:[%s2891 + $0x20] sm:$0xf]
        %v2901 = vld [vmem:[%s2891 + $0x24] sm:$0xf]
        %v2902 = vld [vmem:[%s2891 + $0x28] sm:$0xf]
        %v2903 = vld [vmem:[%s2891 + $0x2c] sm:$0xf]
        %v2904 = vld [vmem:[%s2891 + $0x30] sm:$0xf]
        %v2905 = vld [vmem:[%s2891 + $0x34] sm:$0xf]
        %v2906 = vld [vmem:[%s2891 + $0x38] sm:$0xf]
        %v2907 = vld [vmem:[%s2891 + $0x3c] sm:$0xf]
        %v2924 = vunpack.c.l.b16 %v2892
        %v2925 = vunpack.c.l.b16 %v2893
        %v2926 = vunpack.c.l.b16 %v2894
        %v2927 = vunpack.c.l.b16 %v2895
        %v2928 = vunpack.c.l.b16 %v2896
        %v2929 = vunpack.c.l.b16 %v2897
        %v2930 = vunpack.c.l.b16 %v2898
        %v2931 = vunpack.c.l.b16 %v2899
        %v2932 = vunpack.c.l.b16 %v2900
        %v2933 = vunpack.c.l.b16 %v2901
        %v2934 = vunpack.c.l.b16 %v2902
        %v2935 = vunpack.c.l.b16 %v2903
        %v2936 = vunpack.c.l.b16 %v2904
        %v2937 = vunpack.c.l.b16 %v2905
        %v2938 = vunpack.c.l.b16 %v2906
        %v2939 = vunpack.c.l.b16 %v2907
        %v2940 = vpack.c.b16 %v2925, %v2924
        %v2941 = vpack.c.b16 %v2927, %v2926
        %v2942 = vpack.c.b16 %v2929, %v2928
        %v2943 = vpack.c.b16 %v2931, %v2930
        %v2944 = vpack.c.b16 %v2933, %v2932
        %v2945 = vpack.c.b16 %v2935, %v2934
        %v2946 = vpack.c.b16 %v2937, %v2936
        %v2947 = vpack.c.b16 %v2939, %v2938
        %2956 = vmatprep.subr.bf16.mxu0 0
        %2957 = vmatpush1.bf16.msra.mxu0 %v2947
        %2958 = vmatprep.subr.bf16.mxu0 0
        %2959 = vmatpush1.bf16.msra.mxu0 %v2946
        %2960 = vmatprep.subr.bf16.mxu0 0
        %2961 = vmatpush1.bf16.msra.mxu0 %v2945
        %2962 = vmatprep.subr.bf16.mxu0 0
        %2963 = vmatpush1.bf16.msra.mxu0 %v2944
        %2964 = vmatprep.subr.bf16.mxu0 0
        %2965 = vmatpush1.bf16.msra.mxu0 %v2943
        %2966 = vmatprep.subr.bf16.mxu0 0
        %2967 = vmatpush1.bf16.msra.mxu0 %v2942
        %2968 = vmatprep.subr.bf16.mxu0 0
        %2969 = vmatpush1.bf16.msra.mxu0 %v2941
        %2970 = vmatprep.subr.bf16.mxu0 0
        %2971 = vmatpush1.bf16.msra.mxu0 %v2940
        %2972 = vmatprep.subr.bf16.mxu0 0
        %2973 = vmatpush2.bf16.msra.mxu0 0
        %2974 = vmatprep.subr.bf16.mxu0 0
        %2975 = vmatpush2.bf16.msra.mxu0 0
        %2976 = vmatprep.subr.bf16.mxu0 0
        %2977 = vmatpush2.bf16.msra.mxu0 0
        %2978 = vmatprep.subr.bf16.mxu0 0
        %2979 = vmatpush2.bf16.msra.mxu0 0
        %2980 = vmatprep.subr.bf16.mxu0 0
        %2981 = vmatpush2.bf16.msra.mxu0 0
        %2982 = vmatprep.subr.bf16.mxu0 0
        %2983 = vmatpush2.bf16.msra.mxu0 0
        %2984 = vmatprep.subr.bf16.mxu0 0
        %2985 = vmatpush2.bf16.msra.mxu0 0
        %2986 = vmatprep.subr.bf16.mxu0 0
        %2987 = vmatpush2.bf16.msra.mxu0 0
        %2988 = vmatprep.mubr.bf16.mxu0 0
        %2989 = vmatmul.mubr.bf16.gmra.mxu0 %v2887
        %v2990 = vpop.f32.mrf.mxu0
        %v2991 = vadd.f32 0.0, %v2990
        %v2992 = vpop.f32.mrf.mxu0
        %v2993 = vpop.f32.mrf.mxu0
        %v2994 = vadd.f32 0.0, %v2993
        %v2995 = vpop.f32.mrf.mxu0
        %2996 = vmatprep.mubr.bf16.mxu0 0
        %2997 = vmatmul.mubr.bf16.gmra.mxu0 %v2888
        %v2998 = vpop.f32.mrf.mxu0
        %v2999 = vadd.f32 0.0, %v2998
        %v3000 = vpop.f32.mrf.mxu0
        %v3001 = vpop.f32.mrf.mxu0
        %v3002 = vadd.f32 0.0, %v3001
        %v3003 = vpop.f32.mrf.mxu0
        %3004 = vmatprep.mubr.bf16.mxu0 0
        %3005 = vmatmul.mubr.bf16.gmra.mxu0 %v2889
        %v3006 = vpop.f32.mrf.mxu0
        %v3007 = vadd.f32 0.0, %v3006
        %v3008 = vpop.f32.mrf.mxu0
        %v3009 = vpop.f32.mrf.mxu0
        %v3010 = vadd.f32 0.0, %v3009
        %v3011 = vpop.f32.mrf.mxu0
        %3012 = vmatprep.mubr.bf16.mxu0 0
        %3013 = vmatmul.mubr.bf16.gmra.mxu0 %v2890
        %v3014 = vpop.f32.mrf.mxu0
        %v3015 = vadd.f32 0.0, %v3014
        %v3016 = vpop.f32.mrf.mxu0
        %v3017 = vpop.f32.mrf.mxu0
        %v3018 = vadd.f32 0.0, %v3017
        %v3019 = vpop.f32.mrf.mxu0
        %3020 = vdwg.mxu0
        %v3021 = vld [vmem:[#allocation4] sm:$0xff]
        %v3022 = vld [vmem:[#allocation4 + $0x8] sm:$0xff]
        %v3023 = vld [vmem:[#allocation4 + $0x10] sm:$0xff]
        %v3024 = vld [vmem:[#allocation4 + $0x18] sm:$0xff]
        %v3025 = vld [vmem:[#allocation4 + $0x20] sm:$0xff]
        %v3026 = vld [vmem:[#allocation4 + $0x28] sm:$0xff]
        %v3027 = vld [vmem:[#allocation4 + $0x30] sm:$0xff]
        %v3028 = vld [vmem:[#allocation4 + $0x38] sm:$0xff]
        %v3029 = vadd.f32 %v3021, %v2991
        %v3030 = vadd.f32 %v3022, %v2994
        %v3031 = vadd.f32 %v3023, %v2999
        %v3032 = vadd.f32 %v3024, %v3002
        %v3033 = vadd.f32 %v3025, %v3007
        %v3034 = vadd.f32 %v3026, %v3010
        %v3035 = vadd.f32 %v3027, %v3015
        %v3036 = vadd.f32 %v3028, %v3018
        %3037 = vst [vmem:[#allocation4] sm:$0xff] %v3029
        %3038 = vst [vmem:[#allocation4 + $0x8] sm:$0xff] %v3030
        %3039 = vst [vmem:[#allocation4 + $0x10] sm:$0xff] %v3031
        %3040 = vst [vmem:[#allocation4 + $0x18] sm:$0xff] %v3032
        %3041 = vst [vmem:[#allocation4 + $0x20] sm:$0xff] %v3033
        %3042 = vst [vmem:[#allocation4 + $0x28] sm:$0xff] %v3034
        %3043 = vst [vmem:[#allocation4 + $0x30] sm:$0xff] %v3035
        %3044 = vst [vmem:[#allocation4 + $0x38] sm:$0xff] %v3036
        %s3045 = scalar_lea.vmem [#allocation2], 32
        %v3046 = vld [vmem:[%s3045] sm:$0xff]
        %v3047 = vld [vmem:[%s3045 + $0x10] sm:$0xff]
        %v3048 = vld [vmem:[%s3045 + $0x20] sm:$0xff]
        %v3049 = vld [vmem:[%s3045 + $0x30] sm:$0xff]
        %v3050 = vld [vmem:[%s3045 + $0x40] sm:$0xff]
        %v3051 = vld [vmem:[%s3045 + $0x50] sm:$0xff]
        %v3052 = vld [vmem:[%s3045 + $0x60] sm:$0xff]
        %v3053 = vld [vmem:[%s3045 + $0x70] sm:$0xff]
        %v3054 = vpack.c.bf16 %v3047, %v3046
        %v3055 = vpack.c.bf16 %v3049, %v3048
        %v3056 = vpack.c.bf16 %v3051, %v3050
        %v3057 = vpack.c.bf16 %v3053, %v3052
        %s3058 = scalar_lea.vmem [#allocation5], 384
        %v3059 = vld [vmem:[%s3058] sm:$0xf]
        %v3060 = vld [vmem:[%s3058 + $0x4] sm:$0xf]
        %v3061 = vld [vmem:[%s3058 + $0x8] sm:$0xf]
        %v3062 = vld [vmem:[%s3058 + $0xc] sm:$0xf]
        %v3063 = vld [vmem:[%s3058 + $0x10] sm:$0xf]
        %v3064 = vld [vmem:[%s3058 + $0x14] sm:$0xf]
        %v3065 = vld [vmem:[%s3058 + $0x18] sm:$0xf]
        %v3066 = vld [vmem:[%s3058 + $0x1c] sm:$0xf]
        %v3067 = vld [vmem:[%s3058 + $0x20] sm:$0xf]
        %v3068 = vld [vmem:[%s3058 + $0x24] sm:$0xf]
        %v3069 = vld [vmem:[%s3058 + $0x28] sm:$0xf]
        %v3070 = vld [vmem:[%s3058 + $0x2c] sm:$0xf]
        %v3071 = vld [vmem:[%s3058 + $0x30] sm:$0xf]
        %v3072 = vld [vmem:[%s3058 + $0x34] sm:$0xf]
        %v3073 = vld [vmem:[%s3058 + $0x38] sm:$0xf]
        %v3074 = vld [vmem:[%s3058 + $0x3c] sm:$0xf]
        %v3091 = vunpack.c.l.b16 %v3059
        %v3092 = vunpack.c.l.b16 %v3060
        %v3093 = vunpack.c.l.b16 %v3061
        %v3094 = vunpack.c.l.b16 %v3062
        %v3095 = vunpack.c.l.b16 %v3063
        %v3096 = vunpack.c.l.b16 %v3064
        %v3097 = vunpack.c.l.b16 %v3065
        %v3098 = vunpack.c.l.b16 %v3066
        %v3099 = vunpack.c.l.b16 %v3067
        %v3100 = vunpack.c.l.b16 %v3068
        %v3101 = vunpack.c.l.b16 %v3069
        %v3102 = vunpack.c.l.b16 %v3070
        %v3103 = vunpack.c.l.b16 %v3071
        %v3104 = vunpack.c.l.b16 %v3072
        %v3105 = vunpack.c.l.b16 %v3073
        %v3106 = vunpack.c.l.b16 %v3074
        %v3107 = vpack.c.b16 %v3092, %v3091
        %v3108 = vpack.c.b16 %v3094, %v3093
        %v3109 = vpack.c.b16 %v3096, %v3095
        %v3110 = vpack.c.b16 %v3098, %v3097
        %v3111 = vpack.c.b16 %v3100, %v3099
        %v3112 = vpack.c.b16 %v3102, %v3101
        %v3113 = vpack.c.b16 %v3104, %v3103
        %v3114 = vpack.c.b16 %v3106, %v3105
        %3123 = vmatprep.subr.bf16.mxu0 0
        %3124 = vmatpush1.bf16.msra.mxu0 %v3114
        %3125 = vmatprep.subr.bf16.mxu0 0
        %3126 = vmatpush1.bf16.msra.mxu0 %v3113
        %3127 = vmatprep.subr.bf16.mxu0 0
        %3128 = vmatpush1.bf16.msra.mxu0 %v3112
        %3129 = vmatprep.subr.bf16.mxu0 0
        %3130 = vmatpush1.bf16.msra.mxu0 %v3111
        %3131 = vmatprep.subr.bf16.mxu0 0
        %3132 = vmatpush1.bf16.msra.mxu0 %v3110
        %3133 = vmatprep.subr.bf16.mxu0 0
        %3134 = vmatpush1.bf16.msra.mxu0 %v3109
        %3135 = vmatprep.subr.bf16.mxu0 0
        %3136 = vmatpush1.bf16.msra.mxu0 %v3108
        %3137 = vmatprep.subr.bf16.mxu0 0
        %3138 = vmatpush1.bf16.msra.mxu0 %v3107
        %3139 = vmatprep.subr.bf16.mxu0 0
        %3140 = vmatpush2.bf16.msra.mxu0 0
        %3141 = vmatprep.subr.bf16.mxu0 0
        %3142 = vmatpush2.bf16.msra.mxu0 0
        %3143 = vmatprep.subr.bf16.mxu0 0
        %3144 = vmatpush2.bf16.msra.mxu0 0
        %3145 = vmatprep.subr.bf16.mxu0 0
        %3146 = vmatpush2.bf16.msra.mxu0 0
        %3147 = vmatprep.subr.bf16.mxu0 0
        %3148 = vmatpush2.bf16.msra.mxu0 0
        %3149 = vmatprep.subr.bf16.mxu0 0
        %3150 = vmatpush2.bf16.msra.mxu0 0
        %3151 = vmatprep.subr.bf16.mxu0 0
        %3152 = vmatpush2.bf16.msra.mxu0 0
        %3153 = vmatprep.subr.bf16.mxu0 0
        %3154 = vmatpush2.bf16.msra.mxu0 0
        %3155 = vmatprep.mubr.bf16.mxu0 0
        %3156 = vmatmul.mubr.bf16.gmra.mxu0 %v3054
        %v3157 = vpop.f32.mrf.mxu0
        %v3158 = vadd.f32 0.0, %v3157
        %v3159 = vpop.f32.mrf.mxu0
        %v3160 = vpop.f32.mrf.mxu0
        %v3161 = vadd.f32 0.0, %v3160
        %v3162 = vpop.f32.mrf.mxu0
        %3163 = vmatprep.mubr.bf16.mxu0 0
        %3164 = vmatmul.mubr.bf16.gmra.mxu0 %v3055
        %v3165 = vpop.f32.mrf.mxu0
        %v3166 = vadd.f32 0.0, %v3165
        %v3167 = vpop.f32.mrf.mxu0
        %v3168 = vpop.f32.mrf.mxu0
        %v3169 = vadd.f32 0.0, %v3168
        %v3170 = vpop.f32.mrf.mxu0
        %3171 = vmatprep.mubr.bf16.mxu0 0
        %3172 = vmatmul.mubr.bf16.gmra.mxu0 %v3056
        %v3173 = vpop.f32.mrf.mxu0
        %v3174 = vadd.f32 0.0, %v3173
        %v3175 = vpop.f32.mrf.mxu0
        %v3176 = vpop.f32.mrf.mxu0
        %v3177 = vadd.f32 0.0, %v3176
        %v3178 = vpop.f32.mrf.mxu0
        %3179 = vmatprep.mubr.bf16.mxu0 0
        %3180 = vmatmul.mubr.bf16.gmra.mxu0 %v3057
        %v3181 = vpop.f32.mrf.mxu0
        %v3182 = vadd.f32 0.0, %v3181
        %v3183 = vpop.f32.mrf.mxu0
        %v3184 = vpop.f32.mrf.mxu0
        %v3185 = vadd.f32 0.0, %v3184
        %v3186 = vpop.f32.mrf.mxu0
        %3187 = vdwg.mxu0
        %v3188 = vld [vmem:[#allocation4] sm:$0xff]
        %v3189 = vld [vmem:[#allocation4 + $0x8] sm:$0xff]
        %v3190 = vld [vmem:[#allocation4 + $0x10] sm:$0xff]
        %v3191 = vld [vmem:[#allocation4 + $0x18] sm:$0xff]
        %v3192 = vld [vmem:[#allocation4 + $0x20] sm:$0xff]
        %v3193 = vld [vmem:[#allocation4 + $0x28] sm:$0xff]
        %v3194 = vld [vmem:[#allocation4 + $0x30] sm:$0xff]
        %v3195 = vld [vmem:[#allocation4 + $0x38] sm:$0xff]
        %v3196 = vadd.f32 %v3188, %v3158
        %v3197 = vadd.f32 %v3189, %v3161
        %v3198 = vadd.f32 %v3190, %v3166
        %v3199 = vadd.f32 %v3191, %v3169
        %v3200 = vadd.f32 %v3192, %v3174
        %v3201 = vadd.f32 %v3193, %v3177
        %v3202 = vadd.f32 %v3194, %v3182
        %v3203 = vadd.f32 %v3195, %v3185
        %3204 = vst [vmem:[#allocation4] sm:$0xff] %v3196
        %3205 = vst [vmem:[#allocation4 + $0x8] sm:$0xff] %v3197
        %3206 = vst [vmem:[#allocation4 + $0x10] sm:$0xff] %v3198
        %3207 = vst [vmem:[#allocation4 + $0x18] sm:$0xff] %v3199
        %3208 = vst [vmem:[#allocation4 + $0x20] sm:$0xff] %v3200
        %3209 = vst [vmem:[#allocation4 + $0x28] sm:$0xff] %v3201
        %3210 = vst [vmem:[#allocation4 + $0x30] sm:$0xff] %v3202
        %3211 = vst [vmem:[#allocation4 + $0x38] sm:$0xff] %v3203
        %v3212 = vld [vmem:[%s3045 + $0x1] sm:$0xff]
        %v3213 = vld [vmem:[%s3045 + $0x11] sm:$0xff]
        %v3214 = vld [vmem:[%s3045 + $0x21] sm:$0xff]
        %v3215 = vld [vmem:[%s3045 + $0x31] sm:$0xff]
        %v3216 = vld [vmem:[%s3045 + $0x41] sm:$0xff]
        %v3217 = vld [vmem:[%s3045 + $0x51] sm:$0xff]
        %v3218 = vld [vmem:[%s3045 + $0x61] sm:$0xff]
        %v3219 = vld [vmem:[%s3045 + $0x71] sm:$0xff]
        %v3220 = vpack.c.bf16 %v3213, %v3212
        %v3221 = vpack.c.bf16 %v3215, %v3214
        %v3222 = vpack.c.bf16 %v3217, %v3216
        %v3223 = vpack.c.bf16 %v3219, %v3218
        %s3224 = scalar_lea.vmem [#allocation5], 448
        %v3225 = vld [vmem:[%s3224] sm:$0xf]
        %v3226 = vld [vmem:[%s3224 + $0x4] sm:$0xf]
        %v3227 = vld [vmem:[%s3224 + $0x8] sm:$0xf]
        %v3228 = vld [vmem:[%s3224 + $0xc] sm:$0xf]
        %v3229 = vld [vmem:[%s3224 + $0x10] sm:$0xf]
        %v3230 = vld [vmem:[%s3224 + $0x14] sm:$0xf]
        %v3231 = vld [vmem:[%s3224 + $0x18] sm:$0xf]
        %v3232 = vld [vmem:[%s3224 + $0x1c] sm:$0xf]
        %v3233 = vld [vmem:[%s3224 + $0x20] sm:$0xf]
        %v3234 = vld [vmem:[%s3224 + $0x24] sm:$0xf]
        %v3235 = vld [vmem:[%s3224 + $0x28] sm:$0xf]
        %v3236 = vld [vmem:[%s3224 + $0x2c] sm:$0xf]
        %v3237 = vld [vmem:[%s3224 + $0x30] sm:$0xf]
        %v3238 = vld [vmem:[%s3224 + $0x34] sm:$0xf]
        %v3239 = vld [vmem:[%s3224 + $0x38] sm:$0xf]
        %v3240 = vld [vmem:[%s3224 + $0x3c] sm:$0xf]
        %v3257 = vunpack.c.l.b16 %v3225
        %v3258 = vunpack.c.l.b16 %v3226
        %v3259 = vunpack.c.l.b16 %v3227
        %v3260 = vunpack.c.l.b16 %v3228
        %v3261 = vunpack.c.l.b16 %v3229
        %v3262 = vunpack.c.l.b16 %v3230
        %v3263 = vunpack.c.l.b16 %v3231
        %v3264 = vunpack.c.l.b16 %v3232
        %v3265 = vunpack.c.l.b16 %v3233
        %v3266 = vunpack.c.l.b16 %v3234
        %v3267 = vunpack.c.l.b16 %v3235
        %v3268 = vunpack.c.l.b16 %v3236
        %v3269 = vunpack.c.l.b16 %v3237
        %v3270 = vunpack.c.l.b16 %v3238
        %v3271 = vunpack.c.l.b16 %v3239
        %v3272 = vunpack.c.l.b16 %v3240
        %v3273 = vpack.c.b16 %v3258, %v3257
        %v3274 = vpack.c.b16 %v3260, %v3259
        %v3275 = vpack.c.b16 %v3262, %v3261
        %v3276 = vpack.c.b16 %v3264, %v3263
        %v3277 = vpack.c.b16 %v3266, %v3265
        %v3278 = vpack.c.b16 %v3268, %v3267
        %v3279 = vpack.c.b16 %v3270, %v3269
        %v3280 = vpack.c.b16 %v3272, %v3271
        %3289 = vmatprep.subr.bf16.mxu0 0
        %3290 = vmatpush1.bf16.msra.mxu0 %v3280
        %3291 = vmatprep.subr.bf16.mxu0 0
        %3292 = vmatpush1.bf16.msra.mxu0 %v3279
        %3293 = vmatprep.subr.bf16.mxu0 0
        %3294 = vmatpush1.bf16.msra.mxu0 %v3278
        %3295 = vmatprep.subr.bf16.mxu0 0
        %3296 = vmatpush1.bf16.msra.mxu0 %v3277
        %3297 = vmatprep.subr.bf16.mxu0 0
        %3298 = vmatpush1.bf16.msra.mxu0 %v3276
        %3299 = vmatprep.subr.bf16.mxu0 0
        %3300 = vmatpush1.bf16.msra.mxu0 %v3275
        %3301 = vmatprep.subr.bf16.mxu0 0
        %3302 = vmatpush1.bf16.msra.mxu0 %v3274
        %3303 = vmatprep.subr.bf16.mxu0 0
        %3304 = vmatpush1.bf16.msra.mxu0 %v3273
        %3305 = vmatprep.subr.bf16.mxu0 0
        %3306 = vmatpush2.bf16.msra.mxu0 0
        %3307 = vmatprep.subr.bf16.mxu0 0
        %3308 = vmatpush2.bf16.msra.mxu0 0
        %3309 = vmatprep.subr.bf16.mxu0 0
        %3310 = vmatpush2.bf16.msra.mxu0 0
        %3311 = vmatprep.subr.bf16.mxu0 0
        %3312 = vmatpush2.bf16.msra.mxu0 0
        %3313 = vmatprep.subr.bf16.mxu0 0
        %3314 = vmatpush2.bf16.msra.mxu0 0
        %3315 = vmatprep.subr.bf16.mxu0 0
        %3316 = vmatpush2.bf16.msra.mxu0 0
        %3317 = vmatprep.subr.bf16.mxu0 0
        %3318 = vmatpush2.bf16.msra.mxu0 0
        %3319 = vmatprep.subr.bf16.mxu0 0
        %3320 = vmatpush2.bf16.msra.mxu0 0
        %3321 = vmatprep.mubr.bf16.mxu0 0
        %3322 = vmatmul.mubr.bf16.gmra.mxu0 %v3220
        %v3323 = vpop.f32.mrf.mxu0
        %v3324 = vadd.f32 0.0, %v3323
        %v3325 = vpop.f32.mrf.mxu0
        %v3326 = vpop.f32.mrf.mxu0
        %v3327 = vadd.f32 0.0, %v3326
        %v3328 = vpop.f32.mrf.mxu0
        %3329 = vmatprep.mubr.bf16.mxu0 0
        %3330 = vmatmul.mubr.bf16.gmra.mxu0 %v3221
        %v3331 = vpop.f32.mrf.mxu0
        %v3332 = vadd.f32 0.0, %v3331
        %v3333 = vpop.f32.mrf.mxu0
        %v3334 = vpop.f32.mrf.mxu0
        %v3335 = vadd.f32 0.0, %v3334
        %v3336 = vpop.f32.mrf.mxu0
        %3337 = vmatprep.mubr.bf16.mxu0 0
        %3338 = vmatmul.mubr.bf16.gmra.mxu0 %v3222
        %v3339 = vpop.f32.mrf.mxu0
        %v3340 = vadd.f32 0.0, %v3339
        %v3341 = vpop.f32.mrf.mxu0
        %v3342 = vpop.f32.mrf.mxu0
        %v3343 = vadd.f32 0.0, %v3342
        %v3344 = vpop.f32.mrf.mxu0
        %3345 = vmatprep.mubr.bf16.mxu0 0
        %3346 = vmatmul.mubr.bf16.gmra.mxu0 %v3223
        %v3347 = vpop.f32.mrf.mxu0
        %v3348 = vadd.f32 0.0, %v3347
        %v3349 = vpop.f32.mrf.mxu0
        %v3350 = vpop.f32.mrf.mxu0
        %v3351 = vadd.f32 0.0, %v3350
        %v3352 = vpop.f32.mrf.mxu0
        %3353 = vdwg.mxu0
        %v3354 = vld [vmem:[#allocation4] sm:$0xff]
        %v3355 = vld [vmem:[#allocation4 + $0x8] sm:$0xff]
        %v3356 = vld [vmem:[#allocation4 + $0x10] sm:$0xff]
        %v3357 = vld [vmem:[#allocation4 + $0x18] sm:$0xff]
        %v3358 = vld [vmem:[#allocation4 + $0x20] sm:$0xff]
        %v3359 = vld [vmem:[#allocation4 + $0x28] sm:$0xff]
        %v3360 = vld [vmem:[#allocation4 + $0x30] sm:$0xff]
        %v3361 = vld [vmem:[#allocation4 + $0x38] sm:$0xff]
        %v3362 = vadd.f32 %v3354, %v3324
        %v3363 = vadd.f32 %v3355, %v3327
        %v3364 = vadd.f32 %v3356, %v3332
        %v3365 = vadd.f32 %v3357, %v3335
        %v3366 = vadd.f32 %v3358, %v3340
        %v3367 = vadd.f32 %v3359, %v3343
        %v3368 = vadd.f32 %v3360, %v3348
        %v3369 = vadd.f32 %v3361, %v3351
        %3370 = vst [vmem:[#allocation4] sm:$0xff] %v3362
        %3371 = vst [vmem:[#allocation4 + $0x8] sm:$0xff] %v3363
        %3372 = vst [vmem:[#allocation4 + $0x10] sm:$0xff] %v3364
        %3373 = vst [vmem:[#allocation4 + $0x18] sm:$0xff] %v3365
        %3374 = vst [vmem:[#allocation4 + $0x20] sm:$0xff] %v3366
        %3375 = vst [vmem:[#allocation4 + $0x28] sm:$0xff] %v3367
        %3376 = vst [vmem:[#allocation4 + $0x30] sm:$0xff] %v3368
        %3377 = vst [vmem:[#allocation4 + $0x38] sm:$0xff] %v3369
        %v3378 = vld [vmem:[%s3045 + $0x2] sm:$0xff]
        %v3379 = vld [vmem:[%s3045 + $0x12] sm:$0xff]
        %v3380 = vld [vmem:[%s3045 + $0x22] sm:$0xff]
        %v3381 = vld [vmem:[%s3045 + $0x32] sm:$0xff]
        %v3382 = vld [vmem:[%s3045 + $0x42] sm:$0xff]
        %v3383 = vld [vmem:[%s3045 + $0x52] sm:$0xff]
        %v3384 = vld [vmem:[%s3045 + $0x62] sm:$0xff]
        %v3385 = vld [vmem:[%s3045 + $0x72] sm:$0xff]
        %v3386 = vpack.c.bf16 %v3379, %v3378
        %v3387 = vpack.c.bf16 %v3381, %v3380
        %v3388 = vpack.c.bf16 %v3383, %v3382
        %v3389 = vpack.c.bf16 %v3385, %v3384
        %s3390 = scalar_lea.vmem [#allocation5], 512
        %v3391 = vld [vmem:[%s3390] sm:$0xf]
        %v3392 = vld [vmem:[%s3390 + $0x4] sm:$0xf]
        %v3393 = vld [vmem:[%s3390 + $0x8] sm:$0xf]
        %v3394 = vld [vmem:[%s3390 + $0xc] sm:$0xf]
        %v3395 = vld [vmem:[%s3390 + $0x10] sm:$0xf]
        %v3396 = vld [vmem:[%s3390 + $0x14] sm:$0xf]
        %v3397 = vld [vmem:[%s3390 + $0x18] sm:$0xf]
        %v3398 = vld [vmem:[%s3390 + $0x1c] sm:$0xf]
        %v3399 = vld [vmem:[%s3390 + $0x20] sm:$0xf]
        %v3400 = vld [vmem:[%s3390 + $0x24] sm:$0xf]
        %v3401 = vld [vmem:[%s3390 + $0x28] sm:$0xf]
        %v3402 = vld [vmem:[%s3390 + $0x2c] sm:$0xf]
        %v3403 = vld [vmem:[%s3390 + $0x30] sm:$0xf]
        %v3404 = vld [vmem:[%s3390 + $0x34] sm:$0xf]
        %v3405 = vld [vmem:[%s3390 + $0x38] sm:$0xf]
        %v3406 = vld [vmem:[%s3390 + $0x3c] sm:$0xf]
        %v3423 = vunpack.c.l.b16 %v3391
        %v3424 = vunpack.c.l.b16 %v3392
        %v3425 = vunpack.c.l.b16 %v3393
        %v3426 = vunpack.c.l.b16 %v3394
        %v3427 = vunpack.c.l.b16 %v3395
        %v3428 = vunpack.c.l.b16 %v3396
        %v3429 = vunpack.c.l.b16 %v3397
        %v3430 = vunpack.c.l.b16 %v3398
        %v3431 = vunpack.c.l.b16 %v3399
        %v3432 = vunpack.c.l.b16 %v3400
        %v3433 = vunpack.c.l.b16 %v3401
        %v3434 = vunpack.c.l.b16 %v3402
        %v3435 = vunpack.c.l.b16 %v3403
        %v3436 = vunpack.c.l.b16 %v3404
        %v3437 = vunpack.c.l.b16 %v3405
        %v3438 = vunpack.c.l.b16 %v3406
        %v3439 = vpack.c.b16 %v3424, %v3423
        %v3440 = vpack.c.b16 %v3426, %v3425
        %v3441 = vpack.c.b16 %v3428, %v3427
        %v3442 = vpack.c.b16 %v3430, %v3429
        %v3443 = vpack.c.b16 %v3432, %v3431
        %v3444 = vpack.c.b16 %v3434, %v3433
        %v3445 = vpack.c.b16 %v3436, %v3435
        %v3446 = vpack.c.b16 %v3438, %v3437
        %3455 = vmatprep.subr.bf16.mxu0 0
        %3456 = vmatpush1.bf16.msra.mxu0 %v3446
        %3457 = vmatprep.subr.bf16.mxu0 0
        %3458 = vmatpush1.bf16.msra.mxu0 %v3445
        %3459 = vmatprep.subr.bf16.mxu0 0
        %3460 = vmatpush1.bf16.msra.mxu0 %v3444
        %3461 = vmatprep.subr.bf16.mxu0 0
        %3462 = vmatpush1.bf16.msra.mxu0 %v3443
        %3463 = vmatprep.subr.bf16.mxu0 0
        %3464 = vmatpush1.bf16.msra.mxu0 %v3442
        %3465 = vmatprep.subr.bf16.mxu0 0
        %3466 = vmatpush1.bf16.msra.mxu0 %v3441
        %3467 = vmatprep.subr.bf16.mxu0 0
        %3468 = vmatpush1.bf16.msra.mxu0 %v3440
        %3469 = vmatprep.subr.bf16.mxu0 0
        %3470 = vmatpush1.bf16.msra.mxu0 %v3439
        %3471 = vmatprep.subr.bf16.mxu0 0
        %3472 = vmatpush2.bf16.msra.mxu0 0
        %3473 = vmatprep.subr.bf16.mxu0 0
        %3474 = vmatpush2.bf16.msra.mxu0 0
        %3475 = vmatprep.subr.bf16.mxu0 0
        %3476 = vmatpush2.bf16.msra.mxu0 0
        %3477 = vmatprep.subr.bf16.mxu0 0
        %3478 = vmatpush2.bf16.msra.mxu0 0
        %3479 = vmatprep.subr.bf16.mxu0 0
        %3480 = vmatpush2.bf16.msra.mxu0 0
        %3481 = vmatprep.subr.bf16.mxu0 0
        %3482 = vmatpush2.bf16.msra.mxu0 0
        %3483 = vmatprep.subr.bf16.mxu0 0
        %3484 = vmatpush2.bf16.msra.mxu0 0
        %3485 = vmatprep.subr.bf16.mxu0 0
        %3486 = vmatpush2.bf16.msra.mxu0 0
        %3487 = vmatprep.mubr.bf16.mxu0 0
        %3488 = vmatmul.mubr.bf16.gmra.mxu0 %v3386
        %v3489 = vpop.f32.mrf.mxu0
        %v3490 = vadd.f32 0.0, %v3489
        %v3491 = vpop.f32.mrf.mxu0
        %v3492 = vpop.f32.mrf.mxu0
        %v3493 = vadd.f32 0.0, %v3492
        %v3494 = vpop.f32.mrf.mxu0
        %3495 = vmatprep.mubr.bf16.mxu0 0
        %3496 = vmatmul.mubr.bf16.gmra.mxu0 %v3387
        %v3497 = vpop.f32.mrf.mxu0
        %v3498 = vadd.f32 0.0, %v3497
        %v3499 = vpop.f32.mrf.mxu0
        %v3500 = vpop.f32.mrf.mxu0
        %v3501 = vadd.f32 0.0, %v3500
        %v3502 = vpop.f32.mrf.mxu0
        %3503 = vmatprep.mubr.bf16.mxu0 0
        %3504 = vmatmul.mubr.bf16.gmra.mxu0 %v3388
        %v3505 = vpop.f32.mrf.mxu0
        %v3506 = vadd.f32 0.0, %v3505
        %v3507 = vpop.f32.mrf.mxu0
        %v3508 = vpop.f32.mrf.mxu0
        %v3509 = vadd.f32 0.0, %v3508
        %v3510 = vpop.f32.mrf.mxu0
        %3511 = vmatprep.mubr.bf16.mxu0 0
        %3512 = vmatmul.mubr.bf16.gmra.mxu0 %v3389
        %v3513 = vpop.f32.mrf.mxu0
        %v3514 = vadd.f32 0.0, %v3513
        %v3515 = vpop.f32.mrf.mxu0
        %v3516 = vpop.f32.mrf.mxu0
        %v3517 = vadd.f32 0.0, %v3516
        %v3518 = vpop.f32.mrf.mxu0
        %3519 = vdwg.mxu0
        %v3520 = vld [vmem:[#allocation4] sm:$0xff]
        %v3521 = vld [vmem:[#allocation4 + $0x8] sm:$0xff]
        %v3522 = vld [vmem:[#allocation4 + $0x10] sm:$0xff]
        %v3523 = vld [vmem:[#allocation4 + $0x18] sm:$0xff]
        %v3524 = vld [vmem:[#allocation4 + $0x20] sm:$0xff]
        %v3525 = vld [vmem:[#allocation4 + $0x28] sm:$0xff]
        %v3526 = vld [vmem:[#allocation4 + $0x30] sm:$0xff]
        %v3527 = vld [vmem:[#allocation4 + $0x38] sm:$0xff]
        %v3528 = vadd.f32 %v3520, %v3490
        %v3529 = vadd.f32 %v3521, %v3493
        %v3530 = vadd.f32 %v3522, %v3498
        %v3531 = vadd.f32 %v3523, %v3501
        %v3532 = vadd.f32 %v3524, %v3506
        %v3533 = vadd.f32 %v3525, %v3509
        %v3534 = vadd.f32 %v3526, %v3514
        %v3535 = vadd.f32 %v3527, %v3517
        %3536 = vst [vmem:[#allocation4] sm:$0xff] %v3528
        %3537 = vst [vmem:[#allocation4 + $0x8] sm:$0xff] %v3529
        %3538 = vst [vmem:[#allocation4 + $0x10] sm:$0xff] %v3530
        %3539 = vst [vmem:[#allocation4 + $0x18] sm:$0xff] %v3531
        %3540 = vst [vmem:[#allocation4 + $0x20] sm:$0xff] %v3532
        %3541 = vst [vmem:[#allocation4 + $0x28] sm:$0xff] %v3533
        %3542 = vst [vmem:[#allocation4 + $0x30] sm:$0xff] %v3534
        %3543 = vst [vmem:[#allocation4 + $0x38] sm:$0xff] %v3535
        %v3544 = vld [vmem:[%s7] sm:$0xf]
        %v3545 = vld [vmem:[%s7 + $0x4] sm:$0xf]
        %v3546 = vld [vmem:[%s7 + $0x8] sm:$0xf]
        %v3547 = vld [vmem:[%s7 + $0xc] sm:$0xf]
        %v3548 = vld [vmem:[%s7 + $0x10] sm:$0xf]
        %v3549 = vld [vmem:[%s7 + $0x14] sm:$0xf]
        %v3550 = vld [vmem:[%s7 + $0x18] sm:$0xf]
        %v3551 = vld [vmem:[%s7 + $0x1c] sm:$0xf]
        %v3552 = vld [vmem:[%s7 + $0x20] sm:$0xf]
        %v3553 = vld [vmem:[%s7 + $0x24] sm:$0xf]
        %v3554 = vld [vmem:[%s7 + $0x28] sm:$0xf]
        %v3555 = vld [vmem:[%s7 + $0x2c] sm:$0xf]
        %v3556 = vld [vmem:[%s7 + $0x30] sm:$0xf]
        %v3557 = vld [vmem:[%s7 + $0x34] sm:$0xf]
        %v3558 = vld [vmem:[%s7 + $0x38] sm:$0xf]
        %v3559 = vld [vmem:[%s7 + $0x3c] sm:$0xf]
        %v3576 = vunpack.c.l.b16 %v3544
        %v3577 = vunpack.c.l.b16 %v3545
        %v3578 = vunpack.c.l.b16 %v3546
        %v3579 = vunpack.c.l.b16 %v3547
        %v3580 = vunpack.c.l.b16 %v3548
        %v3581 = vunpack.c.l.b16 %v3549
        %v3582 = vunpack.c.l.b16 %v3550
        %v3583 = vunpack.c.l.b16 %v3551
        %v3584 = vunpack.c.l.b16 %v3552
        %v3585 = vunpack.c.l.b16 %v3553
        %v3586 = vunpack.c.l.b16 %v3554
        %v3587 = vunpack.c.l.b16 %v3555
        %v3588 = vunpack.c.l.b16 %v3556
        %v3589 = vunpack.c.l.b16 %v3557
        %v3590 = vunpack.c.l.b16 %v3558
        %v3591 = vunpack.c.l.b16 %v3559
        %v3592 = vpack.c.b16 %v3577, %v3576
        %v3593 = vpack.c.b16 %v3579, %v3578
        %v3594 = vpack.c.b16 %v3581, %v3580
        %v3595 = vpack.c.b16 %v3583, %v3582
        %v3596 = vpack.c.b16 %v3585, %v3584
        %v3597 = vpack.c.b16 %v3587, %v3586
        %v3598 = vpack.c.b16 %v3589, %v3588
        %v3599 = vpack.c.b16 %v3591, %v3590
        %3608 = vmatprep.subr.bf16.mxu0 0
        %3609 = vmatpush1.bf16.msra.mxu0 %v3599
        %3610 = vmatprep.subr.bf16.mxu0 0
        %3611 = vmatpush1.bf16.msra.mxu0 %v3598
        %3612 = vmatprep.subr.bf16.mxu0 0
        %3613 = vmatpush1.bf16.msra.mxu0 %v3597
        %3614 = vmatprep.subr.bf16.mxu0 0
        %3615 = vmatpush1.bf16.msra.mxu0 %v3596
        %3616 = vmatprep.subr.bf16.mxu0 0
        %3617 = vmatpush1.bf16.msra.mxu0 %v3595
        %3618 = vmatprep.subr.bf16.mxu0 0
        %3619 = vmatpush1.bf16.msra.mxu0 %v3594
        %3620 = vmatprep.subr.bf16.mxu0 0
        %3621 = vmatpush1.bf16.msra.mxu0 %v3593
        %3622 = vmatprep.subr.bf16.mxu0 0
        %3623 = vmatpush1.bf16.msra.mxu0 %v3592
        %3624 = vmatprep.subr.bf16.mxu0 0
        %3625 = vmatpush2.bf16.msra.mxu0 0
        %3626 = vmatprep.subr.bf16.mxu0 0
        %3627 = vmatpush2.bf16.msra.mxu0 0
        %3628 = vmatprep.subr.bf16.mxu0 0
        %3629 = vmatpush2.bf16.msra.mxu0 0
        %3630 = vmatprep.subr.bf16.mxu0 0
        %3631 = vmatpush2.bf16.msra.mxu0 0
        %3632 = vmatprep.subr.bf16.mxu0 0
        %3633 = vmatpush2.bf16.msra.mxu0 0
        %3634 = vmatprep.subr.bf16.mxu0 0
        %3635 = vmatpush2.bf16.msra.mxu0 0
        %3636 = vmatprep.subr.bf16.mxu0 0
        %3637 = vmatpush2.bf16.msra.mxu0 0
        %3638 = vmatprep.subr.bf16.mxu0 0
        %3639 = vmatpush2.bf16.msra.mxu0 0
        %3640 = vmatprep.mubr.bf16.mxu0 0
        %3641 = vmatmul.mubr.bf16.gmra.mxu0 %v1146
        %v3642 = vpop.f32.mrf.mxu0
        %v3643 = vadd.f32 0.0, %v3642
        %v3644 = vpop.f32.mrf.mxu0
        %v3645 = vpop.f32.mrf.mxu0
        %v3646 = vadd.f32 0.0, %v3645
        %v3647 = vpop.f32.mrf.mxu0
        %3648 = vmatprep.mubr.bf16.mxu0 0
        %3649 = vmatmul.mubr.bf16.gmra.mxu0 %v1147
        %v3650 = vpop.f32.mrf.mxu0
        %v3651 = vadd.f32 0.0, %v3650
        %v3652 = vpop.f32.mrf.mxu0
        %v3653 = vpop.f32.mrf.mxu0
        %v3654 = vadd.f32 0.0, %v3653
        %v3655 = vpop.f32.mrf.mxu0
        %3656 = vmatprep.mubr.bf16.mxu0 0
        %3657 = vmatmul.mubr.bf16.gmra.mxu0 %v1148
        %v3658 = vpop.f32.mrf.mxu0
        %v3659 = vadd.f32 0.0, %v3658
        %v3660 = vpop.f32.mrf.mxu0
        %v3661 = vpop.f32.mrf.mxu0
        %v3662 = vadd.f32 0.0, %v3661
        %v3663 = vpop.f32.mrf.mxu0
        %3664 = vmatprep.mubr.bf16.mxu0 0
        %3665 = vmatmul.mubr.bf16.gmra.mxu0 %v1149
        %v3666 = vpop.f32.mrf.mxu0
        %v3667 = vadd.f32 0.0, %v3666
        %v3668 = vpop.f32.mrf.mxu0
        %v3669 = vpop.f32.mrf.mxu0
        %v3670 = vadd.f32 0.0, %v3669
        %v3671 = vpop.f32.mrf.mxu0
        %3672 = vdwg.mxu0
        %v3673 = vld [vmem:[%s6 + $0x4] sm:$0x1]
        %v3674 = vlaneseq
        %v3675 = vshrl.u32 %v3674, 7
        %v3676 = vsub.s32 0, %v3675
        %v3677 = vrot.slane %v3673, %v3676
        %v3678 = vmul.f32 %v3643, %v3677
        %v3679 = vmul.f32 %v3646, %v3677
        %v3680 = vmul.f32 %v3651, %v3677
        %v3681 = vmul.f32 %v3654, %v3677
        %v3682 = vmul.f32 %v3659, %v3677
        %v3683 = vmul.f32 %v3662, %v3677
        %v3684 = vmul.f32 %v3667, %v3677
        %v3685 = vmul.f32 %v3670, %v3677
        %v3686 = vld [vmem:[%s6 + $0x5] sm:$0x1]
        %v3687 = vlaneseq
        %v3688 = vshrl.u32 %v3687, 7
        %v3689 = vsub.s32 0, %v3688
        %v3690 = vrot.slane %v3686, %v3689
        %v3691 = vadd.f32 %v3678, %v3690
        %v3692 = vadd.f32 %v3679, %v3690
        %v3693 = vadd.f32 %v3680, %v3690
        %v3694 = vadd.f32 %v3681, %v3690
        %v3695 = vadd.f32 %v3682, %v3690
        %v3696 = vadd.f32 %v3683, %v3690
        %v3697 = vadd.f32 %v3684, %v3690
        %v3698 = vadd.f32 %v3685, %v3690
        %v3699 = vld [vmem:[#allocation4] sm:$0xff]
        %v3700 = vld [vmem:[#allocation4 + $0x8] sm:$0xff]
        %v3701 = vld [vmem:[#allocation4 + $0x10] sm:$0xff]
        %v3702 = vld [vmem:[#allocation4 + $0x18] sm:$0xff]
        %v3703 = vld [vmem:[#allocation4 + $0x20] sm:$0xff]
        %v3704 = vld [vmem:[#allocation4 + $0x28] sm:$0xff]
        %v3705 = vld [vmem:[#allocation4 + $0x30] sm:$0xff]
        %v3706 = vld [vmem:[#allocation4 + $0x38] sm:$0xff]
        %v3707 = vld [vmem:[%s6 + $0x2] sm:$0x1]
        %v3708 = vlaneseq
        %v3709 = vshrl.u32 %v3708, 7
        %v3710 = vsub.s32 0, %v3709
        %v3711 = vrot.slane %v3707, %v3710
        %v3712 = vmul.f32 %v3699, %v3711
        %v3713 = vmul.f32 %v3700, %v3711
        %v3714 = vmul.f32 %v3701, %v3711
        %v3715 = vmul.f32 %v3702, %v3711
        %v3716 = vmul.f32 %v3703, %v3711
        %v3717 = vmul.f32 %v3704, %v3711
        %v3718 = vmul.f32 %v3705, %v3711
        %v3719 = vmul.f32 %v3706, %v3711
        %v3720 = vld [vmem:[%s6 + $0x3] sm:$0x1]
        %v3721 = vlaneseq
        %v3722 = vshrl.u32 %v3721, 7
        %v3723 = vsub.s32 0, %v3722
        %v3724 = vrot.slane %v3720, %v3723
        %v3725 = vadd.f32 %v3712, %v3724
        %v3726 = vadd.f32 %v3713, %v3724
        %v3727 = vadd.f32 %v3714, %v3724
        %v3728 = vadd.f32 %v3715, %v3724
        %v3729 = vadd.f32 %v3716, %v3724
        %v3730 = vadd.f32 %v3717, %v3724
        %v3731 = vadd.f32 %v3718, %v3724
        %v3732 = vadd.f32 %v3719, %v3724
        %v3733 = vadd.f32 %v3725, %v3691
        %v3734 = vadd.f32 %v3726, %v3692
        %v3735 = vadd.f32 %v3727, %v3693
        %v3736 = vadd.f32 %v3728, %v3694
        %v3737 = vadd.f32 %v3729, %v3695
        %v3738 = vadd.f32 %v3730, %v3696
        %v3739 = vadd.f32 %v3731, %v3697
        %v3740 = vadd.f32 %v3732, %v3698
        %v3741 = vmax.f32 %v3733, 0.0
        %v3742 = vmax.f32 %v3734, 0.0
        %v3743 = vmax.f32 %v3735, 0.0
        %v3744 = vmax.f32 %v3736, 0.0
        %v3745 = vmax.f32 %v3737, 0.0
        %v3746 = vmax.f32 %v3738, 0.0
        %v3747 = vmax.f32 %v3739, 0.0
        %v3748 = vmax.f32 %v3740, 0.0
        %3749 = vst [vmem:[%s358] sm:$0xff] %v3741
        %3750 = vst [vmem:[%s358 + $0x8] sm:$0xff] %v3742
        %3751 = vst [vmem:[%s358 + $0x10] sm:$0xff] %v3743
        %3752 = vst [vmem:[%s358 + $0x18] sm:$0xff] %v3744
        %3753 = vst [vmem:[%s358 + $0x20] sm:$0xff] %v3745
        %3754 = vst [vmem:[%s358 + $0x28] sm:$0xff] %v3746
        %3755 = vst [vmem:[%s358 + $0x30] sm:$0xff] %v3747
        %3756 = vst [vmem:[%s358 + $0x38] sm:$0xff] %v3748
        %s3757 = sand.u32 %s219, 1
        %s3758 = scalar_lea.sflag [#allocation7], %s3757
        %s3759 = sand.u32 %s219, 1
        %s3760 = smul.addr %s3759, 64
        %s3761 = scalar_lea.vmem [#allocation8], %s3760
        // Predicated region
        $region57: #{tpu_custom_call.1} parent=51 // pred_check
          %p3762 = pneg %p229
        $region58: #{tpu_custom_call.1} parent=51 // pred_check_branch
          %3764 = sbr.rel (%p3762) target = $region60
        $region59: #{tpu_custom_call.1} parent=51 // pred_region
          %s3766 = ssub.s32 1024, 1024
          %3767 = vsyncadd %s3758, %s3766
          %s3768 = smul.addr %s23, 8
          %s3769 = smul.addr %s3768, 128
          %s3770 = scalar_lea.hbm %s8, %s3769
          %s3771 = sshll.u32 %s3761, 4
          %s3772 = int_to_ptr.vmem [resolvable:$true] %s3771
          %3777 = dma.vmem_to_hbm [thread:$0]  %s3772, 1024, %s3770, %s3758, 128, 128, 8
        $region60: #{tpu_custom_call.1} parent=51 // pred_fallthru
          _
      $region52: #{tpu_custom_call.1} parent=5 // pred_fallthru
        _
      %p3778 = scmp.le.s32.totalorder 2, %s18
      // Predicated region
      $region61: #{tpu_custom_call.1} parent=5 // pred_check
        %p3779 = pneg %p3778
      $region62: #{tpu_custom_call.1} parent=5 // pred_check_branch
        %3781 = sbr.rel (%p3779) target = $region64
      $region63: #{tpu_custom_call.1} parent=5 // pred_region
        %s3782 = ssub.s32 %s18, 2
        // Predicated region
        $region65: #{tpu_custom_call.1} parent=63 // pred_check
          %p3783 = pneg %p235
        $region66: #{tpu_custom_call.1} parent=63 // pred_check_branch
          %3785 = sbr.rel (%p3783) target = $region68
        $region67: #{tpu_custom_call.1} parent=63 // pred_region
          %s3786 = sand.u32 %s220, 1
          %s3787 = scalar_lea.sflag [#allocation7], %s3786
          %s3788 = sand.u32 %s220, 1
          %s3789 = smul.addr %s3788, 64
          %s3790 = scalar_lea.vmem [#allocation8], %s3789
          %3791 = dma.done %s3787, 1024
        $region68: #{tpu_custom_call.1} parent=63 // pred_fallthru
          _
      $region64: #{tpu_custom_call.1} parent=5 // pred_fallthru
        _
    $region6: #{tpu_custom_call.1} parent=1 // loop_footer
      %s22 = sadd.s32 1, %s18
    $region7: #{tpu_custom_call.1} parent=1 // loop_footer_branch
      %17 = sbr.rel target = $region3
    $region8: #{tpu_custom_call.1} parent=1 // loop_exit
      _
    %3792 = vsyncpa [#allocation6], 1
    %s3793 = scalar_lea.sflag [#allocation6], 1
    %3794 = vsyncpa %s3793, 1
    %3795 = vsyncpa [#allocation7], 1
    %s3796 = scalar_lea.sflag [#allocation7], 1
    %3797 = vsyncpa %s3796, 1

</llo_original>
